<compile_context>
chip_gen: v7x
topology: tpu7x:2x2x1
jax: 0.10.0
libtpu: 0.0.40
codegen_flags: <defaults>
</compile_context>

<pallas_src>
import numpy as np
import jax
import jax.numpy as jnp
from jax.experimental import pallas as pl
from jax.experimental.pallas import tpu as pltpu

# ----------------- small config (consistent with the module's forward) -----------------
B = 2             # batch
IMG = 16          # H = W
CIN = 3           # image channels
PATCH = 4         # patch size for stand-in encoder
GRID_HW = IMG // PATCH
P = GRID_HW * GRID_HW       # num_pixels (encoded_image_size**2)
E = 128                     # encoder_dim (stand-in for resnet's 2048)
EMB = 64                    # embed_dim
D = 64                      # decoder_dim
A = 64                      # attention_dim
V = 32                      # vocab_size
L = 6                       # max caption length
KP = CIN * PATCH * PATCH    # patch feature size


# --------------------------------- fused forward kernel ---------------------------------
def _make_caption_kernel(T):
    """Builds the fused encoder-projection + T-step decoder kernel (T static)."""

    def kernel(x_ref, caps_ref, mask_ref, emb_tab_ref,
               w_patch, b_patch,
               w_ea, b_ea,
               w_h, b_h,
               w_fa, b_fa,
               w_ihc, b_ihc,
               w_g, b_g,
               w_fc, b_fc,
               preds_ref, alphas_ref):
        f32 = jnp.float32
        bf16 = jnp.bfloat16

        # ---- encoder: patch projection (one-time), bf16 MXU operands / f32 accum ----
        x_bf = x_ref[...].astype(bf16)                                          # [B*P, KP]
        enc2 = jnp.dot(x_bf, w_patch[...], preferred_element_type=f32) + b_patch[...]
        enc = enc2.reshape(B, P, E)                                             # [B, P, E]

        # ---- hoisted time-invariant encoder-attention projection ----
        att1 = (jnp.dot(enc2.astype(bf16), w_ea[...], preferred_element_type=f32)
                + b_ea[...]).reshape(B, P, A)                                   # [B, P, A]

        # ---- init_hidden_state: single fused [E, 2D] matmul ----
        mean_enc = jnp.mean(enc, axis=1)                                        # [B, E]
        hc = (jnp.dot(mean_enc.astype(bf16), w_ihc[...], preferred_element_type=f32)
              + b_ihc[...])                                                     # [B, 2D]
        h = hc[:, :D]
        c = hc[:, D:]

        # ---- hoist the small time-invariant weights (NOT w_g: 256x256 is too big) ----
        w_h_v, b_h_v = w_h[...], b_h[...]            # [D, A+E] bf16, [1, A+E] f32
        w_fa_row, b_fa_s = w_fa[...], b_fa[...]      # [1, A], [1, 1]
        w_fc_v, b_fc_v = w_fc[...], b_fc[...]        # [D, V] bf16, [1, V]
        b_g_v = b_g[...]                              # [1, 4D]

        # ---- T unrolled decode steps; h/c stay in vregs ----
        for t in range(T):
            mask = mask_ref[t]                                                  # [B, 1]

            # fused h-projections: decoder_att (first A cols) + f_beta (last E cols)
            hp = jnp.dot(h.astype(bf16), w_h_v, preferred_element_type=f32) + b_h_v
            att2 = hp[:, :A]                                                    # [B, A]
            gate = jax.nn.sigmoid(hp[:, A:])                                    # [B, E]

            # attention scores: VPU multiply + lane reduction (no N=1 matmul)
            att = jnp.maximum(att1 + att2[:, None, :], 0.0)                     # [B, P, A]
            e = jnp.sum(att * w_fa_row, axis=-1) + b_fa_s                       # [B, P]
            e = e - jnp.max(e, axis=1, keepdims=True)
            ex = jnp.exp(e)
            alpha = ex * pl.reciprocal(jnp.sum(ex, axis=1, keepdims=True),
                                       approx=True)                             # [B, P]
            # attention context as a batched MXU contraction (f32)
            weighted = jnp.einsum('bqp,bpe->bqe', alpha[:, None, :], enc,
                                  preferred_element_type=f32)[:, 0, :]          # [B, E]
            awe = gate * weighted                                               # [B, E]

            # embedding lookup in-kernel: caption ids in SMEM -> dynamic row slices
            emb_rows = [emb_tab_ref[pl.ds(caps_ref[b, t], 1), :] for b in range(B)]
            emb_t = jnp.concatenate(emb_rows, axis=0)                           # [B, EMB]

            # LSTMCell: single fused K = EMB + E + D contraction; gate cols i,f,o,g
            xcat = jnp.concatenate([emb_t, awe, h], axis=-1).astype(bf16)       # [B, 256]
            gates = jnp.dot(xcat, w_g[...], preferred_element_type=f32) + b_g_v  # [B, 4D]
            sig = jax.nn.sigmoid(gates[:, :3 * D])                              # i, f, o
            i_g = sig[:, :D]
            f_g = sig[:, D:2 * D]
            o_g = sig[:, 2 * D:]
            g_g = jnp.tanh(gates[:, 3 * D:])
            c_new = f_g * c + i_g * g_g
            h_new = o_g * jnp.tanh(c_new)

            # only "active" rows (t < decode_length, captions sorted descending) update
            h = jnp.where(mask > 0, h_new, h)
            c = jnp.where(mask > 0, c_new, c)

            # fc (dropout = identity in eval mode); inactive rows stay zero
            preds = (jnp.dot(h_new.astype(bf16), w_fc_v, preferred_element_type=f32)
                     + b_fc_v)                                                   # [B, V]
            preds_ref[:, t, :] = preds * mask
            alphas_ref[:, t, :] = alpha * mask

    return kernel


# --------------------------------------- wrapper ----------------------------------------
def medical_caption_model_forward(prepped, images, captions, caption_lengths):
    """MedicalCaptionModel.forward semantics (encoder stand-in + DecoderWithAttention)."""
    # sort by caption length, descending (host-side; lengths are concrete here)
    lens = np.asarray(caption_lengths)[:, 0]
    order = np.argsort(-lens, kind="stable")
    sorted_lens = lens[order]
    decode_lengths = (sorted_lens - 1).astype(np.int64)
    T = int(decode_lengths.max())

    # per-step active-row masks as a host constant: [T, B, 1]
    masks = jnp.asarray(
        (np.arange(T)[:, None, None] < decode_lengths[None, :, None]).astype(np.float32))
    order_j = jnp.asarray(order, dtype=jnp.int32)

    vmem = pl.BlockSpec(memory_space=pltpu.MemorySpace.VMEM)
    smem = pl.BlockSpec(memory_space=pltpu.MemorySpace.SMEM)

    @jax.jit
    def run(images, captions, masks, pp):
        # encoder preprocessing: patchify + sort; the linear projection runs in-kernel
        x = images.reshape(B, CIN, GRID_HW, PATCH, GRID_HW, PATCH)
        x = x.transpose(0, 2, 4, 1, 3, 5).reshape(B, P, KP)
        x_sorted = x[order_j].reshape(B * P, KP)
        caps_sorted = captions[order_j].astype(jnp.int32)

        args = (
            x_sorted, caps_sorted, masks,
            pp["emb_table"],
            pp["w_patch"], pp["b_patch"],
            pp["w_ea"], pp["b_ea"],
            pp["w_h"], pp["b_h"],
            pp["w_fa"], pp["b_fa"],
            pp["w_ihc"], pp["b_ihc"],
            pp["w_g"], pp["b_g"],
            pp["w_fc"], pp["b_fc"],
        )
        preds, alphas = pl.pallas_call(
            _make_caption_kernel(T),
            out_shape=(jax.ShapeDtypeStruct((B, T, V), jnp.float32),
                       jax.ShapeDtypeStruct((B, T, P), jnp.float32)),
            in_specs=[vmem, smem] + [vmem] * 16,
            out_specs=(vmem, vmem),
        )(*args)
        return preds, caps_sorted, alphas

    predictions, caps_sorted, alphas = run(images, captions, masks, prepped)
    return predictions, caps_sorted, list(decode_lengths), alphas, order_j


# ----------------------------------- parameter init -------------------------------------
def init_params(key):
    ks = jax.random.split(key, 12)

    def linear(k, fan_in, fan_out, scale=None):
        s = float(scale) if scale is not None else 1.0 / float(np.sqrt(fan_in))
        kw, kb = jax.random.split(k)
        w = jax.random.uniform(kw, (fan_in, fan_out), jnp.float32, -s, s)
        b = jax.random.uniform(kb, (1, fan_out), jnp.float32, -s, s)
        return w, b

    p = {}
    # encoder stand-in (patch projection)
    p["w_patch"], p["b_patch"] = linear(ks[0], KP, E)
    # embedding: uniform(-0.1, 0.1)  (init_weights)
    p["emb_table"] = jax.random.uniform(ks[1], (V, EMB), jnp.float32, -0.1, 0.1)
    # attention
    p["w_enc_att"], p["b_enc_att"] = linear(ks[2], E, A)
    p["w_dec_att"], p["b_dec_att"] = linear(ks[3], D, A)
    s_fa = 1.0 / float(np.sqrt(A))
    kfa_w, kfa_b = jax.random.split(ks[4])
    p["w_full_att"] = jax.random.uniform(kfa_w, (1, A), jnp.float32, -s_fa, s_fa)
    p["b_full_att"] = jax.random.uniform(kfa_b, (1, 1), jnp.float32, -s_fa, s_fa)
    # init_h / init_c
    p["w_init_h"], p["b_init_h"] = linear(ks[5], E, D)
    p["w_init_c"], p["b_init_c"] = linear(ks[6], E, D)
    # f_beta
    p["w_f_beta"], p["b_f_beta"] = linear(ks[7], D, E)
    # LSTMCell (weights stored transposed [in, 4D], gate order i,f,g,o)
    lstm_scale = 1.0 / float(np.sqrt(D))
    p["w_lstm_ih"], p["b_lstm_ih"] = linear(ks[8], EMB + E, 4 * D, scale=lstm_scale)
    p["w_lstm_hh"], p["b_lstm_hh"] = linear(ks[9], D, 4 * D, scale=lstm_scale)
    # fc: weight uniform(-0.1, 0.1), bias zero  (init_weights)
    p["w_fc"] = jax.random.uniform(ks[10], (D, V), jnp.float32, -0.1, 0.1)
    p["b_fc"] = jnp.zeros((1, V), jnp.float32)
    return p


def prepare_params(p):
    """One-time kernel-ready param prep: gate fusion/reorder + bf16 MXU operands."""
    bf16 = jnp.bfloat16

    def reorder(m):  # LSTM gate columns i,f,g,o -> i,f,o,g
        return jnp.concatenate([m[..., :2 * D], m[..., 3 * D:], m[..., 2 * D:3 * D]],
                               axis=-1)

    w_gates = reorder(jnp.concatenate([p["w_lstm_ih"], p["w_lstm_hh"]], axis=0))
    b_gates = reorder(p["b_lstm_ih"] + p["b_lstm_hh"])

    return {
        "emb_table": p["emb_table"],
        "w_patch": p["w_patch"].astype(bf16), "b_patch": p["b_patch"],
        "w_ea": p["w_enc_att"].astype(bf16), "b_ea": p["b_enc_att"],
        # fused h-projections: decoder_att (A cols) then f_beta (E cols)
        "w_h": jnp.concatenate([p["w_dec_att"], p["w_f_beta"]], axis=1).astype(bf16),
        "b_h": jnp.concatenate([p["b_dec_att"], p["b_f_beta"]], axis=1),
        "w_fa": p["w_full_att"], "b_fa": p["b_full_att"],
        # fused init_h / init_c
        "w_ihc": jnp.concatenate([p["w_init_h"], p["w_init_c"]], axis=1).astype(bf16),
        "b_ihc": jnp.concatenate([p["b_init_h"], p["b_init_c"]], axis=1),
        "w_g": w_gates.astype(bf16), "b_g": b_gates,
        "w_fc": p["w_fc"].astype(bf16), "b_fc": p["b_fc"],
    }


# --------------------------------------- main --------------------------------------------
if __name__ == "__main__":
    key = jax.random.PRNGKey(0)
    k_img, k_cap = jax.random.split(key)
    images = jax.random.normal(k_img, (B, CIN, IMG, IMG), jnp.float32)
    captions = jax.random.randint(k_cap, (B, L), 0, V, dtype=jnp.int32)
    caption_lengths = jnp.array([[4], [6]], dtype=jnp.int32)   # forces a real sort

    params = init_params(jax.random.PRNGKey(42))
    prepped = prepare_params(params)

    predictions, caps_sorted, decode_lengths, alphas, sort_ind = (
        medical_caption_model_forward(prepped, images, captions, caption_lengths))

    jax.block_until_ready(predictions)
    jax.block_until_ready(alphas)

    T = int(max(decode_lengths))
    assert predictions.shape == (B, T, V)
    assert alphas.shape == (B, T, P)
    assert bool(jnp.all(jnp.isfinite(predictions)))
    print("KERNEL_OK")
</pallas_src>

<mosaic_0001>
module attributes {stable_mosaic.version = 11 : i64} {
  func.func @kernel(%arg0: memref<32x48xf32, #tpu.memory_space<vmem>>, %arg1: memref<2x6xi32, #tpu.memory_space<smem>>, %arg2: memref<5x2x1xf32, #tpu.memory_space<vmem>>, %arg3: memref<32x64xf32, #tpu.memory_space<vmem>>, %arg4: memref<48x128xbf16, #tpu.memory_space<vmem>>, %arg5: memref<1x128xf32, #tpu.memory_space<vmem>>, %arg6: memref<128x64xbf16, #tpu.memory_space<vmem>>, %arg7: memref<1x64xf32, #tpu.memory_space<vmem>>, %arg8: memref<64x192xbf16, #tpu.memory_space<vmem>>, %arg9: memref<1x192xf32, #tpu.memory_space<vmem>>, %arg10: memref<1x64xf32, #tpu.memory_space<vmem>>, %arg11: memref<1x1xf32, #tpu.memory_space<vmem>>, %arg12: memref<128x128xbf16, #tpu.memory_space<vmem>>, %arg13: memref<1x128xf32, #tpu.memory_space<vmem>>, %arg14: memref<256x256xbf16, #tpu.memory_space<vmem>>, %arg15: memref<1x256xf32, #tpu.memory_space<vmem>>, %arg16: memref<64x32xbf16, #tpu.memory_space<vmem>>, %arg17: memref<1x32xf32, #tpu.memory_space<vmem>>, %arg18: memref<2x5x32xf32, #tpu.memory_space<vmem>>, %arg19: memref<2x5x16xf32, #tpu.memory_space<vmem>>) attributes {dimension_semantics = [], scalar_prefetch = 0 : i64, scratch_operands = 0 : i64, tpu.core_type = #tpu.core_type<tc>} {
    %c0 = arith.constant 0 : index
    %c0_0 = arith.constant 0 : index
    %0 = vector.load %arg0[%c0, %c0_0] : memref<32x48xf32, #tpu.memory_space<vmem>>, vector<32x48xf32>
    %1 = arith.truncf %0 : vector<32x48xf32> to vector<32x48xbf16>
    %c0_1 = arith.constant 0 : index
    %c0_2 = arith.constant 0 : index
    %2 = vector.load %arg4[%c0_1, %c0_2] : memref<48x128xbf16, #tpu.memory_space<vmem>>, vector<48x128xbf16>
    %cst = arith.constant dense<0.000000e+00> : vector<32x128xf32>
    %3 = tpu.matmul %1, %2, %cst {dimension_numbers = #tpu.dot_dimension_numbers<[1], [0], [0], [1], [0, 0, 1, 1], [], []>} : vector<32x48xbf16>, vector<48x128xbf16>, vector<32x128xf32> -> vector<32x128xf32>
    %c0_3 = arith.constant 0 : index
    %c0_4 = arith.constant 0 : index
    %4 = vector.load %arg5[%c0_3, %c0_4] : memref<1x128xf32, #tpu.memory_space<vmem>>, vector<1x128xf32>
    %5 = vector.broadcast %4 : vector<1x128xf32> to vector<32x128xf32>
    %6 = arith.addf %3, %5 : vector<32x128xf32>
    %7 = vector.shape_cast %6 : vector<32x128xf32> to vector<2x16x128xf32>
    %8 = arith.truncf %6 : vector<32x128xf32> to vector<32x128xbf16>
    %c0_5 = arith.constant 0 : index
    %c0_6 = arith.constant 0 : index
    %9 = vector.load %arg6[%c0_5, %c0_6] : memref<128x64xbf16, #tpu.memory_space<vmem>>, vector<128x64xbf16>
    %cst_7 = arith.constant dense<0.000000e+00> : vector<32x64xf32>
    %10 = tpu.matmul %8, %9, %cst_7 {dimension_numbers = #tpu.dot_dimension_numbers<[1], [0], [0], [1], [0, 0, 1, 1], [], []>} : vector<32x128xbf16>, vector<128x64xbf16>, vector<32x64xf32> -> vector<32x64xf32>
    %c0_8 = arith.constant 0 : index
    %c0_9 = arith.constant 0 : index
    %11 = vector.load %arg7[%c0_8, %c0_9] : memref<1x64xf32, #tpu.memory_space<vmem>>, vector<1x64xf32>
    %12 = vector.broadcast %11 : vector<1x64xf32> to vector<32x64xf32>
    %13 = arith.addf %10, %12 : vector<32x64xf32>
    %14 = vector.shape_cast %13 : vector<32x64xf32> to vector<2x16x64xf32>
    %cst_10 = arith.constant dense<0.000000e+00> : vector<2x128xf32>
    %15 = vector.multi_reduction <add>, %7, %cst_10 [1] : vector<2x16x128xf32> to vector<2x128xf32>
    %cst_11 = arith.constant 1.600000e+01 : f32
    %16 = vector.broadcast %cst_11 : f32 to vector<2x128xf32>
    %17 = arith.divf %15, %16 : vector<2x128xf32>
    %18 = arith.truncf %17 : vector<2x128xf32> to vector<2x128xbf16>
    %c0_12 = arith.constant 0 : index
    %c0_13 = arith.constant 0 : index
    %19 = vector.load %arg12[%c0_12, %c0_13] : memref<128x128xbf16, #tpu.memory_space<vmem>>, vector<128x128xbf16>
    %cst_14 = arith.constant dense<0.000000e+00> : vector<2x128xf32>
    %20 = tpu.matmul %18, %19, %cst_14 {dimension_numbers = #tpu.dot_dimension_numbers<[1], [0], [0], [1], [0, 0, 1, 1], [], []>} : vector<2x128xbf16>, vector<128x128xbf16>, vector<2x128xf32> -> vector<2x128xf32>
    %c0_15 = arith.constant 0 : index
    %c0_16 = arith.constant 0 : index
    %21 = vector.load %arg13[%c0_15, %c0_16] : memref<1x128xf32, #tpu.memory_space<vmem>>, vector<1x128xf32>
    %22 = vector.broadcast %21 : vector<1x128xf32> to vector<2x128xf32>
    %23 = arith.addf %20, %22 : vector<2x128xf32>
    %24 = vector.extract_strided_slice %23 {offsets = [0, 0], sizes = [2, 64], strides = [1, 1]} : vector<2x128xf32> to vector<2x64xf32>
    %25 = vector.extract_strided_slice %23 {offsets = [0, 64], sizes = [2, 64], strides = [1, 1]} : vector<2x128xf32> to vector<2x64xf32>
    %c0_17 = arith.constant 0 : index
    %c0_18 = arith.constant 0 : index
    %26 = vector.load %arg8[%c0_17, %c0_18] : memref<64x192xbf16, #tpu.memory_space<vmem>>, vector<64x192xbf16>
    %c0_19 = arith.constant 0 : index
    %c0_20 = arith.constant 0 : index
    %27 = vector.load %arg9[%c0_19, %c0_20] : memref<1x192xf32, #tpu.memory_space<vmem>>, vector<1x192xf32>
    %c0_21 = arith.constant 0 : index
    %c0_22 = arith.constant 0 : index
    %28 = vector.load %arg10[%c0_21, %c0_22] : memref<1x64xf32, #tpu.memory_space<vmem>>, vector<1x64xf32>
    %c0_23 = arith.constant 0 : index
    %c0_24 = arith.constant 0 : index
    %29 = vector.load %arg11[%c0_23, %c0_24] : memref<1x1xf32, #tpu.memory_space<vmem>>, vector<1x1xf32>
    %c0_25 = arith.constant 0 : index
    %c0_26 = arith.constant 0 : index
    %30 = vector.load %arg16[%c0_25, %c0_26] : memref<64x32xbf16, #tpu.memory_space<vmem>>, vector<64x32xbf16>
    %c0_27 = arith.constant 0 : index
    %c0_28 = arith.constant 0 : index
    %31 = vector.load %arg17[%c0_27, %c0_28] : memref<1x32xf32, #tpu.memory_space<vmem>>, vector<1x32xf32>
    %c0_29 = arith.constant 0 : index
    %c0_30 = arith.constant 0 : index
    %32 = vector.load %arg15[%c0_29, %c0_30] : memref<1x256xf32, #tpu.memory_space<vmem>>, vector<1x256xf32>
    %c0_31 = arith.constant 0 : index
    %c0_32 = arith.constant 0 : index
    %c0_33 = arith.constant 0 : index
    %33 = vector.load %arg2[%c0_31, %c0_32, %c0_33] : memref<5x2x1xf32, #tpu.memory_space<vmem>>, vector<1x2x1xf32>
    %34 = vector.shape_cast %33 : vector<1x2x1xf32> to vector<2x1xf32>
    %35 = arith.truncf %24 : vector<2x64xf32> to vector<2x64xbf16>
    %cst_34 = arith.constant dense<0.000000e+00> : vector<2x192xf32>
    %36 = tpu.matmul %35, %26, %cst_34 {dimension_numbers = #tpu.dot_dimension_numbers<[1], [0], [0], [1], [0, 0, 1, 1], [], []>} : vector<2x64xbf16>, vector<64x192xbf16>, vector<2x192xf32> -> vector<2x192xf32>
    %37 = vector.broadcast %27 : vector<1x192xf32> to vector<2x192xf32>
    %38 = arith.addf %36, %37 : vector<2x192xf32>
    %39 = vector.extract_strided_slice %38 {offsets = [0, 0], sizes = [2, 64], strides = [1, 1]} : vector<2x192xf32> to vector<2x64xf32>
    %40 = vector.extract_strided_slice %38 {offsets = [0, 64], sizes = [2, 128], strides = [1, 1]} : vector<2x192xf32> to vector<2x128xf32>
    %41 = arith.negf %40 : vector<2x128xf32>
    %42 = math.exp %41 : vector<2x128xf32>
    %cst_35 = arith.constant 1.000000e+00 : f32
    %43 = vector.broadcast %cst_35 : f32 to vector<2x128xf32>
    %44 = arith.addf %43, %42 : vector<2x128xf32>
    %45 = arith.divf %43, %44 : vector<2x128xf32>
    %46 = vector.shape_cast %39 : vector<2x64xf32> to vector<2x1x64xf32>
    %47 = vector.broadcast %46 : vector<2x1x64xf32> to vector<2x16x64xf32>
    %48 = arith.addf %14, %47 : vector<2x16x64xf32>
    %cst_36 = arith.constant 0.000000e+00 : f32
    %49 = vector.broadcast %cst_36 : f32 to vector<2x16x64xf32>
    %50 = arith.maximumf %48, %49 : vector<2x16x64xf32>
    %51 = vector.shape_cast %28 : vector<1x64xf32> to vector<1x1x64xf32>
    %52 = vector.broadcast %51 : vector<1x1x64xf32> to vector<2x16x64xf32>
    %53 = arith.mulf %50, %52 : vector<2x16x64xf32>
    %cst_37 = arith.constant dense<0.000000e+00> : vector<2x16xf32>
    %54 = vector.multi_reduction <add>, %53, %cst_37 [2] : vector<2x16x64xf32> to vector<2x16xf32>
    %55 = vector.broadcast %29 : vector<1x1xf32> to vector<2x16xf32>
    %56 = arith.addf %54, %55 : vector<2x16xf32>
    %cst_38 = arith.constant dense<0xFF800000> : vector<2xf32>
    %57 = vector.multi_reduction <maximumf>, %56, %cst_38 [1] : vector<2x16xf32> to vector<2xf32>
    %58 = vector.shape_cast %57 : vector<2xf32> to vector<2x1xf32>
    %59 = vector.broadcast %58 : vector<2x1xf32> to vector<2x16xf32>
    %60 = arith.subf %56, %59 : vector<2x16xf32>
    %61 = math.exp %60 : vector<2x16xf32>
    %cst_39 = arith.constant dense<0.000000e+00> : vector<2xf32>
    %62 = vector.multi_reduction <add>, %61, %cst_39 [1] : vector<2x16xf32> to vector<2xf32>
    %63 = vector.shape_cast %62 : vector<2xf32> to vector<2x1xf32>
    %64 = tpu.reciprocal %63 {approx = true} : vector<2x1xf32> -> vector<2x1xf32>
    %65 = vector.broadcast %64 : vector<2x1xf32> to vector<2x16xf32>
    %66 = arith.mulf %61, %65 : vector<2x16xf32>
    %67 = vector.shape_cast %66 : vector<2x16xf32> to vector<2x1x16xf32>
    "tpu.trace_start"() <{level = 10 : i32, message = "bqp,bpe->bqe"}> : () -> ()
    %cst_40 = arith.constant dense<0.000000e+00> : vector<2x1x128xf32>
    %68 = tpu.matmul %67, %7, %cst_40 {dimension_numbers = #tpu.dot_dimension_numbers<[2], [1], [1], [2], [0, 0, 0, 1, 1, 2], [0], [0]>} : vector<2x1x16xf32>, vector<2x16x128xf32>, vector<2x1x128xf32> -> vector<2x1x128xf32>
    "tpu.trace_stop"() : () -> ()
    %69 = vector.shape_cast %68 : vector<2x1x128xf32> to vector<2x128xf32>
    %70 = arith.mulf %45, %69 : vector<2x128xf32>
    %c0_41 = arith.constant 0 : index
    %c0_42 = arith.constant 0 : index
    %71 = memref.load %arg1[%c0_41, %c0_42] : memref<2x6xi32, #tpu.memory_space<smem>>
    %72 = arith.index_cast %71 : i32 to index
    %c0_43 = arith.constant 0 : index
    %73 = vector.load %arg3[%72, %c0_43] : memref<32x64xf32, #tpu.memory_space<vmem>>, vector<1x64xf32>
    %c1 = arith.constant 1 : index
    %c0_44 = arith.constant 0 : index
    %74 = memref.load %arg1[%c1, %c0_44] : memref<2x6xi32, #tpu.memory_space<smem>>
    %75 = arith.index_cast %74 : i32 to index
    %c0_45 = arith.constant 0 : index
    %76 = vector.load %arg3[%75, %c0_45] : memref<32x64xf32, #tpu.memory_space<vmem>>, vector<1x64xf32>
    %77 = tpu.concatenate %73, %76 in 0 : vector<1x64xf32>, vector<1x64xf32> -> vector<2x64xf32>
    %78 = tpu.concatenate %77, %70, %24 in 1 : vector<2x64xf32>, vector<2x128xf32>, vector<2x64xf32> -> vector<2x256xf32>
    %79 = arith.truncf %78 : vector<2x256xf32> to vector<2x256xbf16>
    %c0_46 = arith.constant 0 : index
    %c0_47 = arith.constant 0 : index
    %80 = vector.load %arg14[%c0_46, %c0_47] : memref<256x256xbf16, #tpu.memory_space<vmem>>, vector<256x256xbf16>
    %cst_48 = arith.constant dense<0.000000e+00> : vector<2x256xf32>
    %81 = tpu.matmul %79, %80, %cst_48 {dimension_numbers = #tpu.dot_dimension_numbers<[1], [0], [0], [1], [0, 0, 1, 1], [], []>} : vector<2x256xbf16>, vector<256x256xbf16>, vector<2x256xf32> -> vector<2x256xf32>
    %82 = vector.broadcast %32 : vector<1x256xf32> to vector<2x256xf32>
    %83 = arith.addf %81, %82 : vector<2x256xf32>
    %84 = vector.extract_strided_slice %83 {offsets = [0, 0], sizes = [2, 192], strides = [1, 1]} : vector<2x256xf32> to vector<2x192xf32>
    %85 = arith.negf %84 : vector<2x192xf32>
    %86 = math.exp %85 : vector<2x192xf32>
    %cst_49 = arith.constant 1.000000e+00 : f32
    %87 = vector.broadcast %cst_49 : f32 to vector<2x192xf32>
    %88 = arith.addf %87, %86 : vector<2x192xf32>
    %89 = arith.divf %87, %88 : vector<2x192xf32>
    %90 = vector.extract_strided_slice %89 {offsets = [0, 0], sizes = [2, 64], strides = [1, 1]} : vector<2x192xf32> to vector<2x64xf32>
    %91 = vector.extract_strided_slice %89 {offsets = [0, 64], sizes = [2, 64], strides = [1, 1]} : vector<2x192xf32> to vector<2x64xf32>
    %92 = vector.extract_strided_slice %89 {offsets = [0, 128], sizes = [2, 64], strides = [1, 1]} : vector<2x192xf32> to vector<2x64xf32>
    %93 = vector.extract_strided_slice %83 {offsets = [0, 192], sizes = [2, 64], strides = [1, 1]} : vector<2x256xf32> to vector<2x64xf32>
    %94 = math.tanh %93 : vector<2x64xf32>
    %95 = arith.mulf %91, %25 : vector<2x64xf32>
    %96 = arith.mulf %90, %94 : vector<2x64xf32>
    %97 = arith.addf %95, %96 : vector<2x64xf32>
    %98 = math.tanh %97 : vector<2x64xf32>
    %99 = arith.mulf %92, %98 : vector<2x64xf32>
    %cst_50 = arith.constant 0.000000e+00 : f32
    %100 = vector.broadcast %cst_50 : f32 to vector<2x1xf32>
    %101 = arith.cmpf ogt, %34, %100 : vector<2x1xf32>
    %102 = vector.shape_cast %101 : vector<2x1xi1> to vector<2x1xi1>
    %103 = vector.broadcast %102 : vector<2x1xi1> to vector<2x64xi1>
    %104 = arith.select %103, %99, %24 : vector<2x64xi1>, vector<2x64xf32>
    %cst_51 = arith.constant 0.000000e+00 : f32
    %105 = vector.broadcast %cst_51 : f32 to vector<2x1xf32>
    %106 = arith.cmpf ogt, %34, %105 : vector<2x1xf32>
    %107 = vector.shape_cast %106 : vector<2x1xi1> to vector<2x1xi1>
    %108 = vector.broadcast %107 : vector<2x1xi1> to vector<2x64xi1>
    %109 = arith.select %108, %97, %25 : vector<2x64xi1>, vector<2x64xf32>
    %110 = arith.truncf %99 : vector<2x64xf32> to vector<2x64xbf16>
    %cst_52 = arith.constant dense<0.000000e+00> : vector<2x32xf32>
    %111 = tpu.matmul %110, %30, %cst_52 {dimension_numbers = #tpu.dot_dimension_numbers<[1], [0], [0], [1], [0, 0, 1, 1], [], []>} : vector<2x64xbf16>, vector<64x32xbf16>, vector<2x32xf32> -> vector<2x32xf32>
    %112 = vector.broadcast %31 : vector<1x32xf32> to vector<2x32xf32>
    %113 = arith.addf %111, %112 : vector<2x32xf32>
    %114 = vector.broadcast %34 : vector<2x1xf32> to vector<2x32xf32>
    %115 = arith.mulf %113, %114 : vector<2x32xf32>
    %c0_53 = arith.constant 0 : index
    %c0_54 = arith.constant 0 : index
    %c0_55 = arith.constant 0 : index
    %116 = vector.load %arg18[%c0_53, %c0_54, %c0_55] : memref<2x5x32xf32, #tpu.memory_space<vmem>>, vector<2x1x32xf32>
    %117 = vector.shape_cast %116 : vector<2x1x32xf32> to vector<2x32xf32>
    %118 = vector.shape_cast %115 : vector<2x32xf32> to vector<2x1x32xf32>
    tpu.vector_store %arg18[%c0_53, %c0_54, %c0_55], %118 {strides = array<i32>} : memref<2x5x32xf32, #tpu.memory_space<vmem>>, vector<2x1x32xf32>,
    %119 = vector.broadcast %34 : vector<2x1xf32> to vector<2x16xf32>
    %120 = arith.mulf %66, %119 : vector<2x16xf32>
    %c0_56 = arith.constant 0 : index
    %c0_57 = arith.constant 0 : index
    %c0_58 = arith.constant 0 : index
    %121 = vector.load %arg19[%c0_56, %c0_57, %c0_58] : memref<2x5x16xf32, #tpu.memory_space<vmem>>, vector<2x1x16xf32>
    %122 = vector.shape_cast %121 : vector<2x1x16xf32> to vector<2x16xf32>
    %123 = vector.shape_cast %120 : vector<2x16xf32> to vector<2x1x16xf32>
    tpu.vector_store %arg19[%c0_56, %c0_57, %c0_58], %123 {strides = array<i32>} : memref<2x5x16xf32, #tpu.memory_space<vmem>>, vector<2x1x16xf32>,
    %c1_59 = arith.constant 1 : index
    %c0_60 = arith.constant 0 : index
    %c0_61 = arith.constant 0 : index
    %124 = vector.load %arg2[%c1_59, %c0_60, %c0_61] : memref<5x2x1xf32, #tpu.memory_space<vmem>>, vector<1x2x1xf32>
    %125 = vector.shape_cast %124 : vector<1x2x1xf32> to vector<2x1xf32>
    %126 = arith.truncf %104 : vector<2x64xf32> to vector<2x64xbf16>
    %cst_62 = arith.constant dense<0.000000e+00> : vector<2x192xf32>
    %127 = tpu.matmul %126, %26, %cst_62 {dimension_numbers = #tpu.dot_dimension_numbers<[1], [0], [0], [1], [0, 0, 1, 1], [], []>} : vector<2x64xbf16>, vector<64x192xbf16>, vector<2x192xf32> -> vector<2x192xf32>
    %128 = vector.broadcast %27 : vector<1x192xf32> to vector<2x192xf32>
    %129 = arith.addf %127, %128 : vector<2x192xf32>
    %130 = vector.extract_strided_slice %129 {offsets = [0, 0], sizes = [2, 64], strides = [1, 1]} : vector<2x192xf32> to vector<2x64xf32>
    %131 = vector.extract_strided_slice %129 {offsets = [0, 64], sizes = [2, 128], strides = [1, 1]} : vector<2x192xf32> to vector<2x128xf32>
    %132 = arith.negf %131 : vector<2x128xf32>
    %133 = math.exp %132 : vector<2x128xf32>
    %cst_63 = arith.constant 1.000000e+00 : f32
    %134 = vector.broadcast %cst_63 : f32 to vector<2x128xf32>
    %135 = arith.addf %134, %133 : vector<2x128xf32>
    %136 = arith.divf %134, %135 : vector<2x128xf32>
    %137 = vector.shape_cast %130 : vector<2x64xf32> to vector<2x1x64xf32>
    %138 = vector.broadcast %137 : vector<2x1x64xf32> to vector<2x16x64xf32>
    %139 = arith.addf %14, %138 : vector<2x16x64xf32>
    %cst_64 = arith.constant 0.000000e+00 : f32
    %140 = vector.broadcast %cst_64 : f32 to vector<2x16x64xf32>
    %141 = arith.maximumf %139, %140 : vector<2x16x64xf32>
    %142 = vector.shape_cast %28 : vector<1x64xf32> to vector<1x1x64xf32>
    %143 = vector.broadcast %142 : vector<1x1x64xf32> to vector<2x16x64xf32>
    %144 = arith.mulf %141, %143 : vector<2x16x64xf32>
    %cst_65 = arith.constant dense<0.000000e+00> : vector<2x16xf32>
    %145 = vector.multi_reduction <add>, %144, %cst_65 [2] : vector<2x16x64xf32> to vector<2x16xf32>
    %146 = vector.broadcast %29 : vector<1x1xf32> to vector<2x16xf32>
    %147 = arith.addf %145, %146 : vector<2x16xf32>
    %cst_66 = arith.constant dense<0xFF800000> : vector<2xf32>
    %148 = vector.multi_reduction <maximumf>, %147, %cst_66 [1] : vector<2x16xf32> to vector<2xf32>
    %149 = vector.shape_cast %148 : vector<2xf32> to vector<2x1xf32>
    %150 = vector.broadcast %149 : vector<2x1xf32> to vector<2x16xf32>
    %151 = arith.subf %147, %150 : vector<2x16xf32>
    %152 = math.exp %151 : vector<2x16xf32>
    %cst_67 = arith.constant dense<0.000000e+00> : vector<2xf32>
    %153 = vector.multi_reduction <add>, %152, %cst_67 [1] : vector<2x16xf32> to vector<2xf32>
    %154 = vector.shape_cast %153 : vector<2xf32> to vector<2x1xf32>
    %155 = tpu.reciprocal %154 {approx = true} : vector<2x1xf32> -> vector<2x1xf32>
    %156 = vector.broadcast %155 : vector<2x1xf32> to vector<2x16xf32>
    %157 = arith.mulf %152, %156 : vector<2x16xf32>
    %158 = vector.shape_cast %157 : vector<2x16xf32> to vector<2x1x16xf32>
    "tpu.trace_start"() <{level = 10 : i32, message = "bqp,bpe->bqe"}> : () -> ()
    %cst_68 = arith.constant dense<0.000000e+00> : vector<2x1x128xf32>
    %159 = tpu.matmul %158, %7, %cst_68 {dimension_numbers = #tpu.dot_dimension_numbers<[2], [1], [1], [2], [0, 0, 0, 1, 1, 2], [0], [0]>} : vector<2x1x16xf32>, vector<2x16x128xf32>, vector<2x1x128xf32> -> vector<2x1x128xf32>
    "tpu.trace_stop"() : () -> ()
    %160 = vector.shape_cast %159 : vector<2x1x128xf32> to vector<2x128xf32>
    %161 = arith.mulf %136, %160 : vector<2x128xf32>
    %c0_69 = arith.constant 0 : index
    %c1_70 = arith.constant 1 : index
    %162 = memref.load %arg1[%c0_69, %c1_70] : memref<2x6xi32, #tpu.memory_space<smem>>
    %163 = arith.index_cast %162 : i32 to index
    %c0_71 = arith.constant 0 : index
    %164 = vector.load %arg3[%163, %c0_71] : memref<32x64xf32, #tpu.memory_space<vmem>>, vector<1x64xf32>
    %c1_72 = arith.constant 1 : index
    %c1_73 = arith.constant 1 : index
    %165 = memref.load %arg1[%c1_72, %c1_73] : memref<2x6xi32, #tpu.memory_space<smem>>
    %166 = arith.index_cast %165 : i32 to index
    %c0_74 = arith.constant 0 : index
    %167 = vector.load %arg3[%166, %c0_74] : memref<32x64xf32, #tpu.memory_space<vmem>>, vector<1x64xf32>
    %168 = tpu.concatenate %164, %167 in 0 : vector<1x64xf32>, vector<1x64xf32> -> vector<2x64xf32>
    %169 = tpu.concatenate %168, %161, %104 in 1 : vector<2x64xf32>, vector<2x128xf32>, vector<2x64xf32> -> vector<2x256xf32>
    %170 = arith.truncf %169 : vector<2x256xf32> to vector<2x256xbf16>
    %c0_75 = arith.constant 0 : index
    %c0_76 = arith.constant 0 : index
    %171 = vector.load %arg14[%c0_75, %c0_76] : memref<256x256xbf16, #tpu.memory_space<vmem>>, vector<256x256xbf16>
    %cst_77 = arith.constant dense<0.000000e+00> : vector<2x256xf32>
    %172 = tpu.matmul %170, %171, %cst_77 {dimension_numbers = #tpu.dot_dimension_numbers<[1], [0], [0], [1], [0, 0, 1, 1], [], []>} : vector<2x256xbf16>, vector<256x256xbf16>, vector<2x256xf32> -> vector<2x256xf32>
    %173 = vector.broadcast %32 : vector<1x256xf32> to vector<2x256xf32>
    %174 = arith.addf %172, %173 : vector<2x256xf32>
    %175 = vector.extract_strided_slice %174 {offsets = [0, 0], sizes = [2, 192], strides = [1, 1]} : vector<2x256xf32> to vector<2x192xf32>
    %176 = arith.negf %175 : vector<2x192xf32>
    %177 = math.exp %176 : vector<2x192xf32>
    %cst_78 = arith.constant 1.000000e+00 : f32
    %178 = vector.broadcast %cst_78 : f32 to vector<2x192xf32>
    %179 = arith.addf %178, %177 : vector<2x192xf32>
    %180 = arith.divf %178, %179 : vector<2x192xf32>
    %181 = vector.extract_strided_slice %180 {offsets = [0, 0], sizes = [2, 64], strides = [1, 1]} : vector<2x192xf32> to vector<2x64xf32>
    %182 = vector.extract_strided_slice %180 {offsets = [0, 64], sizes = [2, 64], strides = [1, 1]} : vector<2x192xf32> to vector<2x64xf32>
    %183 = vector.extract_strided_slice %180 {offsets = [0, 128], sizes = [2, 64], strides = [1, 1]} : vector<2x192xf32> to vector<2x64xf32>
    %184 = vector.extract_strided_slice %174 {offsets = [0, 192], sizes = [2, 64], strides = [1, 1]} : vector<2x256xf32> to vector<2x64xf32>
    %185 = math.tanh %184 : vector<2x64xf32>
    %186 = arith.mulf %182, %109 : vector<2x64xf32>
    %187 = arith.mulf %181, %185 : vector<2x64xf32>
    %188 = arith.addf %186, %187 : vector<2x64xf32>
    %189 = math.tanh %188 : vector<2x64xf32>
    %190 = arith.mulf %183, %189 : vector<2x64xf32>
    %cst_79 = arith.constant 0.000000e+00 : f32
    %191 = vector.broadcast %cst_79 : f32 to vector<2x1xf32>
    %192 = arith.cmpf ogt, %125, %191 : vector<2x1xf32>
    %193 = vector.shape_cast %192 : vector<2x1xi1> to vector<2x1xi1>
    %194 = vector.broadcast %193 : vector<2x1xi1> to vector<2x64xi1>
    %195 = arith.select %194, %190, %104 : vector<2x64xi1>, vector<2x64xf32>
    %cst_80 = arith.constant 0.000000e+00 : f32
    %196 = vector.broadcast %cst_80 : f32 to vector<2x1xf32>
    %197 = arith.cmpf ogt, %125, %196 : vector<2x1xf32>
    %198 = vector.shape_cast %197 : vector<2x1xi1> to vector<2x1xi1>
    %199 = vector.broadcast %198 : vector<2x1xi1> to vector<2x64xi1>
    %200 = arith.select %199, %188, %109 : vector<2x64xi1>, vector<2x64xf32>
    %201 = arith.truncf %190 : vector<2x64xf32> to vector<2x64xbf16>
    %cst_81 = arith.constant dense<0.000000e+00> : vector<2x32xf32>
    %202 = tpu.matmul %201, %30, %cst_81 {dimension_numbers = #tpu.dot_dimension_numbers<[1], [0], [0], [1], [0, 0, 1, 1], [], []>} : vector<2x64xbf16>, vector<64x32xbf16>, vector<2x32xf32> -> vector<2x32xf32>
    %203 = vector.broadcast %31 : vector<1x32xf32> to vector<2x32xf32>
    %204 = arith.addf %202, %203 : vector<2x32xf32>
    %205 = vector.broadcast %125 : vector<2x1xf32> to vector<2x32xf32>
    %206 = arith.mulf %204, %205 : vector<2x32xf32>
    %c0_82 = arith.constant 0 : index
    %c1_83 = arith.constant 1 : index
    %c0_84 = arith.constant 0 : index
    %207 = vector.load %arg18[%c0_82, %c1_83, %c0_84] : memref<2x5x32xf32, #tpu.memory_space<vmem>>, vector<2x1x32xf32>
    %208 = vector.shape_cast %207 : vector<2x1x32xf32> to vector<2x32xf32>
    %209 = vector.shape_cast %206 : vector<2x32xf32> to vector<2x1x32xf32>
    tpu.vector_store %arg18[%c0_82, %c1_83, %c0_84], %209 {strides = array<i32>} : memref<2x5x32xf32, #tpu.memory_space<vmem>>, vector<2x1x32xf32>,
    %210 = vector.broadcast %125 : vector<2x1xf32> to vector<2x16xf32>
    %211 = arith.mulf %157, %210 : vector<2x16xf32>
    %c0_85 = arith.constant 0 : index
    %c1_86 = arith.constant 1 : index
    %c0_87 = arith.constant 0 : index
    %212 = vector.load %arg19[%c0_85, %c1_86, %c0_87] : memref<2x5x16xf32, #tpu.memory_space<vmem>>, vector<2x1x16xf32>
    %213 = vector.shape_cast %212 : vector<2x1x16xf32> to vector<2x16xf32>
    %214 = vector.shape_cast %211 : vector<2x16xf32> to vector<2x1x16xf32>
    tpu.vector_store %arg19[%c0_85, %c1_86, %c0_87], %214 {strides = array<i32>} : memref<2x5x16xf32, #tpu.memory_space<vmem>>, vector<2x1x16xf32>,
    %c2 = arith.constant 2 : index
    %c0_88 = arith.constant 0 : index
    %c0_89 = arith.constant 0 : index
    %215 = vector.load %arg2[%c2, %c0_88, %c0_89] : memref<5x2x1xf32, #tpu.memory_space<vmem>>, vector<1x2x1xf32>
    %216 = vector.shape_cast %215 : vector<1x2x1xf32> to vector<2x1xf32>
    %217 = arith.truncf %195 : vector<2x64xf32> to vector<2x64xbf16>
    %cst_90 = arith.constant dense<0.000000e+00> : vector<2x192xf32>
    %218 = tpu.matmul %217, %26, %cst_90 {dimension_numbers = #tpu.dot_dimension_numbers<[1], [0], [0], [1], [0, 0, 1, 1], [], []>} : vector<2x64xbf16>, vector<64x192xbf16>, vector<2x192xf32> -> vector<2x192xf32>
    %219 = vector.broadcast %27 : vector<1x192xf32> to vector<2x192xf32>
    %220 = arith.addf %218, %219 : vector<2x192xf32>
    %221 = vector.extract_strided_slice %220 {offsets = [0, 0], sizes = [2, 64], strides = [1, 1]} : vector<2x192xf32> to vector<2x64xf32>
    %222 = vector.extract_strided_slice %220 {offsets = [0, 64], sizes = [2, 128], strides = [1, 1]} : vector<2x192xf32> to vector<2x128xf32>
    %223 = arith.negf %222 : vector<2x128xf32>
    %224 = math.exp %223 : vector<2x128xf32>
    %cst_91 = arith.constant 1.000000e+00 : f32
    %225 = vector.broadcast %cst_91 : f32 to vector<2x128xf32>
    %226 = arith.addf %225, %224 : vector<2x128xf32>
    %227 = arith.divf %225, %226 : vector<2x128xf32>
    %228 = vector.shape_cast %221 : vector<2x64xf32> to vector<2x1x64xf32>
    %229 = vector.broadcast %228 : vector<2x1x64xf32> to vector<2x16x64xf32>
    %230 = arith.addf %14, %229 : vector<2x16x64xf32>
    %cst_92 = arith.constant 0.000000e+00 : f32
    %231 = vector.broadcast %cst_92 : f32 to vector<2x16x64xf32>
    %232 = arith.maximumf %230, %231 : vector<2x16x64xf32>
    %233 = vector.shape_cast %28 : vector<1x64xf32> to vector<1x1x64xf32>
    %234 = vector.broadcast %233 : vector<1x1x64xf32> to vector<2x16x64xf32>
    %235 = arith.mulf %232, %234 : vector<2x16x64xf32>
    %cst_93 = arith.constant dense<0.000000e+00> : vector<2x16xf32>
    %236 = vector.multi_reduction <add>, %235, %cst_93 [2] : vector<2x16x64xf32> to vector<2x16xf32>
    %237 = vector.broadcast %29 : vector<1x1xf32> to vector<2x16xf32>
    %238 = arith.addf %236, %237 : vector<2x16xf32>
    %cst_94 = arith.constant dense<0xFF800000> : vector<2xf32>
    %239 = vector.multi_reduction <maximumf>, %238, %cst_94 [1] : vector<2x16xf32> to vector<2xf32>
    %240 = vector.shape_cast %239 : vector<2xf32> to vector<2x1xf32>
    %241 = vector.broadcast %240 : vector<2x1xf32> to vector<2x16xf32>
    %242 = arith.subf %238, %241 : vector<2x16xf32>
    %243 = math.exp %242 : vector<2x16xf32>
    %cst_95 = arith.constant dense<0.000000e+00> : vector<2xf32>
    %244 = vector.multi_reduction <add>, %243, %cst_95 [1] : vector<2x16xf32> to vector<2xf32>
    %245 = vector.shape_cast %244 : vector<2xf32> to vector<2x1xf32>
    %246 = tpu.reciprocal %245 {approx = true} : vector<2x1xf32> -> vector<2x1xf32>
    %247 = vector.broadcast %246 : vector<2x1xf32> to vector<2x16xf32>
    %248 = arith.mulf %243, %247 : vector<2x16xf32>
    %249 = vector.shape_cast %248 : vector<2x16xf32> to vector<2x1x16xf32>
    "tpu.trace_start"() <{level = 10 : i32, message = "bqp,bpe->bqe"}> : () -> ()
    %cst_96 = arith.constant dense<0.000000e+00> : vector<2x1x128xf32>
    %250 = tpu.matmul %249, %7, %cst_96 {dimension_numbers = #tpu.dot_dimension_numbers<[2], [1], [1], [2], [0, 0, 0, 1, 1, 2], [0], [0]>} : vector<2x1x16xf32>, vector<2x16x128xf32>, vector<2x1x128xf32> -> vector<2x1x128xf32>
    "tpu.trace_stop"() : () -> ()
    %251 = vector.shape_cast %250 : vector<2x1x128xf32> to vector<2x128xf32>
    %252 = arith.mulf %227, %251 : vector<2x128xf32>
    %c0_97 = arith.constant 0 : index
    %c2_98 = arith.constant 2 : index
    %253 = memref.load %arg1[%c0_97, %c2_98] : memref<2x6xi32, #tpu.memory_space<smem>>
    %254 = arith.index_cast %253 : i32 to index
    %c0_99 = arith.constant 0 : index
    %255 = vector.load %arg3[%254, %c0_99] : memref<32x64xf32, #tpu.memory_space<vmem>>, vector<1x64xf32>
    %c1_100 = arith.constant 1 : index
    %c2_101 = arith.constant 2 : index
    %256 = memref.load %arg1[%c1_100, %c2_101] : memref<2x6xi32, #tpu.memory_space<smem>>
    %257 = arith.index_cast %256 : i32 to index
    %c0_102 = arith.constant 0 : index
    %258 = vector.load %arg3[%257, %c0_102] : memref<32x64xf32, #tpu.memory_space<vmem>>, vector<1x64xf32>
    %259 = tpu.concatenate %255, %258 in 0 : vector<1x64xf32>, vector<1x64xf32> -> vector<2x64xf32>
    %260 = tpu.concatenate %259, %252, %195 in 1 : vector<2x64xf32>, vector<2x128xf32>, vector<2x64xf32> -> vector<2x256xf32>
    %261 = arith.truncf %260 : vector<2x256xf32> to vector<2x256xbf16>
    %c0_103 = arith.constant 0 : index
    %c0_104 = arith.constant 0 : index
    %262 = vector.load %arg14[%c0_103, %c0_104] : memref<256x256xbf16, #tpu.memory_space<vmem>>, vector<256x256xbf16>
    %cst_105 = arith.constant dense<0.000000e+00> : vector<2x256xf32>
    %263 = tpu.matmul %261, %262, %cst_105 {dimension_numbers = #tpu.dot_dimension_numbers<[1], [0], [0], [1], [0, 0, 1, 1], [], []>} : vector<2x256xbf16>, vector<256x256xbf16>, vector<2x256xf32> -> vector<2x256xf32>
    %264 = vector.broadcast %32 : vector<1x256xf32> to vector<2x256xf32>
    %265 = arith.addf %263, %264 : vector<2x256xf32>
    %266 = vector.extract_strided_slice %265 {offsets = [0, 0], sizes = [2, 192], strides = [1, 1]} : vector<2x256xf32> to vector<2x192xf32>
    %267 = arith.negf %266 : vector<2x192xf32>
    %268 = math.exp %267 : vector<2x192xf32>
    %cst_106 = arith.constant 1.000000e+00 : f32
    %269 = vector.broadcast %cst_106 : f32 to vector<2x192xf32>
    %270 = arith.addf %269, %268 : vector<2x192xf32>
    %271 = arith.divf %269, %270 : vector<2x192xf32>
    %272 = vector.extract_strided_slice %271 {offsets = [0, 0], sizes = [2, 64], strides = [1, 1]} : vector<2x192xf32> to vector<2x64xf32>
    %273 = vector.extract_strided_slice %271 {offsets = [0, 64], sizes = [2, 64], strides = [1, 1]} : vector<2x192xf32> to vector<2x64xf32>
    %274 = vector.extract_strided_slice %271 {offsets = [0, 128], sizes = [2, 64], strides = [1, 1]} : vector<2x192xf32> to vector<2x64xf32>
    %275 = vector.extract_strided_slice %265 {offsets = [0, 192], sizes = [2, 64], strides = [1, 1]} : vector<2x256xf32> to vector<2x64xf32>
    %276 = math.tanh %275 : vector<2x64xf32>
    %277 = arith.mulf %273, %200 : vector<2x64xf32>
    %278 = arith.mulf %272, %276 : vector<2x64xf32>
    %279 = arith.addf %277, %278 : vector<2x64xf32>
    %280 = math.tanh %279 : vector<2x64xf32>
    %281 = arith.mulf %274, %280 : vector<2x64xf32>
    %cst_107 = arith.constant 0.000000e+00 : f32
    %282 = vector.broadcast %cst_107 : f32 to vector<2x1xf32>
    %283 = arith.cmpf ogt, %216, %282 : vector<2x1xf32>
    %284 = vector.shape_cast %283 : vector<2x1xi1> to vector<2x1xi1>
    %285 = vector.broadcast %284 : vector<2x1xi1> to vector<2x64xi1>
    %286 = arith.select %285, %281, %195 : vector<2x64xi1>, vector<2x64xf32>
    %cst_108 = arith.constant 0.000000e+00 : f32
    %287 = vector.broadcast %cst_108 : f32 to vector<2x1xf32>
    %288 = arith.cmpf ogt, %216, %287 : vector<2x1xf32>
    %289 = vector.shape_cast %288 : vector<2x1xi1> to vector<2x1xi1>
    %290 = vector.broadcast %289 : vector<2x1xi1> to vector<2x64xi1>
    %291 = arith.select %290, %279, %200 : vector<2x64xi1>, vector<2x64xf32>
    %292 = arith.truncf %281 : vector<2x64xf32> to vector<2x64xbf16>
    %cst_109 = arith.constant dense<0.000000e+00> : vector<2x32xf32>
    %293 = tpu.matmul %292, %30, %cst_109 {dimension_numbers = #tpu.dot_dimension_numbers<[1], [0], [0], [1], [0, 0, 1, 1], [], []>} : vector<2x64xbf16>, vector<64x32xbf16>, vector<2x32xf32> -> vector<2x32xf32>
    %294 = vector.broadcast %31 : vector<1x32xf32> to vector<2x32xf32>
    %295 = arith.addf %293, %294 : vector<2x32xf32>
    %296 = vector.broadcast %216 : vector<2x1xf32> to vector<2x32xf32>
    %297 = arith.mulf %295, %296 : vector<2x32xf32>
    %c0_110 = arith.constant 0 : index
    %c2_111 = arith.constant 2 : index
    %c0_112 = arith.constant 0 : index
    %298 = vector.load %arg18[%c0_110, %c2_111, %c0_112] : memref<2x5x32xf32, #tpu.memory_space<vmem>>, vector<2x1x32xf32>
    %299 = vector.shape_cast %298 : vector<2x1x32xf32> to vector<2x32xf32>
    %300 = vector.shape_cast %297 : vector<2x32xf32> to vector<2x1x32xf32>
    tpu.vector_store %arg18[%c0_110, %c2_111, %c0_112], %300 {strides = array<i32>} : memref<2x5x32xf32, #tpu.memory_space<vmem>>, vector<2x1x32xf32>,
    %301 = vector.broadcast %216 : vector<2x1xf32> to vector<2x16xf32>
    %302 = arith.mulf %248, %301 : vector<2x16xf32>
    %c0_113 = arith.constant 0 : index
    %c2_114 = arith.constant 2 : index
    %c0_115 = arith.constant 0 : index
    %303 = vector.load %arg19[%c0_113, %c2_114, %c0_115] : memref<2x5x16xf32, #tpu.memory_space<vmem>>, vector<2x1x16xf32>
    %304 = vector.shape_cast %303 : vector<2x1x16xf32> to vector<2x16xf32>
    %305 = vector.shape_cast %302 : vector<2x16xf32> to vector<2x1x16xf32>
    tpu.vector_store %arg19[%c0_113, %c2_114, %c0_115], %305 {strides = array<i32>} : memref<2x5x16xf32, #tpu.memory_space<vmem>>, vector<2x1x16xf32>,
    %c3 = arith.constant 3 : index
    %c0_116 = arith.constant 0 : index
    %c0_117 = arith.constant 0 : index
    %306 = vector.load %arg2[%c3, %c0_116, %c0_117] : memref<5x2x1xf32, #tpu.memory_space<vmem>>, vector<1x2x1xf32>
    %307 = vector.shape_cast %306 : vector<1x2x1xf32> to vector<2x1xf32>
    %308 = arith.truncf %286 : vector<2x64xf32> to vector<2x64xbf16>
    %cst_118 = arith.constant dense<0.000000e+00> : vector<2x192xf32>
    %309 = tpu.matmul %308, %26, %cst_118 {dimension_numbers = #tpu.dot_dimension_numbers<[1], [0], [0], [1], [0, 0, 1, 1], [], []>} : vector<2x64xbf16>, vector<64x192xbf16>, vector<2x192xf32> -> vector<2x192xf32>
    %310 = vector.broadcast %27 : vector<1x192xf32> to vector<2x192xf32>
    %311 = arith.addf %309, %310 : vector<2x192xf32>
    %312 = vector.extract_strided_slice %311 {offsets = [0, 0], sizes = [2, 64], strides = [1, 1]} : vector<2x192xf32> to vector<2x64xf32>
    %313 = vector.extract_strided_slice %311 {offsets = [0, 64], sizes = [2, 128], strides = [1, 1]} : vector<2x192xf32> to vector<2x128xf32>
    %314 = arith.negf %313 : vector<2x128xf32>
    %315 = math.exp %314 : vector<2x128xf32>
    %cst_119 = arith.constant 1.000000e+00 : f32
    %316 = vector.broadcast %cst_119 : f32 to vector<2x128xf32>
    %317 = arith.addf %316, %315 : vector<2x128xf32>
    %318 = arith.divf %316, %317 : vector<2x128xf32>
    %319 = vector.shape_cast %312 : vector<2x64xf32> to vector<2x1x64xf32>
    %320 = vector.broadcast %319 : vector<2x1x64xf32> to vector<2x16x64xf32>
    %321 = arith.addf %14, %320 : vector<2x16x64xf32>
    %cst_120 = arith.constant 0.000000e+00 : f32
    %322 = vector.broadcast %cst_120 : f32 to vector<2x16x64xf32>
    %323 = arith.maximumf %321, %322 : vector<2x16x64xf32>
    %324 = vector.shape_cast %28 : vector<1x64xf32> to vector<1x1x64xf32>
    %325 = vector.broadcast %324 : vector<1x1x64xf32> to vector<2x16x64xf32>
    %326 = arith.mulf %323, %325 : vector<2x16x64xf32>
    %cst_121 = arith.constant dense<0.000000e+00> : vector<2x16xf32>
    %327 = vector.multi_reduction <add>, %326, %cst_121 [2] : vector<2x16x64xf32> to vector<2x16xf32>
    %328 = vector.broadcast %29 : vector<1x1xf32> to vector<2x16xf32>
    %329 = arith.addf %327, %328 : vector<2x16xf32>
    %cst_122 = arith.constant dense<0xFF800000> : vector<2xf32>
    %330 = vector.multi_reduction <maximumf>, %329, %cst_122 [1] : vector<2x16xf32> to vector<2xf32>
    %331 = vector.shape_cast %330 : vector<2xf32> to vector<2x1xf32>
    %332 = vector.broadcast %331 : vector<2x1xf32> to vector<2x16xf32>
    %333 = arith.subf %329, %332 : vector<2x16xf32>
    %334 = math.exp %333 : vector<2x16xf32>
    %cst_123 = arith.constant dense<0.000000e+00> : vector<2xf32>
    %335 = vector.multi_reduction <add>, %334, %cst_123 [1] : vector<2x16xf32> to vector<2xf32>
    %336 = vector.shape_cast %335 : vector<2xf32> to vector<2x1xf32>
    %337 = tpu.reciprocal %336 {approx = true} : vector<2x1xf32> -> vector<2x1xf32>
    %338 = vector.broadcast %337 : vector<2x1xf32> to vector<2x16xf32>
    %339 = arith.mulf %334, %338 : vector<2x16xf32>
    %340 = vector.shape_cast %339 : vector<2x16xf32> to vector<2x1x16xf32>
    "tpu.trace_start"() <{level = 10 : i32, message = "bqp,bpe->bqe"}> : () -> ()
    %cst_124 = arith.constant dense<0.000000e+00> : vector<2x1x128xf32>
    %341 = tpu.matmul %340, %7, %cst_124 {dimension_numbers = #tpu.dot_dimension_numbers<[2], [1], [1], [2], [0, 0, 0, 1, 1, 2], [0], [0]>} : vector<2x1x16xf32>, vector<2x16x128xf32>, vector<2x1x128xf32> -> vector<2x1x128xf32>
    "tpu.trace_stop"() : () -> ()
    %342 = vector.shape_cast %341 : vector<2x1x128xf32> to vector<2x128xf32>
    %343 = arith.mulf %318, %342 : vector<2x128xf32>
    %c0_125 = arith.constant 0 : index
    %c3_126 = arith.constant 3 : index
    %344 = memref.load %arg1[%c0_125, %c3_126] : memref<2x6xi32, #tpu.memory_space<smem>>
    %345 = arith.index_cast %344 : i32 to index
    %c0_127 = arith.constant 0 : index
    %346 = vector.load %arg3[%345, %c0_127] : memref<32x64xf32, #tpu.memory_space<vmem>>, vector<1x64xf32>
    %c1_128 = arith.constant 1 : index
    %c3_129 = arith.constant 3 : index
    %347 = memref.load %arg1[%c1_128, %c3_129] : memref<2x6xi32, #tpu.memory_space<smem>>
    %348 = arith.index_cast %347 : i32 to index
    %c0_130 = arith.constant 0 : index
    %349 = vector.load %arg3[%348, %c0_130] : memref<32x64xf32, #tpu.memory_space<vmem>>, vector<1x64xf32>
    %350 = tpu.concatenate %346, %349 in 0 : vector<1x64xf32>, vector<1x64xf32> -> vector<2x64xf32>
    %351 = tpu.concatenate %350, %343, %286 in 1 : vector<2x64xf32>, vector<2x128xf32>, vector<2x64xf32> -> vector<2x256xf32>
    %352 = arith.truncf %351 : vector<2x256xf32> to vector<2x256xbf16>
    %c0_131 = arith.constant 0 : index
    %c0_132 = arith.constant 0 : index
    %353 = vector.load %arg14[%c0_131, %c0_132] : memref<256x256xbf16, #tpu.memory_space<vmem>>, vector<256x256xbf16>
    %cst_133 = arith.constant dense<0.000000e+00> : vector<2x256xf32>
    %354 = tpu.matmul %352, %353, %cst_133 {dimension_numbers = #tpu.dot_dimension_numbers<[1], [0], [0], [1], [0, 0, 1, 1], [], []>} : vector<2x256xbf16>, vector<256x256xbf16>, vector<2x256xf32> -> vector<2x256xf32>
    %355 = vector.broadcast %32 : vector<1x256xf32> to vector<2x256xf32>
    %356 = arith.addf %354, %355 : vector<2x256xf32>
    %357 = vector.extract_strided_slice %356 {offsets = [0, 0], sizes = [2, 192], strides = [1, 1]} : vector<2x256xf32> to vector<2x192xf32>
    %358 = arith.negf %357 : vector<2x192xf32>
    %359 = math.exp %358 : vector<2x192xf32>
    %cst_134 = arith.constant 1.000000e+00 : f32
    %360 = vector.broadcast %cst_134 : f32 to vector<2x192xf32>
    %361 = arith.addf %360, %359 : vector<2x192xf32>
    %362 = arith.divf %360, %361 : vector<2x192xf32>
    %363 = vector.extract_strided_slice %362 {offsets = [0, 0], sizes = [2, 64], strides = [1, 1]} : vector<2x192xf32> to vector<2x64xf32>
    %364 = vector.extract_strided_slice %362 {offsets = [0, 64], sizes = [2, 64], strides = [1, 1]} : vector<2x192xf32> to vector<2x64xf32>
    %365 = vector.extract_strided_slice %362 {offsets = [0, 128], sizes = [2, 64], strides = [1, 1]} : vector<2x192xf32> to vector<2x64xf32>
    %366 = vector.extract_strided_slice %356 {offsets = [0, 192], sizes = [2, 64], strides = [1, 1]} : vector<2x256xf32> to vector<2x64xf32>
    %367 = math.tanh %366 : vector<2x64xf32>
    %368 = arith.mulf %364, %291 : vector<2x64xf32>
    %369 = arith.mulf %363, %367 : vector<2x64xf32>
    %370 = arith.addf %368, %369 : vector<2x64xf32>
    %371 = math.tanh %370 : vector<2x64xf32>
    %372 = arith.mulf %365, %371 : vector<2x64xf32>
    %cst_135 = arith.constant 0.000000e+00 : f32
    %373 = vector.broadcast %cst_135 : f32 to vector<2x1xf32>
    %374 = arith.cmpf ogt, %307, %373 : vector<2x1xf32>
    %375 = vector.shape_cast %374 : vector<2x1xi1> to vector<2x1xi1>
    %376 = vector.broadcast %375 : vector<2x1xi1> to vector<2x64xi1>
    %377 = arith.select %376, %372, %286 : vector<2x64xi1>, vector<2x64xf32>
    %cst_136 = arith.constant 0.000000e+00 : f32
    %378 = vector.broadcast %cst_136 : f32 to vector<2x1xf32>
    %379 = arith.cmpf ogt, %307, %378 : vector<2x1xf32>
    %380 = vector.shape_cast %379 : vector<2x1xi1> to vector<2x1xi1>
    %381 = vector.broadcast %380 : vector<2x1xi1> to vector<2x64xi1>
    %382 = arith.select %381, %370, %291 : vector<2x64xi1>, vector<2x64xf32>
    %383 = arith.truncf %372 : vector<2x64xf32> to vector<2x64xbf16>
    %cst_137 = arith.constant dense<0.000000e+00> : vector<2x32xf32>
    %384 = tpu.matmul %383, %30, %cst_137 {dimension_numbers = #tpu.dot_dimension_numbers<[1], [0], [0], [1], [0, 0, 1, 1], [], []>} : vector<2x64xbf16>, vector<64x32xbf16>, vector<2x32xf32> -> vector<2x32xf32>
    %385 = vector.broadcast %31 : vector<1x32xf32> to vector<2x32xf32>
    %386 = arith.addf %384, %385 : vector<2x32xf32>
    %387 = vector.broadcast %307 : vector<2x1xf32> to vector<2x32xf32>
    %388 = arith.mulf %386, %387 : vector<2x32xf32>
    %c0_138 = arith.constant 0 : index
    %c3_139 = arith.constant 3 : index
    %c0_140 = arith.constant 0 : index
    %389 = vector.load %arg18[%c0_138, %c3_139, %c0_140] : memref<2x5x32xf32, #tpu.memory_space<vmem>>, vector<2x1x32xf32>
    %390 = vector.shape_cast %389 : vector<2x1x32xf32> to vector<2x32xf32>
    %391 = vector.shape_cast %388 : vector<2x32xf32> to vector<2x1x32xf32>
    tpu.vector_store %arg18[%c0_138, %c3_139, %c0_140], %391 {strides = array<i32>} : memref<2x5x32xf32, #tpu.memory_space<vmem>>, vector<2x1x32xf32>,
    %392 = vector.broadcast %307 : vector<2x1xf32> to vector<2x16xf32>
    %393 = arith.mulf %339, %392 : vector<2x16xf32>
    %c0_141 = arith.constant 0 : index
    %c3_142 = arith.constant 3 : index
    %c0_143 = arith.constant 0 : index
    %394 = vector.load %arg19[%c0_141, %c3_142, %c0_143] : memref<2x5x16xf32, #tpu.memory_space<vmem>>, vector<2x1x16xf32>
    %395 = vector.shape_cast %394 : vector<2x1x16xf32> to vector<2x16xf32>
    %396 = vector.shape_cast %393 : vector<2x16xf32> to vector<2x1x16xf32>
    tpu.vector_store %arg19[%c0_141, %c3_142, %c0_143], %396 {strides = array<i32>} : memref<2x5x16xf32, #tpu.memory_space<vmem>>, vector<2x1x16xf32>,
    %c4 = arith.constant 4 : index
    %c0_144 = arith.constant 0 : index
    %c0_145 = arith.constant 0 : index
    %397 = vector.load %arg2[%c4, %c0_144, %c0_145] : memref<5x2x1xf32, #tpu.memory_space<vmem>>, vector<1x2x1xf32>
    %398 = vector.shape_cast %397 : vector<1x2x1xf32> to vector<2x1xf32>
    %399 = arith.truncf %377 : vector<2x64xf32> to vector<2x64xbf16>
    %cst_146 = arith.constant dense<0.000000e+00> : vector<2x192xf32>
    %400 = tpu.matmul %399, %26, %cst_146 {dimension_numbers = #tpu.dot_dimension_numbers<[1], [0], [0], [1], [0, 0, 1, 1], [], []>} : vector<2x64xbf16>, vector<64x192xbf16>, vector<2x192xf32> -> vector<2x192xf32>
    %401 = vector.broadcast %27 : vector<1x192xf32> to vector<2x192xf32>
    %402 = arith.addf %400, %401 : vector<2x192xf32>
    %403 = vector.extract_strided_slice %402 {offsets = [0, 0], sizes = [2, 64], strides = [1, 1]} : vector<2x192xf32> to vector<2x64xf32>
    %404 = vector.extract_strided_slice %402 {offsets = [0, 64], sizes = [2, 128], strides = [1, 1]} : vector<2x192xf32> to vector<2x128xf32>
    %405 = arith.negf %404 : vector<2x128xf32>
    %406 = math.exp %405 : vector<2x128xf32>
    %cst_147 = arith.constant 1.000000e+00 : f32
    %407 = vector.broadcast %cst_147 : f32 to vector<2x128xf32>
    %408 = arith.addf %407, %406 : vector<2x128xf32>
    %409 = arith.divf %407, %408 : vector<2x128xf32>
    %410 = vector.shape_cast %403 : vector<2x64xf32> to vector<2x1x64xf32>
    %411 = vector.broadcast %410 : vector<2x1x64xf32> to vector<2x16x64xf32>
    %412 = arith.addf %14, %411 : vector<2x16x64xf32>
    %cst_148 = arith.constant 0.000000e+00 : f32
    %413 = vector.broadcast %cst_148 : f32 to vector<2x16x64xf32>
    %414 = arith.maximumf %412, %413 : vector<2x16x64xf32>
    %415 = vector.shape_cast %28 : vector<1x64xf32> to vector<1x1x64xf32>
    %416 = vector.broadcast %415 : vector<1x1x64xf32> to vector<2x16x64xf32>
    %417 = arith.mulf %414, %416 : vector<2x16x64xf32>
    %cst_149 = arith.constant dense<0.000000e+00> : vector<2x16xf32>
    %418 = vector.multi_reduction <add>, %417, %cst_149 [2] : vector<2x16x64xf32> to vector<2x16xf32>
    %419 = vector.broadcast %29 : vector<1x1xf32> to vector<2x16xf32>
    %420 = arith.addf %418, %419 : vector<2x16xf32>
    %cst_150 = arith.constant dense<0xFF800000> : vector<2xf32>
    %421 = vector.multi_reduction <maximumf>, %420, %cst_150 [1] : vector<2x16xf32> to vector<2xf32>
    %422 = vector.shape_cast %421 : vector<2xf32> to vector<2x1xf32>
    %423 = vector.broadcast %422 : vector<2x1xf32> to vector<2x16xf32>
    %424 = arith.subf %420, %423 : vector<2x16xf32>
    %425 = math.exp %424 : vector<2x16xf32>
    %cst_151 = arith.constant dense<0.000000e+00> : vector<2xf32>
    %426 = vector.multi_reduction <add>, %425, %cst_151 [1] : vector<2x16xf32> to vector<2xf32>
    %427 = vector.shape_cast %426 : vector<2xf32> to vector<2x1xf32>
    %428 = tpu.reciprocal %427 {approx = true} : vector<2x1xf32> -> vector<2x1xf32>
    %429 = vector.broadcast %428 : vector<2x1xf32> to vector<2x16xf32>
    %430 = arith.mulf %425, %429 : vector<2x16xf32>
    %431 = vector.shape_cast %430 : vector<2x16xf32> to vector<2x1x16xf32>
    "tpu.trace_start"() <{level = 10 : i32, message = "bqp,bpe->bqe"}> : () -> ()
    %cst_152 = arith.constant dense<0.000000e+00> : vector<2x1x128xf32>
    %432 = tpu.matmul %431, %7, %cst_152 {dimension_numbers = #tpu.dot_dimension_numbers<[2], [1], [1], [2], [0, 0, 0, 1, 1, 2], [0], [0]>} : vector<2x1x16xf32>, vector<2x16x128xf32>, vector<2x1x128xf32> -> vector<2x1x128xf32>
    "tpu.trace_stop"() : () -> ()
    %433 = vector.shape_cast %432 : vector<2x1x128xf32> to vector<2x128xf32>
    %434 = arith.mulf %409, %433 : vector<2x128xf32>
    %c0_153 = arith.constant 0 : index
    %c4_154 = arith.constant 4 : index
    %435 = memref.load %arg1[%c0_153, %c4_154] : memref<2x6xi32, #tpu.memory_space<smem>>
    %436 = arith.index_cast %435 : i32 to index
    %c0_155 = arith.constant 0 : index
    %437 = vector.load %arg3[%436, %c0_155] : memref<32x64xf32, #tpu.memory_space<vmem>>, vector<1x64xf32>
    %c1_156 = arith.constant 1 : index
    %c4_157 = arith.constant 4 : index
    %438 = memref.load %arg1[%c1_156, %c4_157] : memref<2x6xi32, #tpu.memory_space<smem>>
    %439 = arith.index_cast %438 : i32 to index
    %c0_158 = arith.constant 0 : index
    %440 = vector.load %arg3[%439, %c0_158] : memref<32x64xf32, #tpu.memory_space<vmem>>, vector<1x64xf32>
    %441 = tpu.concatenate %437, %440 in 0 : vector<1x64xf32>, vector<1x64xf32> -> vector<2x64xf32>
    %442 = tpu.concatenate %441, %434, %377 in 1 : vector<2x64xf32>, vector<2x128xf32>, vector<2x64xf32> -> vector<2x256xf32>
    %443 = arith.truncf %442 : vector<2x256xf32> to vector<2x256xbf16>
    %c0_159 = arith.constant 0 : index
    %c0_160 = arith.constant 0 : index
    %444 = vector.load %arg14[%c0_159, %c0_160] : memref<256x256xbf16, #tpu.memory_space<vmem>>, vector<256x256xbf16>
    %cst_161 = arith.constant dense<0.000000e+00> : vector<2x256xf32>
    %445 = tpu.matmul %443, %444, %cst_161 {dimension_numbers = #tpu.dot_dimension_numbers<[1], [0], [0], [1], [0, 0, 1, 1], [], []>} : vector<2x256xbf16>, vector<256x256xbf16>, vector<2x256xf32> -> vector<2x256xf32>
    %446 = vector.broadcast %32 : vector<1x256xf32> to vector<2x256xf32>
    %447 = arith.addf %445, %446 : vector<2x256xf32>
    %448 = vector.extract_strided_slice %447 {offsets = [0, 0], sizes = [2, 192], strides = [1, 1]} : vector<2x256xf32> to vector<2x192xf32>
    %449 = arith.negf %448 : vector<2x192xf32>
    %450 = math.exp %449 : vector<2x192xf32>
    %cst_162 = arith.constant 1.000000e+00 : f32
    %451 = vector.broadcast %cst_162 : f32 to vector<2x192xf32>
    %452 = arith.addf %451, %450 : vector<2x192xf32>
    %453 = arith.divf %451, %452 : vector<2x192xf32>
    %454 = vector.extract_strided_slice %453 {offsets = [0, 0], sizes = [2, 64], strides = [1, 1]} : vector<2x192xf32> to vector<2x64xf32>
    %455 = vector.extract_strided_slice %453 {offsets = [0, 64], sizes = [2, 64], strides = [1, 1]} : vector<2x192xf32> to vector<2x64xf32>
    %456 = vector.extract_strided_slice %453 {offsets = [0, 128], sizes = [2, 64], strides = [1, 1]} : vector<2x192xf32> to vector<2x64xf32>
    %457 = vector.extract_strided_slice %447 {offsets = [0, 192], sizes = [2, 64], strides = [1, 1]} : vector<2x256xf32> to vector<2x64xf32>
    %458 = math.tanh %457 : vector<2x64xf32>
    %459 = arith.mulf %455, %382 : vector<2x64xf32>
    %460 = arith.mulf %454, %458 : vector<2x64xf32>
    %461 = arith.addf %459, %460 : vector<2x64xf32>
    %462 = math.tanh %461 : vector<2x64xf32>
    %463 = arith.mulf %456, %462 : vector<2x64xf32>
    %464 = arith.truncf %463 : vector<2x64xf32> to vector<2x64xbf16>
    %cst_163 = arith.constant dense<0.000000e+00> : vector<2x32xf32>
    %465 = tpu.matmul %464, %30, %cst_163 {dimension_numbers = #tpu.dot_dimension_numbers<[1], [0], [0], [1], [0, 0, 1, 1], [], []>} : vector<2x64xbf16>, vector<64x32xbf16>, vector<2x32xf32> -> vector<2x32xf32>
    %466 = vector.broadcast %31 : vector<1x32xf32> to vector<2x32xf32>
    %467 = arith.addf %465, %466 : vector<2x32xf32>
    %468 = vector.broadcast %398 : vector<2x1xf32> to vector<2x32xf32>
    %469 = arith.mulf %467, %468 : vector<2x32xf32>
    %c0_164 = arith.constant 0 : index
    %c4_165 = arith.constant 4 : index
    %c0_166 = arith.constant 0 : index
    %470 = vector.load %arg18[%c0_164, %c4_165, %c0_166] : memref<2x5x32xf32, #tpu.memory_space<vmem>>, vector<2x1x32xf32>
    %471 = vector.shape_cast %470 : vector<2x1x32xf32> to vector<2x32xf32>
    %472 = vector.shape_cast %469 : vector<2x32xf32> to vector<2x1x32xf32>
    tpu.vector_store %arg18[%c0_164, %c4_165, %c0_166], %472 {strides = array<i32>} : memref<2x5x32xf32, #tpu.memory_space<vmem>>, vector<2x1x32xf32>,
    %473 = vector.broadcast %398 : vector<2x1xf32> to vector<2x16xf32>
    %474 = arith.mulf %430, %473 : vector<2x16xf32>
    %c0_167 = arith.constant 0 : index
    %c4_168 = arith.constant 4 : index
    %c0_169 = arith.constant 0 : index
    %475 = vector.load %arg19[%c0_167, %c4_168, %c0_169] : memref<2x5x16xf32, #tpu.memory_space<vmem>>, vector<2x1x16xf32>
    %476 = vector.shape_cast %475 : vector<2x1x16xf32> to vector<2x16xf32>
    %477 = vector.shape_cast %474 : vector<2x16xf32> to vector<2x1x16xf32>
    tpu.vector_store %arg19[%c0_167, %c4_168, %c0_169], %477 {strides = array<i32>} : memref<2x5x16xf32, #tpu.memory_space<vmem>>, vector<2x1x16xf32>,
    return
  }
}

</mosaic_0001>

<llo_original>
// kernel: run.1
$region0: #{run.1}
  #allocation0 [shape = 'u32[]', space=smem, size = 0x4, offset = 0x4, fixed_abs, tag = 'smem constant byte address 0x4 - core index']
  #allocation1 [shape = 'u32[144,128]{1,0:T(1,128)}', space=vmem, size = 0x12000, scoped, tag = 'internal scratch']
  #allocation2 [shape = 'f32[1,1]{1,0:T(1,128)S(1)}', space=vmem, size = 0x200, scoped, tag = 'scoped memory for run.1']
  %s0 = inlined_call_operand.vmem [shape: f32[32,48], index: 0, kind: input, shape index: {}]
  %s1 = inlined_call_operand.vmem [shape: s32[2,6], index: 1, kind: input, shape index: {}]
  %s2 = inlined_call_operand.vmem [shape: f32[5,2,1], index: 2, kind: input, shape index: {}]
  %s3 = inlined_call_operand.vmem [shape: f32[32,64], index: 3, kind: input, shape index: {}]
  %s4 = inlined_call_operand.vmem [shape: bf16[48,128], index: 4, kind: input, shape index: {}]
  %s5 = inlined_call_operand.vmem [shape: f32[1,128], index: 5, kind: input, shape index: {}]
  %s6 = inlined_call_operand.vmem [shape: bf16[128,64], index: 6, kind: input, shape index: {}]
  %s7 = inlined_call_operand.vmem [shape: f32[1,64], index: 7, kind: input, shape index: {}]
  %s8 = inlined_call_operand.vmem [shape: bf16[64,192], index: 8, kind: input, shape index: {}]
  %s9 = inlined_call_operand.vmem [shape: f32[1,192], index: 9, kind: input, shape index: {}]
  %s10 = inlined_call_operand.vmem [shape: f32[1,64], index: 10, kind: input, shape index: {}]
  %s11 = inlined_call_operand.<no memory space> [shape: f32[1,1], index: 11, kind: input, shape index: {}]
  %s12 = inlined_call_operand.vmem [shape: bf16[128,128], index: 12, kind: input, shape index: {}]
  %s13 = inlined_call_operand.vmem [shape: f32[1,128], index: 13, kind: input, shape index: {}]
  %s14 = inlined_call_operand.vmem [shape: bf16[256,256], index: 14, kind: input, shape index: {}]
  %s15 = inlined_call_operand.vmem [shape: f32[1,256], index: 15, kind: input, shape index: {}]
  %s16 = inlined_call_operand.vmem [shape: bf16[64,32], index: 16, kind: input, shape index: {}]
  %s17 = inlined_call_operand.vmem [shape: f32[1,32], index: 17, kind: input, shape index: {}]
  %s18 = inlined_call_operand.vmem [shape: f32[2,5,32], index: 18, kind: output, shape index: {0}]
  %s19 = inlined_call_operand.vmem [shape: f32[2,5,16], index: 19, kind: output, shape index: {1}]
  %20 = xla_tuple %s18, %s19
  %s21 = sld [smem:[#allocation0]]
  $region94: #{run.1} parent=0
    _
  %s23 = ssub.s32 1, %s21
  %s24 = scalar_select 0, %s23, %s21
  %v25 = vstv %s11
  %26 = vst [vmem:[#allocation2] sm:$0x1] %v25
  $region1: #{run.1} parent=0
    #allocation3 [shape = 'u8[1024]{0}', space=smem, size = 0x400, scoped, tag = 'input window, operand 1, single buffered']
    #allocation4 [shape = 's32[1]{0}', space=sflag, size = 0x4, scoped, tag = 'scoped memory for run.1']
    %27 = vsyncpa [#allocation4], 0
    // Predicated region
    $region2: #{run.1} parent=1 // pred_check
      _
    $region3: #{run.1} parent=1 // pred_check_branch
      %29 = sbr.rel (0) target = $region5
    $region4: #{run.1} parent=1 // pred_region
      _
    $region5: #{run.1} parent=1 // pred_fallthru
      _
    // Predicated region
    $region6: #{run.1} parent=1 // pred_check
      _
    $region7: #{run.1} parent=1 // pred_check_branch
      %31 = sbr.rel (0) target = $region9
    $region8: #{run.1} parent=1 // pred_region
      %s33 = ssub.s32 32, 32
      %34 = vsyncadd [#allocation4], %s33
      %s36 = sshll.u32 %s1, 4
      %s37 = int_to_ptr.vmem [resolvable:$true] %s36
      %39 = dma.vmem_to_smem %s37, 32, [#allocation3], [#allocation4]
    $region9: #{run.1} parent=1 // pred_fallthru
      _
    // Predicated region
    $region10: #{run.1} parent=1 // pred_check
      _
    $region11: #{run.1} parent=1 // pred_check_branch
      %41 = sbr.rel (0) target = $region13
    $region12: #{run.1} parent=1 // pred_region
      _
    $region13: #{run.1} parent=1 // pred_fallthru
      _
    // Predicated region
    $region14: #{run.1} parent=1 // pred_check
      _
    $region15: #{run.1} parent=1 // pred_check_branch
      %43 = sbr.rel (0) target = $region17
    $region16: #{run.1} parent=1 // pred_region
      _
    $region17: #{run.1} parent=1 // pred_fallthru
      _
    // Predicated region
    $region18: #{run.1} parent=1 // pred_check
      _
    $region19: #{run.1} parent=1 // pred_check_branch
      %45 = sbr.rel (0) target = $region21
    $region20: #{run.1} parent=1 // pred_region
      _
    $region21: #{run.1} parent=1 // pred_fallthru
      _
    // Predicated region
    $region22: #{run.1} parent=1 // pred_check
      _
    $region23: #{run.1} parent=1 // pred_check_branch
      %47 = sbr.rel (0) target = $region25
    $region24: #{run.1} parent=1 // pred_region
      _
    $region25: #{run.1} parent=1 // pred_fallthru
      _
    // Predicated region
    $region26: #{run.1} parent=1 // pred_check
      _
    $region27: #{run.1} parent=1 // pred_check_branch
      %49 = sbr.rel (0) target = $region29
    $region28: #{run.1} parent=1 // pred_region
      _
    $region29: #{run.1} parent=1 // pred_fallthru
      _
    // Predicated region
    $region30: #{run.1} parent=1 // pred_check
      _
    $region31: #{run.1} parent=1 // pred_check_branch
      %51 = sbr.rel (0) target = $region33
    $region32: #{run.1} parent=1 // pred_region
      _
    $region33: #{run.1} parent=1 // pred_fallthru
      _
    // Predicated region
    $region34: #{run.1} parent=1 // pred_check
      _
    $region35: #{run.1} parent=1 // pred_check_branch
      %53 = sbr.rel (0) target = $region37
    $region36: #{run.1} parent=1 // pred_region
      _
    $region37: #{run.1} parent=1 // pred_fallthru
      _
    // Predicated region
    $region38: #{run.1} parent=1 // pred_check
      _
    $region39: #{run.1} parent=1 // pred_check_branch
      %55 = sbr.rel (0) target = $region41
    $region40: #{run.1} parent=1 // pred_region
      _
    $region41: #{run.1} parent=1 // pred_fallthru
      _
    // Predicated region
    $region42: #{run.1} parent=1 // pred_check
      _
    $region43: #{run.1} parent=1 // pred_check_branch
      %57 = sbr.rel (0) target = $region45
    $region44: #{run.1} parent=1 // pred_region
      _
    $region45: #{run.1} parent=1 // pred_fallthru
      _
    // Predicated region
    $region46: #{run.1} parent=1 // pred_check
      _
    $region47: #{run.1} parent=1 // pred_check_branch
      %59 = sbr.rel (0) target = $region49
    $region48: #{run.1} parent=1 // pred_region
      _
    $region49: #{run.1} parent=1 // pred_fallthru
      _
    // Predicated region
    $region50: #{run.1} parent=1 // pred_check
      _
    $region51: #{run.1} parent=1 // pred_check_branch
      %61 = sbr.rel (0) target = $region53
    $region52: #{run.1} parent=1 // pred_region
      _
    $region53: #{run.1} parent=1 // pred_fallthru
      _
    // Predicated region
    $region54: #{run.1} parent=1 // pred_check
      _
    $region55: #{run.1} parent=1 // pred_check_branch
      %63 = sbr.rel (0) target = $region57
    $region56: #{run.1} parent=1 // pred_region
      _
    $region57: #{run.1} parent=1 // pred_fallthru
      _
    // Predicated region
    $region58: #{run.1} parent=1 // pred_check
      _
    $region59: #{run.1} parent=1 // pred_check_branch
      %65 = sbr.rel (0) target = $region61
    $region60: #{run.1} parent=1 // pred_region
      _
    $region61: #{run.1} parent=1 // pred_fallthru
      _
    // Predicated region
    $region62: #{run.1} parent=1 // pred_check
      _
    $region63: #{run.1} parent=1 // pred_check_branch
      %67 = sbr.rel (0) target = $region65
    $region64: #{run.1} parent=1 // pred_region
      _
    $region65: #{run.1} parent=1 // pred_fallthru
      _
    // Predicated region
    $region66: #{run.1} parent=1 // pred_check
      _
    $region67: #{run.1} parent=1 // pred_check_branch
      %69 = sbr.rel (0) target = $region69
    $region68: #{run.1} parent=1 // pred_region
      _
    $region69: #{run.1} parent=1 // pred_fallthru
      _
    // Predicated region
    $region70: #{run.1} parent=1 // pred_check
      _
    $region71: #{run.1} parent=1 // pred_check_branch
      %71 = sbr.rel (0) target = $region73
    $region72: #{run.1} parent=1 // pred_region
      _
    $region73: #{run.1} parent=1 // pred_fallthru
      _
    // Predicated region
    $region74: #{run.1} parent=1 // pred_check
      _
    $region75: #{run.1} parent=1 // pred_check_branch
      %73 = sbr.rel (0) target = $region77
    $region76: #{run.1} parent=1 // pred_region
      %74 = dma.done [#allocation4], 32
    $region77: #{run.1} parent=1 // pred_fallthru
      _
    %75 = sfence
    %v77 = vld [vmem:[%s0] sm:$0xff]
    %v78 = vld [vmem:[%s0 + $0x8] sm:$0xff]
    %v79 = vld [vmem:[%s0 + $0x10] sm:$0xff]
    %v80 = vld [vmem:[%s0 + $0x18] sm:$0xff]
    %v81 = vpack.c.bf16 %v78, %v77
    %v82 = vpack.c.bf16 %v80, %v79
    %v83 = vld [vmem:[%s4] sm:$0xf]
    %v84 = vld [vmem:[%s4 + $0x4] sm:$0xf]
    %v85 = vld [vmem:[%s4 + $0x8] sm:$0xf]
    %v86 = vld [vmem:[%s4 + $0xc] sm:$0xf]
    %v87 = vld [vmem:[%s4 + $0x10] sm:$0xf]
    %v88 = vld [vmem:[%s4 + $0x14] sm:$0xf]
    %v89 = vld [vmem:[%s5] sm:$0x1]
    %v91 = vlaneseq
    %v92 = vshrl.u32 %v91, 7
    %v93 = vsub.s32 0, %v92
    %v94 = vrot.slane %v89, %v93
    %v102 = vunpack.c.l.b16 %v83
    %v103 = vunpack.c.l.b16 %v84
    %v104 = vunpack.c.l.b16 %v85
    %v105 = vunpack.c.l.b16 %v86
    %v106 = vunpack.c.l.b16 %v87
    %v107 = vunpack.c.l.b16 %v88
    %v108 = vpack.c.b16 %v103, %v102
    %v109 = vpack.c.b16 %v105, %v104
    %v110 = vpack.c.b16 %v107, %v106
    %vm114 = vcmask 392192
    %v116 = vsel %vm114, %v81, 0
    %v119 = vsel %vm114, %v82, 0
    %121 = vmatprep.subr.bf16.mxu0 0
    %122 = vmatpush1.bf16.msra.mxu0 %v108
    %123 = vmatprep.subr.bf16.mxu0 0
    %124 = vmatpush1.bf16.msra.mxu0 %v109
    %125 = vmatprep.subr.bf16.mxu0 0
    %126 = vmatpush1.bf16.msra.mxu0 %v110
    %127 = vmatprep.subr.bf16.mxu0 0
    %128 = vmatpush1.bf16.msra.mxu0 0
    %129 = vmatprep.subr.bf16.mxu0 0
    %130 = vmatpush1.bf16.msra.mxu0 0
    %131 = vmatprep.subr.bf16.mxu0 0
    %132 = vmatpush1.bf16.msra.mxu0 0
    %133 = vmatprep.subr.bf16.mxu0 0
    %134 = vmatpush1.bf16.msra.mxu0 0
    %135 = vmatprep.subr.bf16.mxu0 0
    %136 = vmatpush1.bf16.msra.mxu0 0
    %137 = vmatprep.subr.bf16.mxu0 0
    %138 = vmatpush1.bf16.msra.mxu0 0
    %139 = vmatprep.subr.bf16.mxu0 0
    %140 = vmatpush1.bf16.msra.mxu0 0
    %141 = vmatprep.subr.bf16.mxu0 0
    %142 = vmatpush1.bf16.msra.mxu0 0
    %143 = vmatprep.subr.bf16.mxu0 0
    %144 = vmatpush1.bf16.msra.mxu0 0
    %145 = vmatprep.subr.bf16.mxu0 0
    %146 = vmatpush1.bf16.msra.mxu0 0
    %147 = vmatprep.subr.bf16.mxu0 0
    %148 = vmatpush1.bf16.msra.mxu0 0
    %149 = vmatprep.subr.bf16.mxu0 0
    %150 = vmatpush1.bf16.msra.mxu0 0
    %151 = vmatprep.subr.bf16.mxu0 0
    %152 = vmatpush1.bf16.msra.mxu0 0
    %153 = vmatprep.mubr.bf16.mxu0 0
    %154 = vmatmul.mubr.bf16.gmra.mrb[0].mxu0 %v116
    %v155 = vpop.f32.mrb[0].mxu0
    %v156 = vadd.f32 %v94, %v155
    %v157 = vpop.f32.mrb[0].mxu0
    %v158 = vpop.f32.mrb[0].mxu0
    %v159 = vadd.f32 %v94, %v158
    %v160 = vpop.f32.mrb[0].mxu0
    %161 = vmatprep.mubr.bf16.mxu0 0
    %162 = vmatmul.mubr.bf16.gmra.mrb[0].mxu0 %v119
    %v163 = vpop.f32.mrb[0].mxu0
    %v164 = vadd.f32 %v94, %v163
    %v165 = vpop.f32.mrb[0].mxu0
    %v166 = vpop.f32.mrb[0].mxu0
    %v167 = vadd.f32 %v94, %v166
    %v168 = vpop.f32.mrb[0].mxu0
    %169 = vdwg.mxu0
    %v170 = vpack.c.bf16 %v159, %v156
    %v171 = vpack.c.bf16 %v167, %v164
    %v172 = vld [vmem:[%s6] sm:$0xf]
    %v173 = vld [vmem:[%s6 + $0x4] sm:$0xf]
    %v174 = vld [vmem:[%s6 + $0x8] sm:$0xf]
    %v175 = vld [vmem:[%s6 + $0xc] sm:$0xf]
    %v176 = vld [vmem:[%s6 + $0x10] sm:$0xf]
    %v177 = vld [vmem:[%s6 + $0x14] sm:$0xf]
    %v178 = vld [vmem:[%s6 + $0x18] sm:$0xf]
    %v179 = vld [vmem:[%s6 + $0x1c] sm:$0xf]
    %v180 = vld [vmem:[%s6 + $0x20] sm:$0xf]
    %v181 = vld [vmem:[%s6 + $0x24] sm:$0xf]
    %v182 = vld [vmem:[%s6 + $0x28] sm:$0xf]
    %v183 = vld [vmem:[%s6 + $0x2c] sm:$0xf]
    %v184 = vld [vmem:[%s6 + $0x30] sm:$0xf]
    %v185 = vld [vmem:[%s6 + $0x34] sm:$0xf]
    %v186 = vld [vmem:[%s6 + $0x38] sm:$0xf]
    %v187 = vld [vmem:[%s6 + $0x3c] sm:$0xf]
    %v188 = vld [vmem:[%s7] sm:$0x1]
    %v190 = vlaneseq
    %v191 = vshrl.u32 %v190, 7
    %v192 = vsub.s32 0, %v191
    %v193 = vrot.slane %v188, %v192
    %v211 = vunpack.c.l.b16 %v172
    %v212 = vunpack.c.l.b16 %v173
    %v213 = vunpack.c.l.b16 %v174
    %v214 = vunpack.c.l.b16 %v175
    %v215 = vunpack.c.l.b16 %v176
    %v216 = vunpack.c.l.b16 %v177
    %v217 = vunpack.c.l.b16 %v178
    %v218 = vunpack.c.l.b16 %v179
    %v219 = vunpack.c.l.b16 %v180
    %v220 = vunpack.c.l.b16 %v181
    %v221 = vunpack.c.l.b16 %v182
    %v222 = vunpack.c.l.b16 %v183
    %v223 = vunpack.c.l.b16 %v184
    %v224 = vunpack.c.l.b16 %v185
    %v225 = vunpack.c.l.b16 %v186
    %v226 = vunpack.c.l.b16 %v187
    %v227 = vpack.c.b16 %v212, %v211
    %v228 = vpack.c.b16 %v214, %v213
    %v229 = vpack.c.b16 %v216, %v215
    %v230 = vpack.c.b16 %v218, %v217
    %v231 = vpack.c.b16 %v220, %v219
    %v232 = vpack.c.b16 %v222, %v221
    %v233 = vpack.c.b16 %v224, %v223
    %v234 = vpack.c.b16 %v226, %v225
    %243 = vmatprep.subr.bf16.mxu0 0
    %244 = vmatpush1.bf16.msra.mxu0 %v227
    %245 = vmatprep.subr.bf16.mxu0 0
    %246 = vmatpush1.bf16.msra.mxu0 %v228
    %247 = vmatprep.subr.bf16.mxu0 0
    %248 = vmatpush1.bf16.msra.mxu0 %v229
    %249 = vmatprep.subr.bf16.mxu0 0
    %250 = vmatpush1.bf16.msra.mxu0 %v230
    %251 = vmatprep.subr.bf16.mxu0 0
    %252 = vmatpush1.bf16.msra.mxu0 %v231
    %253 = vmatprep.subr.bf16.mxu0 0
    %254 = vmatpush1.bf16.msra.mxu0 %v232
    %255 = vmatprep.subr.bf16.mxu0 0
    %256 = vmatpush1.bf16.msra.mxu0 %v233
    %257 = vmatprep.subr.bf16.mxu0 0
    %258 = vmatpush1.bf16.msra.mxu0 %v234
    %259 = vmatprep.subr.bf16.mxu0 0
    %260 = vmatpush1.bf16.msra.mxu0 0
    %261 = vmatprep.subr.bf16.mxu0 0
    %262 = vmatpush1.bf16.msra.mxu0 0
    %263 = vmatprep.subr.bf16.mxu0 0
    %264 = vmatpush1.bf16.msra.mxu0 0
    %265 = vmatprep.subr.bf16.mxu0 0
    %266 = vmatpush1.bf16.msra.mxu0 0
    %267 = vmatprep.subr.bf16.mxu0 0
    %268 = vmatpush1.bf16.msra.mxu0 0
    %269 = vmatprep.subr.bf16.mxu0 0
    %270 = vmatpush1.bf16.msra.mxu0 0
    %271 = vmatprep.subr.bf16.mxu0 0
    %272 = vmatpush1.bf16.msra.mxu0 0
    %273 = vmatprep.subr.bf16.mxu0 0
    %274 = vmatpush1.bf16.msra.mxu0 0
    %275 = vmatprep.mubr.bf16.mxu0 0
    %276 = vmatmul.mubr.bf16.gmra.mrb[0].mxu0 %v170
    %v277 = vpop.f32.mrb[0].mxu0
    %v278 = vadd.f32 %v193, %v277
    %v279 = vpop.f32.mrb[0].mxu0
    %v280 = vpop.f32.mrb[0].mxu0
    %v281 = vadd.f32 %v193, %v280
    %v282 = vpop.f32.mrb[0].mxu0
    %283 = vmatprep.mubr.bf16.mxu0 0
    %284 = vmatmul.mubr.bf16.gmra.mrb[0].mxu0 %v171
    %v285 = vpop.f32.mrb[0].mxu0
    %v286 = vadd.f32 %v193, %v285
    %v287 = vpop.f32.mrb[0].mxu0
    %v288 = vpop.f32.mrb[0].mxu0
    %v289 = vadd.f32 %v193, %v288
    %v290 = vpop.f32.mrb[0].mxu0
    %291 = vdwg.mxu0
    %v292 = vadd.f32 %v156, %v159
    %v293 = vrot.slane %v292, 4
    %v294 = vadd.f32 %v292, %v293
    %v295 = vrot.slane %v294, 2
    %v296 = vadd.f32 %v294, %v295
    %v297 = vrot.slane %v296, 1
    %v298 = vadd.f32 %v296, %v297
    %v299 = vadd.f32 %v164, %v167
    %v300 = vrot.slane %v299, 4
    %v301 = vadd.f32 %v299, %v300
    %v302 = vrot.slane %v301, 2
    %v303 = vadd.f32 %v301, %v302
    %v304 = vrot.slane %v303, 1
    %v305 = vadd.f32 %v303, %v304
    %v306 = vrcp.pop 16.0
    %v307 = vmul.f32 %v298, %v306
    %v308 = vmul.f32 %v305, %v306
    %v309 = vpack.c.bf16 %v307, %v307
    %v310 = vpack.c.bf16 %v308, %v308
    %v311 = vld [vmem:[%s12] sm:$0xf]
    %v312 = vld [vmem:[%s12 + $0x4] sm:$0xf]
    %v313 = vld [vmem:[%s12 + $0x8] sm:$0xf]
    %v314 = vld [vmem:[%s12 + $0xc] sm:$0xf]
    %v315 = vld [vmem:[%s12 + $0x10] sm:$0xf]
    %v316 = vld [vmem:[%s12 + $0x14] sm:$0xf]
    %v317 = vld [vmem:[%s12 + $0x18] sm:$0xf]
    %v318 = vld [vmem:[%s12 + $0x1c] sm:$0xf]
    %v319 = vld [vmem:[%s12 + $0x20] sm:$0xf]
    %v320 = vld [vmem:[%s12 + $0x24] sm:$0xf]
    %v321 = vld [vmem:[%s12 + $0x28] sm:$0xf]
    %v322 = vld [vmem:[%s12 + $0x2c] sm:$0xf]
    %v323 = vld [vmem:[%s12 + $0x30] sm:$0xf]
    %v324 = vld [vmem:[%s12 + $0x34] sm:$0xf]
    %v325 = vld [vmem:[%s12 + $0x38] sm:$0xf]
    %v326 = vld [vmem:[%s12 + $0x3c] sm:$0xf]
    %v327 = vld [vmem:[%s13] sm:$0x1]
    %v329 = vlaneseq
    %v330 = vshrl.u32 %v329, 7
    %v331 = vsub.s32 0, %v330
    %v332 = vrot.slane %v327, %v331
    %v336 = vunpack.c.l.b16 %v309
    %v337 = vunpack.c.l.b16 %v310
    %vm338 = vcmask 1041409
    %v339 = vsel %vm338, %v337, %v336
    %v340 = vpack.c.b16 %v339, %v339
    %v358 = vunpack.c.l.b16 %v311
    %v359 = vunpack.c.l.b16 %v312
    %v360 = vunpack.c.l.b16 %v313
    %v361 = vunpack.c.l.b16 %v314
    %v362 = vunpack.c.l.b16 %v315
    %v363 = vunpack.c.l.b16 %v316
    %v364 = vunpack.c.l.b16 %v317
    %v365 = vunpack.c.l.b16 %v318
    %v366 = vunpack.c.l.b16 %v319
    %v367 = vunpack.c.l.b16 %v320
    %v368 = vunpack.c.l.b16 %v321
    %v369 = vunpack.c.l.b16 %v322
    %v370 = vunpack.c.l.b16 %v323
    %v371 = vunpack.c.l.b16 %v324
    %v372 = vunpack.c.l.b16 %v325
    %v373 = vunpack.c.l.b16 %v326
    %v374 = vpack.c.b16 %v359, %v358
    %v375 = vpack.c.b16 %v361, %v360
    %v376 = vpack.c.b16 %v363, %v362
    %v377 = vpack.c.b16 %v365, %v364
    %v378 = vpack.c.b16 %v367, %v366
    %v379 = vpack.c.b16 %v369, %v368
    %v380 = vpack.c.b16 %v371, %v370
    %v381 = vpack.c.b16 %v373, %v372
    %390 = vmatprep.subr.bf16.mxu0 0
    %391 = vmatpush1.bf16.msra.mxu0 %v374
    %392 = vmatprep.subr.bf16.mxu0 0
    %393 = vmatpush1.bf16.msra.mxu0 %v375
    %394 = vmatprep.subr.bf16.mxu0 0
    %395 = vmatpush1.bf16.msra.mxu0 %v376
    %396 = vmatprep.subr.bf16.mxu0 0
    %397 = vmatpush1.bf16.msra.mxu0 %v377
    %398 = vmatprep.subr.bf16.mxu0 0
    %399 = vmatpush1.bf16.msra.mxu0 %v378
    %400 = vmatprep.subr.bf16.mxu0 0
    %401 = vmatpush1.bf16.msra.mxu0 %v379
    %402 = vmatprep.subr.bf16.mxu0 0
    %403 = vmatpush1.bf16.msra.mxu0 %v380
    %404 = vmatprep.subr.bf16.mxu0 0
    %405 = vmatpush1.bf16.msra.mxu0 %v381
    %406 = vmatprep.subr.bf16.mxu0 0
    %407 = vmatpush1.bf16.msra.mxu0 0
    %408 = vmatprep.subr.bf16.mxu0 0
    %409 = vmatpush1.bf16.msra.mxu0 0
    %410 = vmatprep.subr.bf16.mxu0 0
    %411 = vmatpush1.bf16.msra.mxu0 0
    %412 = vmatprep.subr.bf16.mxu0 0
    %413 = vmatpush1.bf16.msra.mxu0 0
    %414 = vmatprep.subr.bf16.mxu0 0
    %415 = vmatpush1.bf16.msra.mxu0 0
    %416 = vmatprep.subr.bf16.mxu0 0
    %417 = vmatpush1.bf16.msra.mxu0 0
    %418 = vmatprep.subr.bf16.mxu0 0
    %419 = vmatpush1.bf16.msra.mxu0 0
    %420 = vmatprep.subr.bf16.mxu0 0
    %421 = vmatpush1.bf16.msra.mxu0 0
    %422 = vmatprep.mubr.bf16.mxu0 0
    %423 = vmatmul.mubr.bf16.gmra.mrb[0].mxu0 %v340
    %v424 = vpop.f32.mrb[0].mxu0
    %v425 = vadd.f32 %v332, %v424
    %v426 = vpop.f32.mrb[0].mxu0
    %v427 = vpop.f32.mrb[0].mxu0
    %v428 = vpop.f32.mrb[0].mxu0
    %429 = vdwg.mxu0
    %v430 = vld [vmem:[%s8] sm:$0xff]
    %v431 = vld [vmem:[%s8 + $0x8] sm:$0xff]
    %v432 = vld [vmem:[%s8 + $0x10] sm:$0xff]
    %v433 = vld [vmem:[%s8 + $0x18] sm:$0xff]
    %v434 = vld [vmem:[%s8 + $0x20] sm:$0xff]
    %v435 = vld [vmem:[%s8 + $0x28] sm:$0xff]
    %v436 = vld [vmem:[%s8 + $0x30] sm:$0xff]
    %v437 = vld [vmem:[%s8 + $0x38] sm:$0xff]
    %v438 = vld [vmem:[%s9] sm:$0x3]
    %v439 = vld [vmem:[%s10] sm:$0x1]
    %v440 = vld [vmem:[#allocation2] sm:$0x1]
    %v441 = vld [vmem:[%s16] sm:$0xf]
    %v442 = vld [vmem:[%s16 + $0x4] sm:$0xf]
    %v443 = vld [vmem:[%s16 + $0x8] sm:$0xf]
    %v444 = vld [vmem:[%s16 + $0xc] sm:$0xf]
    %v445 = vld [vmem:[%s16 + $0x10] sm:$0xf]
    %v446 = vld [vmem:[%s16 + $0x14] sm:$0xf]
    %v447 = vld [vmem:[%s16 + $0x18] sm:$0xf]
    %v448 = vld [vmem:[%s16 + $0x1c] sm:$0xf]
    %v449 = vld [vmem:[%s17] sm:$0x1]
    %v450 = vld [vmem:[%s15] sm:$0x3]
    %v451 = vld [vmem:[%s2] sm:$0x3]
    %v452 = vpack.c.bf16 %v425, %v425
    %v454 = vlaneseq
    %v455 = vshrl.u32 %v454, 7
    %v456 = vsub.s32 0, %v455
    %v457 = vrot.slane %v438, %v456
    %v458 = vlaneseq
    %v459 = vshrl.u32 %v458, 7
    %v460 = vsub.s32 1, %v459
    %v461 = vrot.slane %v438, %v460
    %v472 = vunpack.c.l.b16 %v430
    %v473 = vunpack.c.h.b16 %v430
    %v474 = vunpack.c.l.b16 %v431
    %v475 = vunpack.c.h.b16 %v431
    %v476 = vunpack.c.l.b16 %v432
    %v477 = vunpack.c.h.b16 %v432
    %v478 = vunpack.c.l.b16 %v433
    %v479 = vunpack.c.h.b16 %v433
    %v480 = vunpack.c.l.b16 %v434
    %v481 = vunpack.c.h.b16 %v434
    %v482 = vunpack.c.l.b16 %v435
    %v483 = vunpack.c.h.b16 %v435
    %v484 = vunpack.c.l.b16 %v436
    %v485 = vunpack.c.h.b16 %v436
    %v486 = vunpack.c.l.b16 %v437
    %v487 = vunpack.c.h.b16 %v437
    %v488 = vpack.c.b16 %v474, %v472
    %v489 = vpack.c.b16 %v475, %v473
    %v490 = vpack.c.b16 %v478, %v476
    %v491 = vpack.c.b16 %v479, %v477
    %v492 = vpack.c.b16 %v482, %v480
    %v493 = vpack.c.b16 %v483, %v481
    %v494 = vpack.c.b16 %v486, %v484
    %v495 = vpack.c.b16 %v487, %v485
    %vm504 = vcmask 523264
    %v506 = vsel %vm504, %v452, 0
    %508 = vmatprep.subr.bf16.mxu0 %v489
    %509 = vmatpush1.bf16.msra.mxu0 %v488
    %510 = vmatprep.subr.bf16.mxu0 %v491
    %511 = vmatpush1.bf16.msra.mxu0 %v490
    %512 = vmatprep.subr.bf16.mxu0 %v493
    %513 = vmatpush1.bf16.msra.mxu0 %v492
    %514 = vmatprep.subr.bf16.mxu0 %v495
    %515 = vmatpush1.bf16.msra.mxu0 %v494
    %516 = vmatprep.subr.bf16.mxu0 0
    %517 = vmatpush1.bf16.msra.mxu0 0
    %518 = vmatprep.subr.bf16.mxu0 0
    %519 = vmatpush1.bf16.msra.mxu0 0
    %520 = vmatprep.subr.bf16.mxu0 0
    %521 = vmatpush1.bf16.msra.mxu0 0
    %522 = vmatprep.subr.bf16.mxu0 0
    %523 = vmatpush1.bf16.msra.mxu0 0
    %524 = vmatprep.subr.bf16.mxu0 0
    %525 = vmatpush1.bf16.msra.mxu0 0
    %526 = vmatprep.subr.bf16.mxu0 0
    %527 = vmatpush1.bf16.msra.mxu0 0
    %528 = vmatprep.subr.bf16.mxu0 0
    %529 = vmatpush1.bf16.msra.mxu0 0
    %530 = vmatprep.subr.bf16.mxu0 0
    %531 = vmatpush1.bf16.msra.mxu0 0
    %532 = vmatprep.subr.bf16.mxu0 0
    %533 = vmatpush1.bf16.msra.mxu0 0
    %534 = vmatprep.subr.bf16.mxu0 0
    %535 = vmatpush1.bf16.msra.mxu0 0
    %536 = vmatprep.subr.bf16.mxu0 0
    %537 = vmatpush1.bf16.msra.mxu0 0
    %538 = vmatprep.subr.bf16.mxu0 0
    %539 = vmatpush1.bf16.msra.mxu0 0
    %540 = vmatprep.mubr.bf16.mxu0 0
    %541 = vmatmul.mubr.bf16.gmra.mrb[0].mxu0 %v506
    %v542 = vpop.f32.mrb[0].mxu0
    %v543 = vadd.f32 %v457, %v542
    %v544 = vpop.f32.mrb[0].mxu0
    %v545 = vadd.f32 %v461, %v544
    %v546 = vpop.f32.mrb[0].mxu0
    %v547 = vpop.f32.mrb[0].mxu0
    %548 = vdwg.mxu0
    %v549 = vxor.u32 %v543, 2147483648
    %v550 = vxor.u32 %v545, 2147483648
    %v551 = vmul.f32 %v549, 1.442695
    %v552 = vpow.pop %v551
    %v553 = vmul.f32 %v550, 1.442695
    %v554 = vpow.pop %v553
    %v555 = vadd.f32 %v552, 1.0
    %v556 = vadd.f32 %v554, 1.0
    %v557 = vrcp.pop %v555
    %v558 = vmul.f32 1.0, %v557
    %v559 = vrcp.pop %v556
    %v560 = vmul.f32 1.0, %v559
    %v563 = vunpack.c.l.s4 1966171168
    %v564 = vunpack.c.0.s8 %v563
    %v565 = vlaneseq
    %v566 = vshrl.u32 %v565, 7
    %v567 = vsub.s32 %v564, %v566
    %v568 = vrot.slane %v543, %v567
    %v569 = vcombine.high %v568, %v568
    %v571 = vunpack.c.l.s4 1966171168
    %v572 = vunpack.c.0.s8 %v571
    %v573 = vlaneseq
    %v574 = vshrl.u32 %v573, 7
    %v575 = vsub.s32 %v572, %v574
    %v576 = vrot.slane %v568, %v575
    %v578 = vunpack.c.l.s4 1966171168
    %v579 = vunpack.c.0.s8 %v578
    %v580 = vlaneseq
    %v581 = vshrl.u32 %v580, 7
    %v582 = vsub.s32 %v579, %v581
    %v583 = vrot.slane %v569, %v582
    %v584 = vlaneseq
    %v585 = vshrl.u32 %v584, 7
    %v586 = vsub.s32 0, %v585
    %v587 = vrot.slane %v576, %v586
    %v588 = vlaneseq
    %v589 = vshrl.u32 %v588, 7
    %v590 = vsub.s32 0, %v589
    %v591 = vrot.slane %v583, %v590
    %v594 = vadd.f32 %v278, %v587
    %v595 = vadd.f32 %v281, %v587
    %v596 = vadd.f32 %v286, %v591
    %v597 = vadd.f32 %v289, %v591
    %v598 = vmax.f32 %v594, 0.0
    %v599 = vmax.f32 %v595, 0.0
    %v600 = vmax.f32 %v596, 0.0
    %v601 = vmax.f32 %v597, 0.0
    %v603 = vlaneseq
    %v604 = vshrl.u32 %v603, 7
    %v605 = vsub.s32 0, %v604
    %v606 = vrot.slane %v439, %v605
    %v608 = vmul.f32 %v598, %v606
    %v609 = vmul.f32 %v599, %v606
    %v610 = vmul.f32 %v600, %v606
    %v611 = vmul.f32 %v601, %v606
    %v612 = vsel %vm504, %v608, 0.0
    %613 = vadd.xlane.f32.xlu0 %v612
    %v614 = vpop.xlane.xlu0 %613
    %v615 = vsel %vm504, %v609, 0.0
    %616 = vadd.xlane.f32.xlu0 %v615
    %v617 = vpop.xlane.xlu0 %616
    %v618 = vsel %vm504, %v610, 0.0
    %619 = vadd.xlane.f32.xlu0 %v618
    %v620 = vpop.xlane.xlu0 %619
    %v621 = vsel %vm504, %v611, 0.0
    %622 = vadd.xlane.f32.xlu0 %v621
    %v623 = vpop.xlane.xlu0 %622
    %v625 = vlaneseq
    %v626 = vshrl.u32 %v625, 7
    %v627 = vsub.s32 0, %v626
    %v628 = vrot.slane %v440, %v627
    %629 = vset.pattern.permute.xlu0 0
    %630 = vperm.xlu0 %629, %v628
    %v631 = vpop.permute.xlu0 %630
    %v633 = vadd.f32 %v614, %v631
    %v634 = vadd.f32 %v617, %v631
    %v635 = vadd.f32 %v620, %v631
    %v636 = vadd.f32 %v623, %v631
    %v641 = vlaneseq
    %v642 = vand.u32 %v641, 127
    %v643 = vlaneseq
    %v644 = vshrl.u32 %v643, 7
    %v645 = vsub.s32 %v642, %v644
    %v646 = vrot.slane %v633, %v645
    %v647 = vadd.s32 %v642, 4294967288
    %v648 = vlaneseq
    %v649 = vshrl.u32 %v648, 7
    %v650 = vsub.s32 %v647, %v649
    %v651 = vrot.slane %v634, %v650
    %vm652 = vcmask 130112
    %v653 = vsel %vm652, %v651, %v646
    %v654 = vlaneseq
    %v655 = vshrl.u32 %v654, 7
    %v656 = vsub.s32 %v642, %v655
    %v657 = vrot.slane %v635, %v656
    %v658 = vlaneseq
    %v659 = vshrl.u32 %v658, 7
    %v660 = vsub.s32 %v647, %v659
    %v661 = vrot.slane %v636, %v660
    %v662 = vsel %vm652, %v661, %v657
    %v663 = vsel %vm338, %v662, %v653
    %vm665 = vcmask 123904
    %v666 = vsel %vm665, %v663, -inf
    %667 = vmax.xlane.f32.xlu0 %v666
    %v668 = vpop.xlane.xlu0 %667
    %v670 = vlaneseq
    %v671 = vshrl.u32 %v670, 7
    %v672 = vsub.s32 0, %v671
    %v673 = vrot.slane %v668, %v672
    %v674 = vlaneseq
    %v675 = vshrl.u32 %v674, 7
    %v676 = vsub.s32 1, %v675
    %v677 = vrot.slane %v668, %v676
    %v680 = vsub.f32 %v633, %v673
    %v681 = vsub.f32 %v634, %v673
    %v682 = vsub.f32 %v635, %v677
    %v683 = vsub.f32 %v636, %v677
    %v684 = vmul.f32 %v680, 1.442695
    %v685 = vpow.pop %v684
    %v686 = vmul.f32 %v681, 1.442695
    %v687 = vpow.pop %v686
    %v688 = vmul.f32 %v682, 1.442695
    %v689 = vpow.pop %v688
    %v690 = vmul.f32 %v683, 1.442695
    %v691 = vpow.pop %v690
    %696 = vset.pattern.permute.xlu0 0
    %697 = vperm.xlu0 %696, %v685
    %v698 = vpop.permute.xlu0 %697
    %699 = vset.pattern.permute.xlu0 0
    %700 = vperm.xlu0 %699, %v687
    %v701 = vpop.permute.xlu0 %700
    %702 = vset.pattern.permute.xlu0 0
    %703 = vperm.xlu0 %702, %v689
    %v704 = vpop.permute.xlu0 %703
    %705 = vset.pattern.permute.xlu0 0
    %706 = vperm.xlu0 %705, %v691
    %v707 = vpop.permute.xlu0 %706
    %v708 = vlaneseq
    %v709 = vshrl.u32 %v708, 7
    %v710 = vsub.s32 %v642, %v709
    %v711 = vrot.slane %v698, %v710
    %v712 = vlaneseq
    %v713 = vshrl.u32 %v712, 7
    %v714 = vsub.s32 %v647, %v713
    %v715 = vrot.slane %v701, %v714
    %v716 = vsel %vm652, %v715, %v711
    %v717 = vlaneseq
    %v718 = vshrl.u32 %v717, 7
    %v719 = vsub.s32 %v642, %v718
    %v720 = vrot.slane %v704, %v719
    %v721 = vlaneseq
    %v722 = vshrl.u32 %v721, 7
    %v723 = vsub.s32 %v647, %v722
    %v724 = vrot.slane %v707, %v723
    %v725 = vsel %vm652, %v724, %v720
    %v726 = vsel %vm338, %v725, %v716
    %v728 = vsel %vm665, %v726, 0.0
    %729 = vadd.xlane.f32.xlu0 %v728
    %v730 = vpop.xlane.xlu0 %729
    %v731 = vrcp.pop %v730
    %v733 = vlaneseq
    %v734 = vshrl.u32 %v733, 7
    %v735 = vsub.s32 0, %v734
    %v736 = vrot.slane %v731, %v735
    %v737 = vlaneseq
    %v738 = vshrl.u32 %v737, 7
    %v739 = vsub.s32 1, %v738
    %v740 = vrot.slane %v731, %v739
    %v743 = vmul.f32 %v685, %v736
    %v744 = vmul.f32 %v687, %v736
    %v745 = vmul.f32 %v689, %v740
    %v746 = vmul.f32 %v691, %v740
    %749 = vset.pattern.permute.xlu0 0
    %750 = vperm.xlu0 %749, %v743
    %v751 = vpop.permute.xlu0 %750
    %752 = vset.pattern.permute.xlu0 0
    %753 = vperm.xlu0 %752, %v744
    %v754 = vpop.permute.xlu0 %753
    %v755 = vlaneseq
    %v756 = vshrl.u32 %v755, 7
    %v757 = vsub.s32 %v642, %v756
    %v758 = vrot.slane %v751, %v757
    %v759 = vlaneseq
    %v760 = vshrl.u32 %v759, 7
    %v761 = vsub.s32 %v647, %v760
    %v762 = vrot.slane %v754, %v761
    %v763 = vsel %vm652, %v762, %v758
    %vm764 = vcmask 130048
    %v765 = vsel %vm764, %v763, 0
    %767 = vmatprep.subr.mxu0 0.0
    %768 = vmatpush1.msra.mxu0 %v156
    %769 = vmatprep.subr.mxu0 0.0
    %770 = vmatpush1.msra.mxu0 %v159
    %771 = vmatprep.subr.mxu0 0.0
    %772 = vmatpush1.msra.mxu0 0.0
    %773 = vmatprep.subr.mxu0 0.0
    %774 = vmatpush1.msra.mxu0 0.0
    %775 = vmatprep.subr.mxu0 0.0
    %776 = vmatpush1.msra.mxu0 0.0
    %777 = vmatprep.subr.mxu0 0.0
    %778 = vmatpush1.msra.mxu0 0.0
    %779 = vmatprep.subr.mxu0 0.0
    %780 = vmatpush1.msra.mxu0 0.0
    %781 = vmatprep.subr.mxu0 0.0
    %782 = vmatpush1.msra.mxu0 0.0
    %783 = vmatprep.subr.mxu0 0.0
    %784 = vmatpush1.msra.mxu0 0.0
    %785 = vmatprep.subr.mxu0 0.0
    %786 = vmatpush1.msra.mxu0 0.0
    %787 = vmatprep.subr.mxu0 0.0
    %788 = vmatpush1.msra.mxu0 0.0
    %789 = vmatprep.subr.mxu0 0.0
    %790 = vmatpush1.msra.mxu0 0.0
    %791 = vmatprep.subr.mxu0 0.0
    %792 = vmatpush1.msra.mxu0 0.0
    %793 = vmatprep.subr.mxu0 0.0
    %794 = vmatpush1.msra.mxu0 0.0
    %795 = vmatprep.subr.mxu0 0.0
    %796 = vmatpush1.msra.mxu0 0.0
    %797 = vmatprep.subr.mxu0 0.0
    %798 = vmatpush1.msra.mxu0 0.0
    %799 = vmatprep.subr.mxu0 0.0
    %800 = vmatpush1.msra.mxu0 0.0
    %801 = vmatprep.subr.mxu0 0.0
    %802 = vmatpush1.msra.mxu0 0.0
    %803 = vmatprep.subr.mxu0 0.0
    %804 = vmatpush1.msra.mxu0 0.0
    %805 = vmatprep.subr.mxu0 0.0
    %806 = vmatpush1.msra.mxu0 0.0
    %807 = vmatprep.subr.mxu0 0.0
    %808 = vmatpush1.msra.mxu0 0.0
    %809 = vmatprep.subr.mxu0 0.0
    %810 = vmatpush1.msra.mxu0 0.0
    %811 = vmatprep.subr.mxu0 0.0
    %812 = vmatpush1.msra.mxu0 0.0
    %813 = vmatprep.subr.mxu0 0.0
    %814 = vmatpush1.msra.mxu0 0.0
    %815 = vmatprep.subr.mxu0 0.0
    %816 = vmatpush1.msra.mxu0 0.0
    %817 = vmatprep.subr.mxu0 0.0
    %818 = vmatpush1.msra.mxu0 0.0
    %819 = vmatprep.subr.mxu0 0.0
    %820 = vmatpush1.msra.mxu0 0.0
    %821 = vmatprep.subr.mxu0 0.0
    %822 = vmatpush1.msra.mxu0 0.0
    %823 = vmatprep.subr.mxu0 0.0
    %824 = vmatpush1.msra.mxu0 0.0
    %825 = vmatprep.subr.mxu0 0.0
    %826 = vmatpush1.msra.mxu0 0.0
    %827 = vmatprep.subr.mxu0 0.0
    %828 = vmatpush1.msra.mxu0 0.0
    %829 = vmatprep.subr.mxu0 0.0
    %830 = vmatpush1.msra.mxu0 0.0
    %831 = vmatprep.mubr.f32.mxu0 0.0
    %832 = vmatmul.mubr.f32.gmra.mrb[0].mxu0 %v765
    %v833 = vpop.f32.mrb[0].mxu0
    %v834 = vadd.f32 0.0, %v833
    %v835 = vpop.f32.mrb[0].mxu0
    %836 = vdwg.mxu0
    %839 = vset.pattern.permute.xlu0 0
    %840 = vperm.xlu0 %839, %v745
    %v841 = vpop.permute.xlu0 %840
    %842 = vset.pattern.permute.xlu0 0
    %843 = vperm.xlu0 %842, %v746
    %v844 = vpop.permute.xlu0 %843
    %v845 = vlaneseq
    %v846 = vshrl.u32 %v845, 7
    %v847 = vsub.s32 %v642, %v846
    %v848 = vrot.slane %v841, %v847
    %v849 = vlaneseq
    %v850 = vshrl.u32 %v849, 7
    %v851 = vsub.s32 %v647, %v850
    %v852 = vrot.slane %v844, %v851
    %v853 = vsel %vm652, %v852, %v848
    %v854 = vsel %vm764, %v853, 0
    %856 = vmatprep.subr.mxu0 0.0
    %857 = vmatpush1.msra.mxu0 %v164
    %858 = vmatprep.subr.mxu0 0.0
    %859 = vmatpush1.msra.mxu0 %v167
    %860 = vmatprep.subr.mxu0 0.0
    %861 = vmatpush1.msra.mxu0 0.0
    %862 = vmatprep.subr.mxu0 0.0
    %863 = vmatpush1.msra.mxu0 0.0
    %864 = vmatprep.subr.mxu0 0.0
    %865 = vmatpush1.msra.mxu0 0.0
    %866 = vmatprep.subr.mxu0 0.0
    %867 = vmatpush1.msra.mxu0 0.0
    %868 = vmatprep.subr.mxu0 0.0
    %869 = vmatpush1.msra.mxu0 0.0
    %870 = vmatprep.subr.mxu0 0.0
    %871 = vmatpush1.msra.mxu0 0.0
    %872 = vmatprep.subr.mxu0 0.0
    %873 = vmatpush1.msra.mxu0 0.0
    %874 = vmatprep.subr.mxu0 0.0
    %875 = vmatpush1.msra.mxu0 0.0
    %876 = vmatprep.subr.mxu0 0.0
    %877 = vmatpush1.msra.mxu0 0.0
    %878 = vmatprep.subr.mxu0 0.0
    %879 = vmatpush1.msra.mxu0 0.0
    %880 = vmatprep.subr.mxu0 0.0
    %881 = vmatpush1.msra.mxu0 0.0
    %882 = vmatprep.subr.mxu0 0.0
    %883 = vmatpush1.msra.mxu0 0.0
    %884 = vmatprep.subr.mxu0 0.0
    %885 = vmatpush1.msra.mxu0 0.0
    %886 = vmatprep.subr.mxu0 0.0
    %887 = vmatpush1.msra.mxu0 0.0
    %888 = vmatprep.subr.mxu0 0.0
    %889 = vmatpush1.msra.mxu0 0.0
    %890 = vmatprep.subr.mxu0 0.0
    %891 = vmatpush1.msra.mxu0 0.0
    %892 = vmatprep.subr.mxu0 0.0
    %893 = vmatpush1.msra.mxu0 0.0
    %894 = vmatprep.subr.mxu0 0.0
    %895 = vmatpush1.msra.mxu0 0.0
    %896 = vmatprep.subr.mxu0 0.0
    %897 = vmatpush1.msra.mxu0 0.0
    %898 = vmatprep.subr.mxu0 0.0
    %899 = vmatpush1.msra.mxu0 0.0
    %900 = vmatprep.subr.mxu0 0.0
    %901 = vmatpush1.msra.mxu0 0.0
    %902 = vmatprep.subr.mxu0 0.0
    %903 = vmatpush1.msra.mxu0 0.0
    %904 = vmatprep.subr.mxu0 0.0
    %905 = vmatpush1.msra.mxu0 0.0
    %906 = vmatprep.subr.mxu0 0.0
    %907 = vmatpush1.msra.mxu0 0.0
    %908 = vmatprep.subr.mxu0 0.0
    %909 = vmatpush1.msra.mxu0 0.0
    %910 = vmatprep.subr.mxu0 0.0
    %911 = vmatpush1.msra.mxu0 0.0
    %912 = vmatprep.subr.mxu0 0.0
    %913 = vmatpush1.msra.mxu0 0.0
    %914 = vmatprep.subr.mxu0 0.0
    %915 = vmatpush1.msra.mxu0 0.0
    %916 = vmatprep.subr.mxu0 0.0
    %917 = vmatpush1.msra.mxu0 0.0
    %918 = vmatprep.subr.mxu0 0.0
    %919 = vmatpush1.msra.mxu0 0.0
    %920 = vmatprep.mubr.f32.mxu0 0.0
    %921 = vmatmul.mubr.f32.gmra.mrb[0].mxu0 %v854
    %v922 = vpop.f32.mrb[0].mxu0
    %v923 = vadd.f32 0.0, %v922
    %v924 = vpop.f32.mrb[0].mxu0
    %925 = vdwg.mxu0
    %v928 = vrot.slane %v923, 7
    %v929 = vsel %vm338, %v928, %v834
    %930 = vrot.lane.b32.xlu0 %v929, 64
    %v931 = vpop.permute.xlu0 %930
    %v933 = vmul.f32 %v558, %v931
    %v934 = vmul.f32 %v560, %v931
    %s935 = sld [smem:[#allocation3]]
    %s936 = scalar_lea.vmem %s3, %s935
    %v937 = vld [vmem:[%s936] sm:$0x1]
    %s938 = sld [smem:[#allocation3 + $0x80]]
    %s939 = scalar_lea.vmem %s3, %s938
    %v940 = vld [vmem:[%s939] sm:$0x1]
    %v942 = vrot.slane %v940, 7
    %vm944 = vcmask 1040384
    %v945 = vsel %vm944, %v937, %v942
    %947 = vrot.lane.b32.xlu0 %v425, 64
    %v948 = vpop.permute.xlu0 %947
    %v950 = vsel %vm504, %v945, %v933
    %v951 = vsel %vm504, %v934, %v948
    %v952 = vpack.c.bf16 %v950, %v950
    %v953 = vpack.c.bf16 %v951, %v951
    %v954 = vld [vmem:[%s14] sm:$0xff]
    %v955 = vld [vmem:[%s14 + $0x8] sm:$0xff]
    %v956 = vld [vmem:[%s14 + $0x10] sm:$0xff]
    %v957 = vld [vmem:[%s14 + $0x18] sm:$0xff]
    %v958 = vld [vmem:[%s14 + $0x20] sm:$0xff]
    %v959 = vld [vmem:[%s14 + $0x28] sm:$0xff]
    %v960 = vld [vmem:[%s14 + $0x30] sm:$0xff]
    %v961 = vld [vmem:[%s14 + $0x38] sm:$0xff]
    %v962 = vld [vmem:[%s14 + $0x40] sm:$0xff]
    %v963 = vld [vmem:[%s14 + $0x48] sm:$0xff]
    %v964 = vld [vmem:[%s14 + $0x50] sm:$0xff]
    %v965 = vld [vmem:[%s14 + $0x58] sm:$0xff]
    %v966 = vld [vmem:[%s14 + $0x60] sm:$0xff]
    %v967 = vld [vmem:[%s14 + $0x68] sm:$0xff]
    %v968 = vld [vmem:[%s14 + $0x70] sm:$0xff]
    %v969 = vld [vmem:[%s14 + $0x78] sm:$0xff]
    %v970 = vld [vmem:[%s14 + $0x80] sm:$0xff]
    %v971 = vld [vmem:[%s14 + $0x88] sm:$0xff]
    %v972 = vld [vmem:[%s14 + $0x90] sm:$0xff]
    %v973 = vld [vmem:[%s14 + $0x98] sm:$0xff]
    %v974 = vld [vmem:[%s14 + $0xa0] sm:$0xff]
    %v975 = vld [vmem:[%s14 + $0xa8] sm:$0xff]
    %v976 = vld [vmem:[%s14 + $0xb0] sm:$0xff]
    %v977 = vld [vmem:[%s14 + $0xb8] sm:$0xff]
    %v978 = vld [vmem:[%s14 + $0xc0] sm:$0xff]
    %v979 = vld [vmem:[%s14 + $0xc8] sm:$0xff]
    %v980 = vld [vmem:[%s14 + $0xd0] sm:$0xff]
    %v981 = vld [vmem:[%s14 + $0xd8] sm:$0xff]
    %v982 = vld [vmem:[%s14 + $0xe0] sm:$0xff]
    %v983 = vld [vmem:[%s14 + $0xe8] sm:$0xff]
    %v984 = vld [vmem:[%s14 + $0xf0] sm:$0xff]
    %v985 = vld [vmem:[%s14 + $0xf8] sm:$0xff]
    %v987 = vlaneseq
    %v988 = vshrl.u32 %v987, 7
    %v989 = vsub.s32 0, %v988
    %v990 = vrot.slane %v450, %v989
    %v991 = vlaneseq
    %v992 = vshrl.u32 %v991, 7
    %v993 = vsub.s32 1, %v992
    %v994 = vrot.slane %v450, %v993
    %v1029 = vunpack.c.l.b16 %v954
    %v1030 = vunpack.c.h.b16 %v954
    %v1031 = vunpack.c.l.b16 %v955
    %v1032 = vunpack.c.h.b16 %v955
    %v1033 = vunpack.c.l.b16 %v956
    %v1034 = vunpack.c.h.b16 %v956
    %v1035 = vunpack.c.l.b16 %v957
    %v1036 = vunpack.c.h.b16 %v957
    %v1037 = vunpack.c.l.b16 %v958
    %v1038 = vunpack.c.h.b16 %v958
    %v1039 = vunpack.c.l.b16 %v959
    %v1040 = vunpack.c.h.b16 %v959
    %v1041 = vunpack.c.l.b16 %v960
    %v1042 = vunpack.c.h.b16 %v960
    %v1043 = vunpack.c.l.b16 %v961
    %v1044 = vunpack.c.h.b16 %v961
    %v1045 = vunpack.c.l.b16 %v962
    %v1046 = vunpack.c.h.b16 %v962
    %v1047 = vunpack.c.l.b16 %v963
    %v1048 = vunpack.c.h.b16 %v963
    %v1049 = vunpack.c.l.b16 %v964
    %v1050 = vunpack.c.h.b16 %v964
    %v1051 = vunpack.c.l.b16 %v965
    %v1052 = vunpack.c.h.b16 %v965
    %v1053 = vunpack.c.l.b16 %v966
    %v1054 = vunpack.c.h.b16 %v966
    %v1055 = vunpack.c.l.b16 %v967
    %v1056 = vunpack.c.h.b16 %v967
    %v1057 = vunpack.c.l.b16 %v968
    %v1058 = vunpack.c.h.b16 %v968
    %v1059 = vunpack.c.l.b16 %v969
    %v1060 = vunpack.c.h.b16 %v969
    %v1061 = vunpack.c.l.b16 %v970
    %v1062 = vunpack.c.h.b16 %v970
    %v1063 = vunpack.c.l.b16 %v971
    %v1064 = vunpack.c.h.b16 %v971
    %v1065 = vunpack.c.l.b16 %v972
    %v1066 = vunpack.c.h.b16 %v972
    %v1067 = vunpack.c.l.b16 %v973
    %v1068 = vunpack.c.h.b16 %v973
    %v1069 = vunpack.c.l.b16 %v974
    %v1070 = vunpack.c.h.b16 %v974
    %v1071 = vunpack.c.l.b16 %v975
    %v1072 = vunpack.c.h.b16 %v975
    %v1073 = vunpack.c.l.b16 %v976
    %v1074 = vunpack.c.h.b16 %v976
    %v1075 = vunpack.c.l.b16 %v977
    %v1076 = vunpack.c.h.b16 %v977
    %v1077 = vunpack.c.l.b16 %v978
    %v1078 = vunpack.c.h.b16 %v978
    %v1079 = vunpack.c.l.b16 %v979
    %v1080 = vunpack.c.h.b16 %v979
    %v1081 = vunpack.c.l.b16 %v980
    %v1082 = vunpack.c.h.b16 %v980
    %v1083 = vunpack.c.l.b16 %v981
    %v1084 = vunpack.c.h.b16 %v981
    %v1085 = vunpack.c.l.b16 %v982
    %v1086 = vunpack.c.h.b16 %v982
    %v1087 = vunpack.c.l.b16 %v983
    %v1088 = vunpack.c.h.b16 %v983
    %v1089 = vunpack.c.l.b16 %v984
    %v1090 = vunpack.c.h.b16 %v984
    %v1091 = vunpack.c.l.b16 %v985
    %v1092 = vunpack.c.h.b16 %v985
    %v1093 = vpack.c.b16 %v1031, %v1029
    %v1094 = vpack.c.b16 %v1032, %v1030
    %v1095 = vpack.c.b16 %v1035, %v1033
    %v1096 = vpack.c.b16 %v1036, %v1034
    %v1097 = vpack.c.b16 %v1039, %v1037
    %v1098 = vpack.c.b16 %v1040, %v1038
    %v1099 = vpack.c.b16 %v1043, %v1041
    %v1100 = vpack.c.b16 %v1044, %v1042
    %v1101 = vpack.c.b16 %v1047, %v1045
    %v1102 = vpack.c.b16 %v1048, %v1046
    %v1103 = vpack.c.b16 %v1051, %v1049
    %v1104 = vpack.c.b16 %v1052, %v1050
    %v1105 = vpack.c.b16 %v1055, %v1053
    %v1106 = vpack.c.b16 %v1056, %v1054
    %v1107 = vpack.c.b16 %v1059, %v1057
    %v1108 = vpack.c.b16 %v1060, %v1058
    %v1109 = vpack.c.b16 %v1063, %v1061
    %v1110 = vpack.c.b16 %v1064, %v1062
    %v1111 = vpack.c.b16 %v1067, %v1065
    %v1112 = vpack.c.b16 %v1068, %v1066
    %v1113 = vpack.c.b16 %v1071, %v1069
    %v1114 = vpack.c.b16 %v1072, %v1070
    %v1115 = vpack.c.b16 %v1075, %v1073
    %v1116 = vpack.c.b16 %v1076, %v1074
    %v1117 = vpack.c.b16 %v1079, %v1077
    %v1118 = vpack.c.b16 %v1080, %v1078
    %v1119 = vpack.c.b16 %v1083, %v1081
    %v1120 = vpack.c.b16 %v1084, %v1082
    %v1121 = vpack.c.b16 %v1087, %v1085
    %v1122 = vpack.c.b16 %v1088, %v1086
    %v1123 = vpack.c.b16 %v1091, %v1089
    %v1124 = vpack.c.b16 %v1092, %v1090
    %1157 = vmatprep.subr.bf16.mxu0 %v1094
    %1158 = vmatpush1.bf16.msra.mxu0 %v1093
    %1159 = vmatprep.subr.bf16.mxu0 %v1096
    %1160 = vmatpush1.bf16.msra.mxu0 %v1095
    %1161 = vmatprep.subr.bf16.mxu0 %v1098
    %1162 = vmatpush1.bf16.msra.mxu0 %v1097
    %1163 = vmatprep.subr.bf16.mxu0 %v1100
    %1164 = vmatpush1.bf16.msra.mxu0 %v1099
    %1165 = vmatprep.subr.bf16.mxu0 %v1102
    %1166 = vmatpush1.bf16.msra.mxu0 %v1101
    %1167 = vmatprep.subr.bf16.mxu0 %v1104
    %1168 = vmatpush1.bf16.msra.mxu0 %v1103
    %1169 = vmatprep.subr.bf16.mxu0 %v1106
    %1170 = vmatpush1.bf16.msra.mxu0 %v1105
    %1171 = vmatprep.subr.bf16.mxu0 %v1108
    %1172 = vmatpush1.bf16.msra.mxu0 %v1107
    %1173 = vmatprep.subr.bf16.mxu0 %v1110
    %1174 = vmatpush1.bf16.msra.mxu0 %v1109
    %1175 = vmatprep.subr.bf16.mxu0 %v1112
    %1176 = vmatpush1.bf16.msra.mxu0 %v1111
    %1177 = vmatprep.subr.bf16.mxu0 %v1114
    %1178 = vmatpush1.bf16.msra.mxu0 %v1113
    %1179 = vmatprep.subr.bf16.mxu0 %v1116
    %1180 = vmatpush1.bf16.msra.mxu0 %v1115
    %1181 = vmatprep.subr.bf16.mxu0 %v1118
    %1182 = vmatpush1.bf16.msra.mxu0 %v1117
    %1183 = vmatprep.subr.bf16.mxu0 %v1120
    %1184 = vmatpush1.bf16.msra.mxu0 %v1119
    %1185 = vmatprep.subr.bf16.mxu0 %v1122
    %1186 = vmatpush1.bf16.msra.mxu0 %v1121
    %1187 = vmatprep.subr.bf16.mxu0 %v1124
    %1188 = vmatpush1.bf16.msra.mxu0 %v1123
    %1189 = vmatprep.mubr.bf16.mxu0 %v953
    %1190 = vmatmul.mubr.bf16.gmra.mrb[0].mxu0 %v952
    %v1191 = vpop.f32.mrb[0].mxu0
    %v1192 = vadd.f32 %v990, %v1191
    %v1193 = vpop.f32.mrb[0].mxu0
    %v1194 = vadd.f32 %v994, %v1193
    %v1195 = vpop.f32.mrb[0].mxu0
    %v1196 = vpop.f32.mrb[0].mxu0
    %1197 = vdwg.mxu0
    %v1198 = vxor.u32 %v1192, 2147483648
    %v1199 = vxor.u32 %v1194, 2147483648
    %v1200 = vmul.f32 %v1198, 1.442695
    %v1201 = vpow.pop %v1200
    %v1202 = vmul.f32 %v1199, 1.442695
    %v1203 = vpow.pop %v1202
    %v1204 = vadd.f32 %v1201, 1.0
    %v1205 = vadd.f32 %v1203, 1.0
    %v1206 = vrcp.pop %v1204
    %v1207 = vmul.f32 1.0, %v1206
    %v1208 = vrcp.pop %v1205
    %v1209 = vmul.f32 1.0, %v1208
    %v1210 = vtanh.pop %v1194
    %v1211 = vmul.f32 %v1207, %v425
    %1213 = vrot.lane.b32.xlu0 %v1210, 64
    %v1214 = vpop.permute.xlu0 %1213
    %v1216 = vmul.f32 %v1207, %v1214
    %1218 = vrot.lane.b32.xlu0 %v1216, 64
    %v1219 = vpop.permute.xlu0 %1218
    %v1221 = vadd.f32 %v1211, %v1219
    %v1222 = vtanh.pop %v1221
    %1224 = vrot.lane.b32.xlu0 %v1222, 64
    %v1225 = vpop.permute.xlu0 %1224
    %v1227 = vmul.f32 %v1209, %v1225
    %vm1228 = vcmp.gt.f32.partialorder %v451, 0.0
    %v1229 = vsel %vm1228, 1, 0
    %1230 = vset.pattern.permute.xlu0 0
    %1231 = vperm.xlu0 %1230, %v1229
    %v1232 = vpop.permute.xlu0 %1231
    %vm1233 = vcmp.eq.s32.totalorder %v1232, 1
    %v1234 = vsel %vm1233, %v1227, %v425
    %v1235 = vsel %vm1233, %v1221, %v425
    %v1236 = vpack.c.bf16 %v1227, %v1227
    %v1238 = vlaneseq
    %v1239 = vshrl.u32 %v1238, 7
    %v1240 = vsub.s32 0, %v1239
    %v1241 = vrot.slane %v449, %v1240
    %v1251 = vunpack.c.l.b16 %v441
    %v1252 = vunpack.c.l.b16 %v442
    %v1253 = vunpack.c.l.b16 %v443
    %v1254 = vunpack.c.l.b16 %v444
    %v1255 = vunpack.c.l.b16 %v445
    %v1256 = vunpack.c.l.b16 %v446
    %v1257 = vunpack.c.l.b16 %v447
    %v1258 = vunpack.c.l.b16 %v448
    %v1259 = vpack.c.b16 %v1252, %v1251
    %v1260 = vpack.c.b16 %v1254, %v1253
    %v1261 = vpack.c.b16 %v1256, %v1255
    %v1262 = vpack.c.b16 %v1258, %v1257
    %v1268 = vsel %vm504, %v1236, 0
    %1270 = vmatprep.subr.bf16.mxu0 0
    %1271 = vmatpush1.bf16.msra.mxu0 %v1259
    %1272 = vmatprep.subr.bf16.mxu0 0
    %1273 = vmatpush1.bf16.msra.mxu0 %v1260
    %1274 = vmatprep.subr.bf16.mxu0 0
    %1275 = vmatpush1.bf16.msra.mxu0 %v1261
    %1276 = vmatprep.subr.bf16.mxu0 0
    %1277 = vmatpush1.bf16.msra.mxu0 %v1262
    %1278 = vmatprep.subr.bf16.mxu0 0
    %1279 = vmatpush1.bf16.msra.mxu0 0
    %1280 = vmatprep.subr.bf16.mxu0 0
    %1281 = vmatpush1.bf16.msra.mxu0 0
    %1282 = vmatprep.subr.bf16.mxu0 0
    %1283 = vmatpush1.bf16.msra.mxu0 0
    %1284 = vmatprep.subr.bf16.mxu0 0
    %1285 = vmatpush1.bf16.msra.mxu0 0
    %1286 = vmatprep.subr.bf16.mxu0 0
    %1287 = vmatpush1.bf16.msra.mxu0 0
    %1288 = vmatprep.subr.bf16.mxu0 0
    %1289 = vmatpush1.bf16.msra.mxu0 0
    %1290 = vmatprep.subr.bf16.mxu0 0
    %1291 = vmatpush1.bf16.msra.mxu0 0
    %1292 = vmatprep.subr.bf16.mxu0 0
    %1293 = vmatpush1.bf16.msra.mxu0 0
    %1294 = vmatprep.subr.bf16.mxu0 0
    %1295 = vmatpush1.bf16.msra.mxu0 0
    %1296 = vmatprep.subr.bf16.mxu0 0
    %1297 = vmatpush1.bf16.msra.mxu0 0
    %1298 = vmatprep.subr.bf16.mxu0 0
    %1299 = vmatpush1.bf16.msra.mxu0 0
    %1300 = vmatprep.subr.bf16.mxu0 0
    %1301 = vmatpush1.bf16.msra.mxu0 0
    %1302 = vmatprep.mubr.bf16.mxu0 0
    %1303 = vmatmul.mubr.bf16.gmra.mrb[0].mxu0 %v1268
    %v1304 = vpop.f32.mrb[0].mxu0
    %v1305 = vadd.f32 %v1241, %v1304
    %v1306 = vpop.f32.mrb[0].mxu0
    %v1307 = vpop.f32.mrb[0].mxu0
    %v1308 = vpop.f32.mrb[0].mxu0
    %1309 = vdwg.mxu0
    %1311 = vset.pattern.permute.xlu0 0
    %1312 = vperm.xlu0 %1311, %v451
    %v1313 = vpop.permute.xlu0 %1312
    %v1315 = vmul.f32 %v1305, %v1313
    %v1318 = vunpack.c.l.s4 1966171168
    %v1319 = vunpack.c.0.s8 %v1318
    %v1320 = vlaneseq
    %v1321 = vshrl.u32 %v1320, 7
    %v1322 = vsub.s32 %v1319, %v1321
    %v1323 = vrot.slane %v1315, %v1322
    %v1324 = vcombine.high %v1323, %v1323
    %v1326 = vunpack.c.l.s4 1966171168
    %v1327 = vunpack.c.0.s8 %v1326
    %v1328 = vlaneseq
    %v1329 = vshrl.u32 %v1328, 7
    %v1330 = vsub.s32 %v1327, %v1329
    %v1331 = vrot.slane %v1323, %v1330
    %v1333 = vunpack.c.l.s4 1966171168
    %v1334 = vunpack.c.0.s8 %v1333
    %v1335 = vlaneseq
    %v1336 = vshrl.u32 %v1335, 7
    %v1337 = vsub.s32 %v1334, %v1336
    %v1338 = vrot.slane %v1324, %v1337
    %vm1341 = vcmask 253952
    %1342 = vst.msk [vmem:[%s18] sm:$0x1] %vm1341, %v1331
    %1343 = vst.msk [vmem:[%s18 + $0x8] sm:$0x1] %vm1341, %v1338
    %v1344 = vlaneseq
    %v1345 = vshrl.u32 %v1344, 7
    %v1346 = vsub.s32 0, %v1345
    %v1347 = vrot.slane %v1313, %v1346
    %v1348 = vlaneseq
    %v1349 = vshrl.u32 %v1348, 7
    %v1350 = vsub.s32 1, %v1349
    %v1351 = vrot.slane %v1313, %v1350
    %v1354 = vmul.f32 %v743, %v1347
    %v1355 = vmul.f32 %v744, %v1347
    %v1356 = vmul.f32 %v745, %v1351
    %v1357 = vmul.f32 %v746, %v1351
    %1362 = vset.pattern.permute.xlu0 0
    %1363 = vperm.xlu0 %1362, %v1354
    %v1364 = vpop.permute.xlu0 %1363
    %1365 = vset.pattern.permute.xlu0 0
    %1366 = vperm.xlu0 %1365, %v1355
    %v1367 = vpop.permute.xlu0 %1366
    %1368 = vset.pattern.permute.xlu0 0
    %1369 = vperm.xlu0 %1368, %v1356
    %v1370 = vpop.permute.xlu0 %1369
    %1371 = vset.pattern.permute.xlu0 0
    %1372 = vperm.xlu0 %1371, %v1357
    %v1373 = vpop.permute.xlu0 %1372
    %v1374 = vlaneseq
    %v1375 = vshrl.u32 %v1374, 7
    %v1376 = vsub.s32 %v642, %v1375
    %v1377 = vrot.slane %v1364, %v1376
    %v1378 = vlaneseq
    %v1379 = vshrl.u32 %v1378, 7
    %v1380 = vsub.s32 %v647, %v1379
    %v1381 = vrot.slane %v1367, %v1380
    %v1382 = vsel %vm652, %v1381, %v1377
    %v1383 = vlaneseq
    %v1384 = vshrl.u32 %v1383, 7
    %v1385 = vsub.s32 %v642, %v1384
    %v1386 = vrot.slane %v1370, %v1385
    %v1387 = vlaneseq
    %v1388 = vshrl.u32 %v1387, 7
    %v1389 = vsub.s32 %v647, %v1388
    %v1390 = vrot.slane %v1373, %v1389
    %v1391 = vsel %vm652, %v1390, %v1386
    %vm1394 = vcmask 122880
    %1395 = vst.msk [vmem:[%s19] sm:$0x1] %vm1394, %v1382
    %1396 = vst.msk [vmem:[%s19 + $0x8] sm:$0x1] %vm1394, %v1391
    %s1397 = scalar_lea.vmem %s2, 2
    %v1398 = vld [vmem:[%s1397] sm:$0x3]
    %v1399 = vpack.c.bf16 %v1234, %v1234
    %v1401 = vsel %vm504, %v1399, 0
    %1403 = vmatprep.subr.bf16.mxu0 %v489
    %1404 = vmatpush1.bf16.msra.mxu0 %v488
    %1405 = vmatprep.subr.bf16.mxu0 %v491
    %1406 = vmatpush1.bf16.msra.mxu0 %v490
    %1407 = vmatprep.subr.bf16.mxu0 %v493
    %1408 = vmatpush1.bf16.msra.mxu0 %v492
    %1409 = vmatprep.subr.bf16.mxu0 %v495
    %1410 = vmatpush1.bf16.msra.mxu0 %v494
    %1411 = vmatprep.subr.bf16.mxu0 0
    %1412 = vmatpush1.bf16.msra.mxu0 0
    %1413 = vmatprep.subr.bf16.mxu0 0
    %1414 = vmatpush1.bf16.msra.mxu0 0
    %1415 = vmatprep.subr.bf16.mxu0 0
    %1416 = vmatpush1.bf16.msra.mxu0 0
    %1417 = vmatprep.subr.bf16.mxu0 0
    %1418 = vmatpush1.bf16.msra.mxu0 0
    %1419 = vmatprep.subr.bf16.mxu0 0
    %1420 = vmatpush1.bf16.msra.mxu0 0
    %1421 = vmatprep.subr.bf16.mxu0 0
    %1422 = vmatpush1.bf16.msra.mxu0 0
    %1423 = vmatprep.subr.bf16.mxu0 0
    %1424 = vmatpush1.bf16.msra.mxu0 0
    %1425 = vmatprep.subr.bf16.mxu0 0
    %1426 = vmatpush1.bf16.msra.mxu0 0
    %1427 = vmatprep.subr.bf16.mxu0 0
    %1428 = vmatpush1.bf16.msra.mxu0 0
    %1429 = vmatprep.subr.bf16.mxu0 0
    %1430 = vmatpush1.bf16.msra.mxu0 0
    %1431 = vmatprep.subr.bf16.mxu0 0
    %1432 = vmatpush1.bf16.msra.mxu0 0
    %1433 = vmatprep.subr.bf16.mxu0 0
    %1434 = vmatpush1.bf16.msra.mxu0 0
    %1435 = vmatprep.mubr.bf16.mxu0 0
    %1436 = vmatmul.mubr.bf16.gmra.mrb[0].mxu0 %v1401
    %v1437 = vpop.f32.mrb[0].mxu0
    %v1438 = vadd.f32 %v457, %v1437
    %v1439 = vpop.f32.mrb[0].mxu0
    %v1440 = vadd.f32 %v461, %v1439
    %v1441 = vpop.f32.mrb[0].mxu0
    %v1442 = vpop.f32.mrb[0].mxu0
    %1443 = vdwg.mxu0
    %v1444 = vxor.u32 %v1438, 2147483648
    %v1445 = vxor.u32 %v1440, 2147483648
    %v1446 = vmul.f32 %v1444, 1.442695
    %v1447 = vpow.pop %v1446
    %v1448 = vmul.f32 %v1445, 1.442695
    %v1449 = vpow.pop %v1448
    %v1450 = vadd.f32 %v1447, 1.0
    %v1451 = vadd.f32 %v1449, 1.0
    %v1452 = vrcp.pop %v1450
    %v1453 = vmul.f32 1.0, %v1452
    %v1454 = vrcp.pop %v1451
    %v1455 = vmul.f32 1.0, %v1454
    %v1458 = vunpack.c.l.s4 1966171168
    %v1459 = vunpack.c.0.s8 %v1458
    %v1460 = vlaneseq
    %v1461 = vshrl.u32 %v1460, 7
    %v1462 = vsub.s32 %v1459, %v1461
    %v1463 = vrot.slane %v1438, %v1462
    %v1464 = vcombine.high %v1463, %v1463
    %v1466 = vunpack.c.l.s4 1966171168
    %v1467 = vunpack.c.0.s8 %v1466
    %v1468 = vlaneseq
    %v1469 = vshrl.u32 %v1468, 7
    %v1470 = vsub.s32 %v1467, %v1469
    %v1471 = vrot.slane %v1463, %v1470
    %v1473 = vunpack.c.l.s4 1966171168
    %v1474 = vunpack.c.0.s8 %v1473
    %v1475 = vlaneseq
    %v1476 = vshrl.u32 %v1475, 7
    %v1477 = vsub.s32 %v1474, %v1476
    %v1478 = vrot.slane %v1464, %v1477
    %v1479 = vlaneseq
    %v1480 = vshrl.u32 %v1479, 7
    %v1481 = vsub.s32 0, %v1480
    %v1482 = vrot.slane %v1471, %v1481
    %v1483 = vlaneseq
    %v1484 = vshrl.u32 %v1483, 7
    %v1485 = vsub.s32 0, %v1484
    %v1486 = vrot.slane %v1478, %v1485
    %v1489 = vadd.f32 %v278, %v1482
    %v1490 = vadd.f32 %v281, %v1482
    %v1491 = vadd.f32 %v286, %v1486
    %v1492 = vadd.f32 %v289, %v1486
    %v1493 = vmax.f32 %v1489, 0.0
    %v1494 = vmax.f32 %v1490, 0.0
    %v1495 = vmax.f32 %v1491, 0.0
    %v1496 = vmax.f32 %v1492, 0.0
    %v1497 = vmul.f32 %v1493, %v606
    %v1498 = vmul.f32 %v1494, %v606
    %v1499 = vmul.f32 %v1495, %v606
    %v1500 = vmul.f32 %v1496, %v606
    %v1501 = vsel %vm504, %v1497, 0.0
    %1502 = vadd.xlane.f32.xlu0 %v1501
    %v1503 = vpop.xlane.xlu0 %1502
    %v1504 = vsel %vm504, %v1498, 0.0
    %1505 = vadd.xlane.f32.xlu0 %v1504
    %v1506 = vpop.xlane.xlu0 %1505
    %v1507 = vsel %vm504, %v1499, 0.0
    %1508 = vadd.xlane.f32.xlu0 %v1507
    %v1509 = vpop.xlane.xlu0 %1508
    %v1510 = vsel %vm504, %v1500, 0.0
    %1511 = vadd.xlane.f32.xlu0 %v1510
    %v1512 = vpop.xlane.xlu0 %1511
    %v1513 = vadd.f32 %v1503, %v631
    %v1514 = vadd.f32 %v1506, %v631
    %v1515 = vadd.f32 %v1509, %v631
    %v1516 = vadd.f32 %v1512, %v631
    %v1521 = vlaneseq
    %v1522 = vshrl.u32 %v1521, 7
    %v1523 = vsub.s32 %v642, %v1522
    %v1524 = vrot.slane %v1513, %v1523
    %v1525 = vlaneseq
    %v1526 = vshrl.u32 %v1525, 7
    %v1527 = vsub.s32 %v647, %v1526
    %v1528 = vrot.slane %v1514, %v1527
    %v1529 = vsel %vm652, %v1528, %v1524
    %v1530 = vlaneseq
    %v1531 = vshrl.u32 %v1530, 7
    %v1532 = vsub.s32 %v642, %v1531
    %v1533 = vrot.slane %v1515, %v1532
    %v1534 = vlaneseq
    %v1535 = vshrl.u32 %v1534, 7
    %v1536 = vsub.s32 %v647, %v1535
    %v1537 = vrot.slane %v1516, %v1536
    %v1538 = vsel %vm652, %v1537, %v1533
    %v1539 = vsel %vm338, %v1538, %v1529
    %v1541 = vsel %vm665, %v1539, -inf
    %1542 = vmax.xlane.f32.xlu0 %v1541
    %v1543 = vpop.xlane.xlu0 %1542
    %v1545 = vlaneseq
    %v1546 = vshrl.u32 %v1545, 7
    %v1547 = vsub.s32 0, %v1546
    %v1548 = vrot.slane %v1543, %v1547
    %v1549 = vlaneseq
    %v1550 = vshrl.u32 %v1549, 7
    %v1551 = vsub.s32 1, %v1550
    %v1552 = vrot.slane %v1543, %v1551
    %v1555 = vsub.f32 %v1513, %v1548
    %v1556 = vsub.f32 %v1514, %v1548
    %v1557 = vsub.f32 %v1515, %v1552
    %v1558 = vsub.f32 %v1516, %v1552
    %v1559 = vmul.f32 %v1555, 1.442695
    %v1560 = vpow.pop %v1559
    %v1561 = vmul.f32 %v1556, 1.442695
    %v1562 = vpow.pop %v1561
    %v1563 = vmul.f32 %v1557, 1.442695
    %v1564 = vpow.pop %v1563
    %v1565 = vmul.f32 %v1558, 1.442695
    %v1566 = vpow.pop %v1565
    %1571 = vset.pattern.permute.xlu0 0
    %1572 = vperm.xlu0 %1571, %v1560
    %v1573 = vpop.permute.xlu0 %1572
    %1574 = vset.pattern.permute.xlu0 0
    %1575 = vperm.xlu0 %1574, %v1562
    %v1576 = vpop.permute.xlu0 %1575
    %1577 = vset.pattern.permute.xlu0 0
    %1578 = vperm.xlu0 %1577, %v1564
    %v1579 = vpop.permute.xlu0 %1578
    %1580 = vset.pattern.permute.xlu0 0
    %1581 = vperm.xlu0 %1580, %v1566
    %v1582 = vpop.permute.xlu0 %1581
    %v1583 = vlaneseq
    %v1584 = vshrl.u32 %v1583, 7
    %v1585 = vsub.s32 %v642, %v1584
    %v1586 = vrot.slane %v1573, %v1585
    %v1587 = vlaneseq
    %v1588 = vshrl.u32 %v1587, 7
    %v1589 = vsub.s32 %v647, %v1588
    %v1590 = vrot.slane %v1576, %v1589
    %v1591 = vsel %vm652, %v1590, %v1586
    %v1592 = vlaneseq
    %v1593 = vshrl.u32 %v1592, 7
    %v1594 = vsub.s32 %v642, %v1593
    %v1595 = vrot.slane %v1579, %v1594
    %v1596 = vlaneseq
    %v1597 = vshrl.u32 %v1596, 7
    %v1598 = vsub.s32 %v647, %v1597
    %v1599 = vrot.slane %v1582, %v1598
    %v1600 = vsel %vm652, %v1599, %v1595
    %v1601 = vsel %vm338, %v1600, %v1591
    %v1603 = vsel %vm665, %v1601, 0.0
    %1604 = vadd.xlane.f32.xlu0 %v1603
    %v1605 = vpop.xlane.xlu0 %1604
    %v1606 = vrcp.pop %v1605
    %v1608 = vlaneseq
    %v1609 = vshrl.u32 %v1608, 7
    %v1610 = vsub.s32 0, %v1609
    %v1611 = vrot.slane %v1606, %v1610
    %v1612 = vlaneseq
    %v1613 = vshrl.u32 %v1612, 7
    %v1614 = vsub.s32 1, %v1613
    %v1615 = vrot.slane %v1606, %v1614
    %v1618 = vmul.f32 %v1560, %v1611
    %v1619 = vmul.f32 %v1562, %v1611
    %v1620 = vmul.f32 %v1564, %v1615
    %v1621 = vmul.f32 %v1566, %v1615
    %1624 = vset.pattern.permute.xlu0 0
    %1625 = vperm.xlu0 %1624, %v1618
    %v1626 = vpop.permute.xlu0 %1625
    %1627 = vset.pattern.permute.xlu0 0
    %1628 = vperm.xlu0 %1627, %v1619
    %v1629 = vpop.permute.xlu0 %1628
    %v1630 = vlaneseq
    %v1631 = vshrl.u32 %v1630, 7
    %v1632 = vsub.s32 %v642, %v1631
    %v1633 = vrot.slane %v1626, %v1632
    %v1634 = vlaneseq
    %v1635 = vshrl.u32 %v1634, 7
    %v1636 = vsub.s32 %v647, %v1635
    %v1637 = vrot.slane %v1629, %v1636
    %v1638 = vsel %vm652, %v1637, %v1633
    %v1639 = vsel %vm764, %v1638, 0
    %1641 = vmatprep.subr.mxu0 0.0
    %1642 = vmatpush1.msra.mxu0 %v156
    %1643 = vmatprep.subr.mxu0 0.0
    %1644 = vmatpush1.msra.mxu0 %v159
    %1645 = vmatprep.subr.mxu0 0.0
    %1646 = vmatpush1.msra.mxu0 0.0
    %1647 = vmatprep.subr.mxu0 0.0
    %1648 = vmatpush1.msra.mxu0 0.0
    %1649 = vmatprep.subr.mxu0 0.0
    %1650 = vmatpush1.msra.mxu0 0.0
    %1651 = vmatprep.subr.mxu0 0.0
    %1652 = vmatpush1.msra.mxu0 0.0
    %1653 = vmatprep.subr.mxu0 0.0
    %1654 = vmatpush1.msra.mxu0 0.0
    %1655 = vmatprep.subr.mxu0 0.0
    %1656 = vmatpush1.msra.mxu0 0.0
    %1657 = vmatprep.subr.mxu0 0.0
    %1658 = vmatpush1.msra.mxu0 0.0
    %1659 = vmatprep.subr.mxu0 0.0
    %1660 = vmatpush1.msra.mxu0 0.0
    %1661 = vmatprep.subr.mxu0 0.0
    %1662 = vmatpush1.msra.mxu0 0.0
    %1663 = vmatprep.subr.mxu0 0.0
    %1664 = vmatpush1.msra.mxu0 0.0
    %1665 = vmatprep.subr.mxu0 0.0
    %1666 = vmatpush1.msra.mxu0 0.0
    %1667 = vmatprep.subr.mxu0 0.0
    %1668 = vmatpush1.msra.mxu0 0.0
    %1669 = vmatprep.subr.mxu0 0.0
    %1670 = vmatpush1.msra.mxu0 0.0
    %1671 = vmatprep.subr.mxu0 0.0
    %1672 = vmatpush1.msra.mxu0 0.0
    %1673 = vmatprep.subr.mxu0 0.0
    %1674 = vmatpush1.msra.mxu0 0.0
    %1675 = vmatprep.subr.mxu0 0.0
    %1676 = vmatpush1.msra.mxu0 0.0
    %1677 = vmatprep.subr.mxu0 0.0
    %1678 = vmatpush1.msra.mxu0 0.0
    %1679 = vmatprep.subr.mxu0 0.0
    %1680 = vmatpush1.msra.mxu0 0.0
    %1681 = vmatprep.subr.mxu0 0.0
    %1682 = vmatpush1.msra.mxu0 0.0
    %1683 = vmatprep.subr.mxu0 0.0
    %1684 = vmatpush1.msra.mxu0 0.0
    %1685 = vmatprep.subr.mxu0 0.0
    %1686 = vmatpush1.msra.mxu0 0.0
    %1687 = vmatprep.subr.mxu0 0.0
    %1688 = vmatpush1.msra.mxu0 0.0
    %1689 = vmatprep.subr.mxu0 0.0
    %1690 = vmatpush1.msra.mxu0 0.0
    %1691 = vmatprep.subr.mxu0 0.0
    %1692 = vmatpush1.msra.mxu0 0.0
    %1693 = vmatprep.subr.mxu0 0.0
    %1694 = vmatpush1.msra.mxu0 0.0
    %1695 = vmatprep.subr.mxu0 0.0
    %1696 = vmatpush1.msra.mxu0 0.0
    %1697 = vmatprep.subr.mxu0 0.0
    %1698 = vmatpush1.msra.mxu0 0.0
    %1699 = vmatprep.subr.mxu0 0.0
    %1700 = vmatpush1.msra.mxu0 0.0
    %1701 = vmatprep.subr.mxu0 0.0
    %1702 = vmatpush1.msra.mxu0 0.0
    %1703 = vmatprep.subr.mxu0 0.0
    %1704 = vmatpush1.msra.mxu0 0.0
    %1705 = vmatprep.mubr.f32.mxu0 0.0
    %1706 = vmatmul.mubr.f32.gmra.mrb[0].mxu0 %v1639
    %v1707 = vpop.f32.mrb[0].mxu0
    %v1708 = vadd.f32 0.0, %v1707
    %v1709 = vpop.f32.mrb[0].mxu0
    %1710 = vdwg.mxu0
    %1713 = vset.pattern.permute.xlu0 0
    %1714 = vperm.xlu0 %1713, %v1620
    %v1715 = vpop.permute.xlu0 %1714
    %1716 = vset.pattern.permute.xlu0 0
    %1717 = vperm.xlu0 %1716, %v1621
    %v1718 = vpop.permute.xlu0 %1717
    %v1719 = vlaneseq
    %v1720 = vshrl.u32 %v1719, 7
    %v1721 = vsub.s32 %v642, %v1720
    %v1722 = vrot.slane %v1715, %v1721
    %v1723 = vlaneseq
    %v1724 = vshrl.u32 %v1723, 7
    %v1725 = vsub.s32 %v647, %v1724
    %v1726 = vrot.slane %v1718, %v1725
    %v1727 = vsel %vm652, %v1726, %v1722
    %v1728 = vsel %vm764, %v1727, 0
    %1730 = vmatprep.subr.mxu0 0.0
    %1731 = vmatpush1.msra.mxu0 %v164
    %1732 = vmatprep.subr.mxu0 0.0
    %1733 = vmatpush1.msra.mxu0 %v167
    %1734 = vmatprep.subr.mxu0 0.0
    %1735 = vmatpush1.msra.mxu0 0.0
    %1736 = vmatprep.subr.mxu0 0.0
    %1737 = vmatpush1.msra.mxu0 0.0
    %1738 = vmatprep.subr.mxu0 0.0
    %1739 = vmatpush1.msra.mxu0 0.0
    %1740 = vmatprep.subr.mxu0 0.0
    %1741 = vmatpush1.msra.mxu0 0.0
    %1742 = vmatprep.subr.mxu0 0.0
    %1743 = vmatpush1.msra.mxu0 0.0
    %1744 = vmatprep.subr.mxu0 0.0
    %1745 = vmatpush1.msra.mxu0 0.0
    %1746 = vmatprep.subr.mxu0 0.0
    %1747 = vmatpush1.msra.mxu0 0.0
    %1748 = vmatprep.subr.mxu0 0.0
    %1749 = vmatpush1.msra.mxu0 0.0
    %1750 = vmatprep.subr.mxu0 0.0
    %1751 = vmatpush1.msra.mxu0 0.0
    %1752 = vmatprep.subr.mxu0 0.0
    %1753 = vmatpush1.msra.mxu0 0.0
    %1754 = vmatprep.subr.mxu0 0.0
    %1755 = vmatpush1.msra.mxu0 0.0
    %1756 = vmatprep.subr.mxu0 0.0
    %1757 = vmatpush1.msra.mxu0 0.0
    %1758 = vmatprep.subr.mxu0 0.0
    %1759 = vmatpush1.msra.mxu0 0.0
    %1760 = vmatprep.subr.mxu0 0.0
    %1761 = vmatpush1.msra.mxu0 0.0
    %1762 = vmatprep.subr.mxu0 0.0
    %1763 = vmatpush1.msra.mxu0 0.0
    %1764 = vmatprep.subr.mxu0 0.0
    %1765 = vmatpush1.msra.mxu0 0.0
    %1766 = vmatprep.subr.mxu0 0.0
    %1767 = vmatpush1.msra.mxu0 0.0
    %1768 = vmatprep.subr.mxu0 0.0
    %1769 = vmatpush1.msra.mxu0 0.0
    %1770 = vmatprep.subr.mxu0 0.0
    %1771 = vmatpush1.msra.mxu0 0.0
    %1772 = vmatprep.subr.mxu0 0.0
    %1773 = vmatpush1.msra.mxu0 0.0
    %1774 = vmatprep.subr.mxu0 0.0
    %1775 = vmatpush1.msra.mxu0 0.0
    %1776 = vmatprep.subr.mxu0 0.0
    %1777 = vmatpush1.msra.mxu0 0.0
    %1778 = vmatprep.subr.mxu0 0.0
    %1779 = vmatpush1.msra.mxu0 0.0
    %1780 = vmatprep.subr.mxu0 0.0
    %1781 = vmatpush1.msra.mxu0 0.0
    %1782 = vmatprep.subr.mxu0 0.0
    %1783 = vmatpush1.msra.mxu0 0.0
    %1784 = vmatprep.subr.mxu0 0.0
    %1785 = vmatpush1.msra.mxu0 0.0
    %1786 = vmatprep.subr.mxu0 0.0
    %1787 = vmatpush1.msra.mxu0 0.0
    %1788 = vmatprep.subr.mxu0 0.0
    %1789 = vmatpush1.msra.mxu0 0.0
    %1790 = vmatprep.subr.mxu0 0.0
    %1791 = vmatpush1.msra.mxu0 0.0
    %1792 = vmatprep.subr.mxu0 0.0
    %1793 = vmatpush1.msra.mxu0 0.0
    %1794 = vmatprep.mubr.f32.mxu0 0.0
    %1795 = vmatmul.mubr.f32.gmra.mrb[0].mxu0 %v1728
    %v1796 = vpop.f32.mrb[0].mxu0
    %v1797 = vadd.f32 0.0, %v1796
    %v1798 = vpop.f32.mrb[0].mxu0
    %1799 = vdwg.mxu0
    %v1802 = vrot.slane %v1797, 7
    %v1803 = vsel %vm338, %v1802, %v1708
    %1804 = vrot.lane.b32.xlu0 %v1803, 64
    %v1805 = vpop.permute.xlu0 %1804
    %v1807 = vmul.f32 %v1453, %v1805
    %v1808 = vmul.f32 %v1455, %v1805
    %s1809 = sld [smem:[#allocation3 + $0x1]]
    %s1810 = scalar_lea.vmem %s3, %s1809
    %v1811 = vld [vmem:[%s1810] sm:$0x1]
    %s1812 = sld [smem:[#allocation3 + $0x81]]
    %s1813 = scalar_lea.vmem %s3, %s1812
    %v1814 = vld [vmem:[%s1813] sm:$0x1]
    %v1816 = vrot.slane %v1814, 7
    %v1818 = vsel %vm944, %v1811, %v1816
    %1820 = vrot.lane.b32.xlu0 %v1234, 64
    %v1821 = vpop.permute.xlu0 %1820
    %v1823 = vsel %vm504, %v1818, %v1807
    %v1824 = vsel %vm504, %v1808, %v1821
    %v1825 = vpack.c.bf16 %v1823, %v1823
    %v1826 = vpack.c.bf16 %v1824, %v1824
    %v1827 = vld [vmem:[%s14] sm:$0xff]
    %v1828 = vld [vmem:[%s14 + $0x8] sm:$0xff]
    %v1829 = vld [vmem:[%s14 + $0x10] sm:$0xff]
    %v1830 = vld [vmem:[%s14 + $0x18] sm:$0xff]
    %v1831 = vld [vmem:[%s14 + $0x20] sm:$0xff]
    %v1832 = vld [vmem:[%s14 + $0x28] sm:$0xff]
    %v1833 = vld [vmem:[%s14 + $0x30] sm:$0xff]
    %v1834 = vld [vmem:[%s14 + $0x38] sm:$0xff]
    %v1835 = vld [vmem:[%s14 + $0x40] sm:$0xff]
    %v1836 = vld [vmem:[%s14 + $0x48] sm:$0xff]
    %v1837 = vld [vmem:[%s14 + $0x50] sm:$0xff]
    %v1838 = vld [vmem:[%s14 + $0x58] sm:$0xff]
    %v1839 = vld [vmem:[%s14 + $0x60] sm:$0xff]
    %v1840 = vld [vmem:[%s14 + $0x68] sm:$0xff]
    %v1841 = vld [vmem:[%s14 + $0x70] sm:$0xff]
    %v1842 = vld [vmem:[%s14 + $0x78] sm:$0xff]
    %v1843 = vld [vmem:[%s14 + $0x80] sm:$0xff]
    %v1844 = vld [vmem:[%s14 + $0x88] sm:$0xff]
    %v1845 = vld [vmem:[%s14 + $0x90] sm:$0xff]
    %v1846 = vld [vmem:[%s14 + $0x98] sm:$0xff]
    %v1847 = vld [vmem:[%s14 + $0xa0] sm:$0xff]
    %v1848 = vld [vmem:[%s14 + $0xa8] sm:$0xff]
    %v1849 = vld [vmem:[%s14 + $0xb0] sm:$0xff]
    %v1850 = vld [vmem:[%s14 + $0xb8] sm:$0xff]
    %v1851 = vld [vmem:[%s14 + $0xc0] sm:$0xff]
    %v1852 = vld [vmem:[%s14 + $0xc8] sm:$0xff]
    %v1853 = vld [vmem:[%s14 + $0xd0] sm:$0xff]
    %v1854 = vld [vmem:[%s14 + $0xd8] sm:$0xff]
    %v1855 = vld [vmem:[%s14 + $0xe0] sm:$0xff]
    %v1856 = vld [vmem:[%s14 + $0xe8] sm:$0xff]
    %v1857 = vld [vmem:[%s14 + $0xf0] sm:$0xff]
    %v1858 = vld [vmem:[%s14 + $0xf8] sm:$0xff]
    %v1891 = vunpack.c.l.b16 %v1827
    %v1892 = vunpack.c.h.b16 %v1827
    %v1893 = vunpack.c.l.b16 %v1828
    %v1894 = vunpack.c.h.b16 %v1828
    %v1895 = vunpack.c.l.b16 %v1829
    %v1896 = vunpack.c.h.b16 %v1829
    %v1897 = vunpack.c.l.b16 %v1830
    %v1898 = vunpack.c.h.b16 %v1830
    %v1899 = vunpack.c.l.b16 %v1831
    %v1900 = vunpack.c.h.b16 %v1831
    %v1901 = vunpack.c.l.b16 %v1832
    %v1902 = vunpack.c.h.b16 %v1832
    %v1903 = vunpack.c.l.b16 %v1833
    %v1904 = vunpack.c.h.b16 %v1833
    %v1905 = vunpack.c.l.b16 %v1834
    %v1906 = vunpack.c.h.b16 %v1834
    %v1907 = vunpack.c.l.b16 %v1835
    %v1908 = vunpack.c.h.b16 %v1835
    %v1909 = vunpack.c.l.b16 %v1836
    %v1910 = vunpack.c.h.b16 %v1836
    %v1911 = vunpack.c.l.b16 %v1837
    %v1912 = vunpack.c.h.b16 %v1837
    %v1913 = vunpack.c.l.b16 %v1838
    %v1914 = vunpack.c.h.b16 %v1838
    %v1915 = vunpack.c.l.b16 %v1839
    %v1916 = vunpack.c.h.b16 %v1839
    %v1917 = vunpack.c.l.b16 %v1840
    %v1918 = vunpack.c.h.b16 %v1840
    %v1919 = vunpack.c.l.b16 %v1841
    %v1920 = vunpack.c.h.b16 %v1841
    %v1921 = vunpack.c.l.b16 %v1842
    %v1922 = vunpack.c.h.b16 %v1842
    %v1923 = vunpack.c.l.b16 %v1843
    %v1924 = vunpack.c.h.b16 %v1843
    %v1925 = vunpack.c.l.b16 %v1844
    %v1926 = vunpack.c.h.b16 %v1844
    %v1927 = vunpack.c.l.b16 %v1845
    %v1928 = vunpack.c.h.b16 %v1845
    %v1929 = vunpack.c.l.b16 %v1846
    %v1930 = vunpack.c.h.b16 %v1846
    %v1931 = vunpack.c.l.b16 %v1847
    %v1932 = vunpack.c.h.b16 %v1847
    %v1933 = vunpack.c.l.b16 %v1848
    %v1934 = vunpack.c.h.b16 %v1848
    %v1935 = vunpack.c.l.b16 %v1849
    %v1936 = vunpack.c.h.b16 %v1849
    %v1937 = vunpack.c.l.b16 %v1850
    %v1938 = vunpack.c.h.b16 %v1850
    %v1939 = vunpack.c.l.b16 %v1851
    %v1940 = vunpack.c.h.b16 %v1851
    %v1941 = vunpack.c.l.b16 %v1852
    %v1942 = vunpack.c.h.b16 %v1852
    %v1943 = vunpack.c.l.b16 %v1853
    %v1944 = vunpack.c.h.b16 %v1853
    %v1945 = vunpack.c.l.b16 %v1854
    %v1946 = vunpack.c.h.b16 %v1854
    %v1947 = vunpack.c.l.b16 %v1855
    %v1948 = vunpack.c.h.b16 %v1855
    %v1949 = vunpack.c.l.b16 %v1856
    %v1950 = vunpack.c.h.b16 %v1856
    %v1951 = vunpack.c.l.b16 %v1857
    %v1952 = vunpack.c.h.b16 %v1857
    %v1953 = vunpack.c.l.b16 %v1858
    %v1954 = vunpack.c.h.b16 %v1858
    %v1955 = vpack.c.b16 %v1893, %v1891
    %v1956 = vpack.c.b16 %v1894, %v1892
    %v1957 = vpack.c.b16 %v1897, %v1895
    %v1958 = vpack.c.b16 %v1898, %v1896
    %v1959 = vpack.c.b16 %v1901, %v1899
    %v1960 = vpack.c.b16 %v1902, %v1900
    %v1961 = vpack.c.b16 %v1905, %v1903
    %v1962 = vpack.c.b16 %v1906, %v1904
    %v1963 = vpack.c.b16 %v1909, %v1907
    %v1964 = vpack.c.b16 %v1910, %v1908
    %v1965 = vpack.c.b16 %v1913, %v1911
    %v1966 = vpack.c.b16 %v1914, %v1912
    %v1967 = vpack.c.b16 %v1917, %v1915
    %v1968 = vpack.c.b16 %v1918, %v1916
    %v1969 = vpack.c.b16 %v1921, %v1919
    %v1970 = vpack.c.b16 %v1922, %v1920
    %v1971 = vpack.c.b16 %v1925, %v1923
    %v1972 = vpack.c.b16 %v1926, %v1924
    %v1973 = vpack.c.b16 %v1929, %v1927
    %v1974 = vpack.c.b16 %v1930, %v1928
    %v1975 = vpack.c.b16 %v1933, %v1931
    %v1976 = vpack.c.b16 %v1934, %v1932
    %v1977 = vpack.c.b16 %v1937, %v1935
    %v1978 = vpack.c.b16 %v1938, %v1936
    %v1979 = vpack.c.b16 %v1941, %v1939
    %v1980 = vpack.c.b16 %v1942, %v1940
    %v1981 = vpack.c.b16 %v1945, %v1943
    %v1982 = vpack.c.b16 %v1946, %v1944
    %v1983 = vpack.c.b16 %v1949, %v1947
    %v1984 = vpack.c.b16 %v1950, %v1948
    %v1985 = vpack.c.b16 %v1953, %v1951
    %v1986 = vpack.c.b16 %v1954, %v1952
    %2019 = vmatprep.subr.bf16.mxu0 %v1956
    %2020 = vmatpush1.bf16.msra.mxu0 %v1955
    %2021 = vmatprep.subr.bf16.mxu0 %v1958
    %2022 = vmatpush1.bf16.msra.mxu0 %v1957
    %2023 = vmatprep.subr.bf16.mxu0 %v1960
    %2024 = vmatpush1.bf16.msra.mxu0 %v1959
    %2025 = vmatprep.subr.bf16.mxu0 %v1962
    %2026 = vmatpush1.bf16.msra.mxu0 %v1961
    %2027 = vmatprep.subr.bf16.mxu0 %v1964
    %2028 = vmatpush1.bf16.msra.mxu0 %v1963
    %2029 = vmatprep.subr.bf16.mxu0 %v1966
    %2030 = vmatpush1.bf16.msra.mxu0 %v1965
    %2031 = vmatprep.subr.bf16.mxu0 %v1968
    %2032 = vmatpush1.bf16.msra.mxu0 %v1967
    %2033 = vmatprep.subr.bf16.mxu0 %v1970
    %2034 = vmatpush1.bf16.msra.mxu0 %v1969
    %2035 = vmatprep.subr.bf16.mxu0 %v1972
    %2036 = vmatpush1.bf16.msra.mxu0 %v1971
    %2037 = vmatprep.subr.bf16.mxu0 %v1974
    %2038 = vmatpush1.bf16.msra.mxu0 %v1973
    %2039 = vmatprep.subr.bf16.mxu0 %v1976
    %2040 = vmatpush1.bf16.msra.mxu0 %v1975
    %2041 = vmatprep.subr.bf16.mxu0 %v1978
    %2042 = vmatpush1.bf16.msra.mxu0 %v1977
    %2043 = vmatprep.subr.bf16.mxu0 %v1980
    %2044 = vmatpush1.bf16.msra.mxu0 %v1979
    %2045 = vmatprep.subr.bf16.mxu0 %v1982
    %2046 = vmatpush1.bf16.msra.mxu0 %v1981
    %2047 = vmatprep.subr.bf16.mxu0 %v1984
    %2048 = vmatpush1.bf16.msra.mxu0 %v1983
    %2049 = vmatprep.subr.bf16.mxu0 %v1986
    %2050 = vmatpush1.bf16.msra.mxu0 %v1985
    %2051 = vmatprep.mubr.bf16.mxu0 %v1826
    %2052 = vmatmul.mubr.bf16.gmra.mrb[0].mxu0 %v1825
    %v2053 = vpop.f32.mrb[0].mxu0
    %v2054 = vadd.f32 %v990, %v2053
    %v2055 = vpop.f32.mrb[0].mxu0
    %v2056 = vadd.f32 %v994, %v2055
    %v2057 = vpop.f32.mrb[0].mxu0
    %v2058 = vpop.f32.mrb[0].mxu0
    %2059 = vdwg.mxu0
    %v2060 = vxor.u32 %v2054, 2147483648
    %v2061 = vxor.u32 %v2056, 2147483648
    %v2062 = vmul.f32 %v2060, 1.442695
    %v2063 = vpow.pop %v2062
    %v2064 = vmul.f32 %v2061, 1.442695
    %v2065 = vpow.pop %v2064
    %v2066 = vadd.f32 %v2063, 1.0
    %v2067 = vadd.f32 %v2065, 1.0
    %v2068 = vrcp.pop %v2066
    %v2069 = vmul.f32 1.0, %v2068
    %v2070 = vrcp.pop %v2067
    %v2071 = vmul.f32 1.0, %v2070
    %v2072 = vtanh.pop %v2056
    %v2073 = vmul.f32 %v2069, %v1235
    %2075 = vrot.lane.b32.xlu0 %v2072, 64
    %v2076 = vpop.permute.xlu0 %2075
    %v2078 = vmul.f32 %v2069, %v2076
    %2080 = vrot.lane.b32.xlu0 %v2078, 64
    %v2081 = vpop.permute.xlu0 %2080
    %v2083 = vadd.f32 %v2073, %v2081
    %v2084 = vtanh.pop %v2083
    %2086 = vrot.lane.b32.xlu0 %v2084, 64
    %v2087 = vpop.permute.xlu0 %2086
    %v2089 = vmul.f32 %v2071, %v2087
    %vm2090 = vcmp.gt.f32.partialorder %v1398, 0.0
    %v2091 = vsel %vm2090, 1, 0
    %2092 = vset.pattern.permute.xlu0 0
    %2093 = vperm.xlu0 %2092, %v2091
    %v2094 = vpop.permute.xlu0 %2093
    %vm2095 = vcmp.eq.s32.totalorder %v2094, 1
    %v2096 = vsel %vm2095, %v2089, %v1234
    %v2097 = vsel %vm2095, %v2083, %v1235
    %v2098 = vpack.c.bf16 %v2089, %v2089
    %v2100 = vsel %vm504, %v2098, 0
    %2102 = vmatprep.subr.bf16.mxu0 0
    %2103 = vmatpush1.bf16.msra.mxu0 %v1259
    %2104 = vmatprep.subr.bf16.mxu0 0
    %2105 = vmatpush1.bf16.msra.mxu0 %v1260
    %2106 = vmatprep.subr.bf16.mxu0 0
    %2107 = vmatpush1.bf16.msra.mxu0 %v1261
    %2108 = vmatprep.subr.bf16.mxu0 0
    %2109 = vmatpush1.bf16.msra.mxu0 %v1262
    %2110 = vmatprep.subr.bf16.mxu0 0
    %2111 = vmatpush1.bf16.msra.mxu0 0
    %2112 = vmatprep.subr.bf16.mxu0 0
    %2113 = vmatpush1.bf16.msra.mxu0 0
    %2114 = vmatprep.subr.bf16.mxu0 0
    %2115 = vmatpush1.bf16.msra.mxu0 0
    %2116 = vmatprep.subr.bf16.mxu0 0
    %2117 = vmatpush1.bf16.msra.mxu0 0
    %2118 = vmatprep.subr.bf16.mxu0 0
    %2119 = vmatpush1.bf16.msra.mxu0 0
    %2120 = vmatprep.subr.bf16.mxu0 0
    %2121 = vmatpush1.bf16.msra.mxu0 0
    %2122 = vmatprep.subr.bf16.mxu0 0
    %2123 = vmatpush1.bf16.msra.mxu0 0
    %2124 = vmatprep.subr.bf16.mxu0 0
    %2125 = vmatpush1.bf16.msra.mxu0 0
    %2126 = vmatprep.subr.bf16.mxu0 0
    %2127 = vmatpush1.bf16.msra.mxu0 0
    %2128 = vmatprep.subr.bf16.mxu0 0
    %2129 = vmatpush1.bf16.msra.mxu0 0
    %2130 = vmatprep.subr.bf16.mxu0 0
    %2131 = vmatpush1.bf16.msra.mxu0 0
    %2132 = vmatprep.subr.bf16.mxu0 0
    %2133 = vmatpush1.bf16.msra.mxu0 0
    %2134 = vmatprep.mubr.bf16.mxu0 0
    %2135 = vmatmul.mubr.bf16.gmra.mrb[0].mxu0 %v2100
    %v2136 = vpop.f32.mrb[0].mxu0
    %v2137 = vadd.f32 %v1241, %v2136
    %v2138 = vpop.f32.mrb[0].mxu0
    %v2139 = vpop.f32.mrb[0].mxu0
    %v2140 = vpop.f32.mrb[0].mxu0
    %2141 = vdwg.mxu0
    %2143 = vset.pattern.permute.xlu0 0
    %2144 = vperm.xlu0 %2143, %v1398
    %v2145 = vpop.permute.xlu0 %2144
    %v2147 = vmul.f32 %v2137, %v2145
    %v2150 = vunpack.c.l.s4 1966171168
    %v2151 = vunpack.c.0.s8 %v2150
    %v2152 = vlaneseq
    %v2153 = vshrl.u32 %v2152, 7
    %v2154 = vsub.s32 %v2151, %v2153
    %v2155 = vrot.slane %v2147, %v2154
    %v2156 = vcombine.high %v2155, %v2155
    %v2158 = vunpack.c.l.s4 1966171168
    %v2159 = vunpack.c.0.s8 %v2158
    %v2160 = vlaneseq
    %v2161 = vshrl.u32 %v2160, 7
    %v2162 = vsub.s32 %v2159, %v2161
    %v2163 = vrot.slane %v2155, %v2162
    %v2165 = vunpack.c.l.s4 1966171168
    %v2166 = vunpack.c.0.s8 %v2165
    %v2167 = vlaneseq
    %v2168 = vshrl.u32 %v2167, 7
    %v2169 = vsub.s32 %v2166, %v2168
    %v2170 = vrot.slane %v2156, %v2169
    %2173 = vst.msk [vmem:[%s18 + $0x1] sm:$0x1] %vm1341, %v2163
    %2174 = vst.msk [vmem:[%s18 + $0x9] sm:$0x1] %vm1341, %v2170
    %v2175 = vlaneseq
    %v2176 = vshrl.u32 %v2175, 7
    %v2177 = vsub.s32 0, %v2176
    %v2178 = vrot.slane %v2145, %v2177
    %v2179 = vlaneseq
    %v2180 = vshrl.u32 %v2179, 7
    %v2181 = vsub.s32 1, %v2180
    %v2182 = vrot.slane %v2145, %v2181
    %v2185 = vmul.f32 %v1618, %v2178
    %v2186 = vmul.f32 %v1619, %v2178
    %v2187 = vmul.f32 %v1620, %v2182
    %v2188 = vmul.f32 %v1621, %v2182
    %2193 = vset.pattern.permute.xlu0 0
    %2194 = vperm.xlu0 %2193, %v2185
    %v2195 = vpop.permute.xlu0 %2194
    %2196 = vset.pattern.permute.xlu0 0
    %2197 = vperm.xlu0 %2196, %v2186
    %v2198 = vpop.permute.xlu0 %2197
    %2199 = vset.pattern.permute.xlu0 0
    %2200 = vperm.xlu0 %2199, %v2187
    %v2201 = vpop.permute.xlu0 %2200
    %2202 = vset.pattern.permute.xlu0 0
    %2203 = vperm.xlu0 %2202, %v2188
    %v2204 = vpop.permute.xlu0 %2203
    %v2205 = vlaneseq
    %v2206 = vshrl.u32 %v2205, 7
    %v2207 = vsub.s32 %v642, %v2206
    %v2208 = vrot.slane %v2195, %v2207
    %v2209 = vlaneseq
    %v2210 = vshrl.u32 %v2209, 7
    %v2211 = vsub.s32 %v647, %v2210
    %v2212 = vrot.slane %v2198, %v2211
    %v2213 = vsel %vm652, %v2212, %v2208
    %v2214 = vlaneseq
    %v2215 = vshrl.u32 %v2214, 7
    %v2216 = vsub.s32 %v642, %v2215
    %v2217 = vrot.slane %v2201, %v2216
    %v2218 = vlaneseq
    %v2219 = vshrl.u32 %v2218, 7
    %v2220 = vsub.s32 %v647, %v2219
    %v2221 = vrot.slane %v2204, %v2220
    %v2222 = vsel %vm652, %v2221, %v2217
    %2225 = vst.msk [vmem:[%s19 + $0x1] sm:$0x1] %vm1394, %v2213
    %2226 = vst.msk [vmem:[%s19 + $0x9] sm:$0x1] %vm1394, %v2222
    %s2227 = scalar_lea.vmem %s2, 4
    %v2228 = vld [vmem:[%s2227] sm:$0x3]
    %v2229 = vpack.c.bf16 %v2096, %v2096
    %v2231 = vsel %vm504, %v2229, 0
    %2233 = vmatprep.subr.bf16.mxu0 %v489
    %2234 = vmatpush1.bf16.msra.mxu0 %v488
    %2235 = vmatprep.subr.bf16.mxu0 %v491
    %2236 = vmatpush1.bf16.msra.mxu0 %v490
    %2237 = vmatprep.subr.bf16.mxu0 %v493
    %2238 = vmatpush1.bf16.msra.mxu0 %v492
    %2239 = vmatprep.subr.bf16.mxu0 %v495
    %2240 = vmatpush1.bf16.msra.mxu0 %v494
    %2241 = vmatprep.subr.bf16.mxu0 0
    %2242 = vmatpush1.bf16.msra.mxu0 0
    %2243 = vmatprep.subr.bf16.mxu0 0
    %2244 = vmatpush1.bf16.msra.mxu0 0
    %2245 = vmatprep.subr.bf16.mxu0 0
    %2246 = vmatpush1.bf16.msra.mxu0 0
    %2247 = vmatprep.subr.bf16.mxu0 0
    %2248 = vmatpush1.bf16.msra.mxu0 0
    %2249 = vmatprep.subr.bf16.mxu0 0
    %2250 = vmatpush1.bf16.msra.mxu0 0
    %2251 = vmatprep.subr.bf16.mxu0 0
    %2252 = vmatpush1.bf16.msra.mxu0 0
    %2253 = vmatprep.subr.bf16.mxu0 0
    %2254 = vmatpush1.bf16.msra.mxu0 0
    %2255 = vmatprep.subr.bf16.mxu0 0
    %2256 = vmatpush1.bf16.msra.mxu0 0
    %2257 = vmatprep.subr.bf16.mxu0 0
    %2258 = vmatpush1.bf16.msra.mxu0 0
    %2259 = vmatprep.subr.bf16.mxu0 0
    %2260 = vmatpush1.bf16.msra.mxu0 0
    %2261 = vmatprep.subr.bf16.mxu0 0
    %2262 = vmatpush1.bf16.msra.mxu0 0
    %2263 = vmatprep.subr.bf16.mxu0 0
    %2264 = vmatpush1.bf16.msra.mxu0 0
    %2265 = vmatprep.mubr.bf16.mxu0 0
    %2266 = vmatmul.mubr.bf16.gmra.mrb[0].mxu0 %v2231
    %v2267 = vpop.f32.mrb[0].mxu0
    %v2268 = vadd.f32 %v457, %v2267
    %v2269 = vpop.f32.mrb[0].mxu0
    %v2270 = vadd.f32 %v461, %v2269
    %v2271 = vpop.f32.mrb[0].mxu0
    %v2272 = vpop.f32.mrb[0].mxu0
    %2273 = vdwg.mxu0
    %v2274 = vxor.u32 %v2268, 2147483648
    %v2275 = vxor.u32 %v2270, 2147483648
    %v2276 = vmul.f32 %v2274, 1.442695
    %v2277 = vpow.pop %v2276
    %v2278 = vmul.f32 %v2275, 1.442695
    %v2279 = vpow.pop %v2278
    %v2280 = vadd.f32 %v2277, 1.0
    %v2281 = vadd.f32 %v2279, 1.0
    %v2282 = vrcp.pop %v2280
    %v2283 = vmul.f32 1.0, %v2282
    %v2284 = vrcp.pop %v2281
    %v2285 = vmul.f32 1.0, %v2284
    %v2288 = vunpack.c.l.s4 1966171168
    %v2289 = vunpack.c.0.s8 %v2288
    %v2290 = vlaneseq
    %v2291 = vshrl.u32 %v2290, 7
    %v2292 = vsub.s32 %v2289, %v2291
    %v2293 = vrot.slane %v2268, %v2292
    %v2294 = vcombine.high %v2293, %v2293
    %v2296 = vunpack.c.l.s4 1966171168
    %v2297 = vunpack.c.0.s8 %v2296
    %v2298 = vlaneseq
    %v2299 = vshrl.u32 %v2298, 7
    %v2300 = vsub.s32 %v2297, %v2299
    %v2301 = vrot.slane %v2293, %v2300
    %v2303 = vunpack.c.l.s4 1966171168
    %v2304 = vunpack.c.0.s8 %v2303
    %v2305 = vlaneseq
    %v2306 = vshrl.u32 %v2305, 7
    %v2307 = vsub.s32 %v2304, %v2306
    %v2308 = vrot.slane %v2294, %v2307
    %v2309 = vlaneseq
    %v2310 = vshrl.u32 %v2309, 7
    %v2311 = vsub.s32 0, %v2310
    %v2312 = vrot.slane %v2301, %v2311
    %v2313 = vlaneseq
    %v2314 = vshrl.u32 %v2313, 7
    %v2315 = vsub.s32 0, %v2314
    %v2316 = vrot.slane %v2308, %v2315
    %v2319 = vadd.f32 %v278, %v2312
    %v2320 = vadd.f32 %v281, %v2312
    %v2321 = vadd.f32 %v286, %v2316
    %v2322 = vadd.f32 %v289, %v2316
    %v2323 = vmax.f32 %v2319, 0.0
    %v2324 = vmax.f32 %v2320, 0.0
    %v2325 = vmax.f32 %v2321, 0.0
    %v2326 = vmax.f32 %v2322, 0.0
    %v2327 = vmul.f32 %v2323, %v606
    %v2328 = vmul.f32 %v2324, %v606
    %v2329 = vmul.f32 %v2325, %v606
    %v2330 = vmul.f32 %v2326, %v606
    %v2331 = vsel %vm504, %v2327, 0.0
    %2332 = vadd.xlane.f32.xlu0 %v2331
    %v2333 = vpop.xlane.xlu0 %2332
    %v2334 = vsel %vm504, %v2328, 0.0
    %2335 = vadd.xlane.f32.xlu0 %v2334
    %v2336 = vpop.xlane.xlu0 %2335
    %v2337 = vsel %vm504, %v2329, 0.0
    %2338 = vadd.xlane.f32.xlu0 %v2337
    %v2339 = vpop.xlane.xlu0 %2338
    %v2340 = vsel %vm504, %v2330, 0.0
    %2341 = vadd.xlane.f32.xlu0 %v2340
    %v2342 = vpop.xlane.xlu0 %2341
    %v2343 = vadd.f32 %v2333, %v631
    %v2344 = vadd.f32 %v2336, %v631
    %v2345 = vadd.f32 %v2339, %v631
    %v2346 = vadd.f32 %v2342, %v631
    %v2351 = vlaneseq
    %v2352 = vshrl.u32 %v2351, 7
    %v2353 = vsub.s32 %v642, %v2352
    %v2354 = vrot.slane %v2343, %v2353
    %v2355 = vlaneseq
    %v2356 = vshrl.u32 %v2355, 7
    %v2357 = vsub.s32 %v647, %v2356
    %v2358 = vrot.slane %v2344, %v2357
    %v2359 = vsel %vm652, %v2358, %v2354
    %v2360 = vlaneseq
    %v2361 = vshrl.u32 %v2360, 7
    %v2362 = vsub.s32 %v642, %v2361
    %v2363 = vrot.slane %v2345, %v2362
    %v2364 = vlaneseq
    %v2365 = vshrl.u32 %v2364, 7
    %v2366 = vsub.s32 %v647, %v2365
    %v2367 = vrot.slane %v2346, %v2366
    %v2368 = vsel %vm652, %v2367, %v2363
    %v2369 = vsel %vm338, %v2368, %v2359
    %v2371 = vsel %vm665, %v2369, -inf
    %2372 = vmax.xlane.f32.xlu0 %v2371
    %v2373 = vpop.xlane.xlu0 %2372
    %v2375 = vlaneseq
    %v2376 = vshrl.u32 %v2375, 7
    %v2377 = vsub.s32 0, %v2376
    %v2378 = vrot.slane %v2373, %v2377
    %v2379 = vlaneseq
    %v2380 = vshrl.u32 %v2379, 7
    %v2381 = vsub.s32 1, %v2380
    %v2382 = vrot.slane %v2373, %v2381
    %v2385 = vsub.f32 %v2343, %v2378
    %v2386 = vsub.f32 %v2344, %v2378
    %v2387 = vsub.f32 %v2345, %v2382
    %v2388 = vsub.f32 %v2346, %v2382
    %v2389 = vmul.f32 %v2385, 1.442695
    %v2390 = vpow.pop %v2389
    %v2391 = vmul.f32 %v2386, 1.442695
    %v2392 = vpow.pop %v2391
    %v2393 = vmul.f32 %v2387, 1.442695
    %v2394 = vpow.pop %v2393
    %v2395 = vmul.f32 %v2388, 1.442695
    %v2396 = vpow.pop %v2395
    %2401 = vset.pattern.permute.xlu0 0
    %2402 = vperm.xlu0 %2401, %v2390
    %v2403 = vpop.permute.xlu0 %2402
    %2404 = vset.pattern.permute.xlu0 0
    %2405 = vperm.xlu0 %2404, %v2392
    %v2406 = vpop.permute.xlu0 %2405
    %2407 = vset.pattern.permute.xlu0 0
    %2408 = vperm.xlu0 %2407, %v2394
    %v2409 = vpop.permute.xlu0 %2408
    %2410 = vset.pattern.permute.xlu0 0
    %2411 = vperm.xlu0 %2410, %v2396
    %v2412 = vpop.permute.xlu0 %2411
    %v2413 = vlaneseq
    %v2414 = vshrl.u32 %v2413, 7
    %v2415 = vsub.s32 %v642, %v2414
    %v2416 = vrot.slane %v2403, %v2415
    %v2417 = vlaneseq
    %v2418 = vshrl.u32 %v2417, 7
    %v2419 = vsub.s32 %v647, %v2418
    %v2420 = vrot.slane %v2406, %v2419
    %v2421 = vsel %vm652, %v2420, %v2416
    %v2422 = vlaneseq
    %v2423 = vshrl.u32 %v2422, 7
    %v2424 = vsub.s32 %v642, %v2423
    %v2425 = vrot.slane %v2409, %v2424
    %v2426 = vlaneseq
    %v2427 = vshrl.u32 %v2426, 7
    %v2428 = vsub.s32 %v647, %v2427
    %v2429 = vrot.slane %v2412, %v2428
    %v2430 = vsel %vm652, %v2429, %v2425
    %v2431 = vsel %vm338, %v2430, %v2421
    %v2433 = vsel %vm665, %v2431, 0.0
    %2434 = vadd.xlane.f32.xlu0 %v2433
    %v2435 = vpop.xlane.xlu0 %2434
    %v2436 = vrcp.pop %v2435
    %v2438 = vlaneseq
    %v2439 = vshrl.u32 %v2438, 7
    %v2440 = vsub.s32 0, %v2439
    %v2441 = vrot.slane %v2436, %v2440
    %v2442 = vlaneseq
    %v2443 = vshrl.u32 %v2442, 7
    %v2444 = vsub.s32 1, %v2443
    %v2445 = vrot.slane %v2436, %v2444
    %v2448 = vmul.f32 %v2390, %v2441
    %v2449 = vmul.f32 %v2392, %v2441
    %v2450 = vmul.f32 %v2394, %v2445
    %v2451 = vmul.f32 %v2396, %v2445
    %2454 = vset.pattern.permute.xlu0 0
    %2455 = vperm.xlu0 %2454, %v2448
    %v2456 = vpop.permute.xlu0 %2455
    %2457 = vset.pattern.permute.xlu0 0
    %2458 = vperm.xlu0 %2457, %v2449
    %v2459 = vpop.permute.xlu0 %2458
    %v2460 = vlaneseq
    %v2461 = vshrl.u32 %v2460, 7
    %v2462 = vsub.s32 %v642, %v2461
    %v2463 = vrot.slane %v2456, %v2462
    %v2464 = vlaneseq
    %v2465 = vshrl.u32 %v2464, 7
    %v2466 = vsub.s32 %v647, %v2465
    %v2467 = vrot.slane %v2459, %v2466
    %v2468 = vsel %vm652, %v2467, %v2463
    %v2469 = vsel %vm764, %v2468, 0
    %2471 = vmatprep.subr.mxu0 0.0
    %2472 = vmatpush1.msra.mxu0 %v156
    %2473 = vmatprep.subr.mxu0 0.0
    %2474 = vmatpush1.msra.mxu0 %v159
    %2475 = vmatprep.subr.mxu0 0.0
    %2476 = vmatpush1.msra.mxu0 0.0
    %2477 = vmatprep.subr.mxu0 0.0
    %2478 = vmatpush1.msra.mxu0 0.0
    %2479 = vmatprep.subr.mxu0 0.0
    %2480 = vmatpush1.msra.mxu0 0.0
    %2481 = vmatprep.subr.mxu0 0.0
    %2482 = vmatpush1.msra.mxu0 0.0
    %2483 = vmatprep.subr.mxu0 0.0
    %2484 = vmatpush1.msra.mxu0 0.0
    %2485 = vmatprep.subr.mxu0 0.0
    %2486 = vmatpush1.msra.mxu0 0.0
    %2487 = vmatprep.subr.mxu0 0.0
    %2488 = vmatpush1.msra.mxu0 0.0
    %2489 = vmatprep.subr.mxu0 0.0
    %2490 = vmatpush1.msra.mxu0 0.0
    %2491 = vmatprep.subr.mxu0 0.0
    %2492 = vmatpush1.msra.mxu0 0.0
    %2493 = vmatprep.subr.mxu0 0.0
    %2494 = vmatpush1.msra.mxu0 0.0
    %2495 = vmatprep.subr.mxu0 0.0
    %2496 = vmatpush1.msra.mxu0 0.0
    %2497 = vmatprep.subr.mxu0 0.0
    %2498 = vmatpush1.msra.mxu0 0.0
    %2499 = vmatprep.subr.mxu0 0.0
    %2500 = vmatpush1.msra.mxu0 0.0
    %2501 = vmatprep.subr.mxu0 0.0
    %2502 = vmatpush1.msra.mxu0 0.0
    %2503 = vmatprep.subr.mxu0 0.0
    %2504 = vmatpush1.msra.mxu0 0.0
    %2505 = vmatprep.subr.mxu0 0.0
    %2506 = vmatpush1.msra.mxu0 0.0
    %2507 = vmatprep.subr.mxu0 0.0
    %2508 = vmatpush1.msra.mxu0 0.0
    %2509 = vmatprep.subr.mxu0 0.0
    %2510 = vmatpush1.msra.mxu0 0.0
    %2511 = vmatprep.subr.mxu0 0.0
    %2512 = vmatpush1.msra.mxu0 0.0
    %2513 = vmatprep.subr.mxu0 0.0
    %2514 = vmatpush1.msra.mxu0 0.0
    %2515 = vmatprep.subr.mxu0 0.0
    %2516 = vmatpush1.msra.mxu0 0.0
    %2517 = vmatprep.subr.mxu0 0.0
    %2518 = vmatpush1.msra.mxu0 0.0
    %2519 = vmatprep.subr.mxu0 0.0
    %2520 = vmatpush1.msra.mxu0 0.0
    %2521 = vmatprep.subr.mxu0 0.0
    %2522 = vmatpush1.msra.mxu0 0.0
    %2523 = vmatprep.subr.mxu0 0.0
    %2524 = vmatpush1.msra.mxu0 0.0
    %2525 = vmatprep.subr.mxu0 0.0
    %2526 = vmatpush1.msra.mxu0 0.0
    %2527 = vmatprep.subr.mxu0 0.0
    %2528 = vmatpush1.msra.mxu0 0.0
    %2529 = vmatprep.subr.mxu0 0.0
    %2530 = vmatpush1.msra.mxu0 0.0
    %2531 = vmatprep.subr.mxu0 0.0
    %2532 = vmatpush1.msra.mxu0 0.0
    %2533 = vmatprep.subr.mxu0 0.0
    %2534 = vmatpush1.msra.mxu0 0.0
    %2535 = vmatprep.mubr.f32.mxu0 0.0
    %2536 = vmatmul.mubr.f32.gmra.mrb[0].mxu0 %v2469
    %v2537 = vpop.f32.mrb[0].mxu0
    %v2538 = vadd.f32 0.0, %v2537
    %v2539 = vpop.f32.mrb[0].mxu0
    %2540 = vdwg.mxu0
    %2543 = vset.pattern.permute.xlu0 0
    %2544 = vperm.xlu0 %2543, %v2450
    %v2545 = vpop.permute.xlu0 %2544
    %2546 = vset.pattern.permute.xlu0 0
    %2547 = vperm.xlu0 %2546, %v2451
    %v2548 = vpop.permute.xlu0 %2547
    %v2549 = vlaneseq
    %v2550 = vshrl.u32 %v2549, 7
    %v2551 = vsub.s32 %v642, %v2550
    %v2552 = vrot.slane %v2545, %v2551
    %v2553 = vlaneseq
    %v2554 = vshrl.u32 %v2553, 7
    %v2555 = vsub.s32 %v647, %v2554
    %v2556 = vrot.slane %v2548, %v2555
    %v2557 = vsel %vm652, %v2556, %v2552
    %v2558 = vsel %vm764, %v2557, 0
    %2560 = vmatprep.subr.mxu0 0.0
    %2561 = vmatpush1.msra.mxu0 %v164
    %2562 = vmatprep.subr.mxu0 0.0
    %2563 = vmatpush1.msra.mxu0 %v167
    %2564 = vmatprep.subr.mxu0 0.0
    %2565 = vmatpush1.msra.mxu0 0.0
    %2566 = vmatprep.subr.mxu0 0.0
    %2567 = vmatpush1.msra.mxu0 0.0
    %2568 = vmatprep.subr.mxu0 0.0
    %2569 = vmatpush1.msra.mxu0 0.0
    %2570 = vmatprep.subr.mxu0 0.0
    %2571 = vmatpush1.msra.mxu0 0.0
    %2572 = vmatprep.subr.mxu0 0.0
    %2573 = vmatpush1.msra.mxu0 0.0
    %2574 = vmatprep.subr.mxu0 0.0
    %2575 = vmatpush1.msra.mxu0 0.0
    %2576 = vmatprep.subr.mxu0 0.0
    %2577 = vmatpush1.msra.mxu0 0.0
    %2578 = vmatprep.subr.mxu0 0.0
    %2579 = vmatpush1.msra.mxu0 0.0
    %2580 = vmatprep.subr.mxu0 0.0
    %2581 = vmatpush1.msra.mxu0 0.0
    %2582 = vmatprep.subr.mxu0 0.0
    %2583 = vmatpush1.msra.mxu0 0.0
    %2584 = vmatprep.subr.mxu0 0.0
    %2585 = vmatpush1.msra.mxu0 0.0
    %2586 = vmatprep.subr.mxu0 0.0
    %2587 = vmatpush1.msra.mxu0 0.0
    %2588 = vmatprep.subr.mxu0 0.0
    %2589 = vmatpush1.msra.mxu0 0.0
    %2590 = vmatprep.subr.mxu0 0.0
    %2591 = vmatpush1.msra.mxu0 0.0
    %2592 = vmatprep.subr.mxu0 0.0
    %2593 = vmatpush1.msra.mxu0 0.0
    %2594 = vmatprep.subr.mxu0 0.0
    %2595 = vmatpush1.msra.mxu0 0.0
    %2596 = vmatprep.subr.mxu0 0.0
    %2597 = vmatpush1.msra.mxu0 0.0
    %2598 = vmatprep.subr.mxu0 0.0
    %2599 = vmatpush1.msra.mxu0 0.0
    %2600 = vmatprep.subr.mxu0 0.0
    %2601 = vmatpush1.msra.mxu0 0.0
    %2602 = vmatprep.subr.mxu0 0.0
    %2603 = vmatpush1.msra.mxu0 0.0
    %2604 = vmatprep.subr.mxu0 0.0
    %2605 = vmatpush1.msra.mxu0 0.0
    %2606 = vmatprep.subr.mxu0 0.0
    %2607 = vmatpush1.msra.mxu0 0.0
    %2608 = vmatprep.subr.mxu0 0.0
    %2609 = vmatpush1.msra.mxu0 0.0
    %2610 = vmatprep.subr.mxu0 0.0
    %2611 = vmatpush1.msra.mxu0 0.0
    %2612 = vmatprep.subr.mxu0 0.0
    %2613 = vmatpush1.msra.mxu0 0.0
    %2614 = vmatprep.subr.mxu0 0.0
    %2615 = vmatpush1.msra.mxu0 0.0
    %2616 = vmatprep.subr.mxu0 0.0
    %2617 = vmatpush1.msra.mxu0 0.0
    %2618 = vmatprep.subr.mxu0 0.0
    %2619 = vmatpush1.msra.mxu0 0.0
    %2620 = vmatprep.subr.mxu0 0.0
    %2621 = vmatpush1.msra.mxu0 0.0
    %2622 = vmatprep.subr.mxu0 0.0
    %2623 = vmatpush1.msra.mxu0 0.0
    %2624 = vmatprep.mubr.f32.mxu0 0.0
    %2625 = vmatmul.mubr.f32.gmra.mrb[0].mxu0 %v2558
    %v2626 = vpop.f32.mrb[0].mxu0
    %v2627 = vadd.f32 0.0, %v2626
    %v2628 = vpop.f32.mrb[0].mxu0
    %2629 = vdwg.mxu0
    %v2632 = vrot.slane %v2627, 7
    %v2633 = vsel %vm338, %v2632, %v2538
    %2634 = vrot.lane.b32.xlu0 %v2633, 64
    %v2635 = vpop.permute.xlu0 %2634
    %v2637 = vmul.f32 %v2283, %v2635
    %v2638 = vmul.f32 %v2285, %v2635
    %s2639 = sld [smem:[#allocation3 + $0x2]]
    %s2640 = scalar_lea.vmem %s3, %s2639
    %v2641 = vld [vmem:[%s2640] sm:$0x1]
    %s2642 = sld [smem:[#allocation3 + $0x82]]
    %s2643 = scalar_lea.vmem %s3, %s2642
    %v2644 = vld [vmem:[%s2643] sm:$0x1]
    %v2646 = vrot.slane %v2644, 7
    %v2648 = vsel %vm944, %v2641, %v2646
    %2650 = vrot.lane.b32.xlu0 %v2096, 64
    %v2651 = vpop.permute.xlu0 %2650
    %v2653 = vsel %vm504, %v2648, %v2637
    %v2654 = vsel %vm504, %v2638, %v2651
    %v2655 = vpack.c.bf16 %v2653, %v2653
    %v2656 = vpack.c.bf16 %v2654, %v2654
    %v2657 = vld [vmem:[%s14] sm:$0xff]
    %v2658 = vld [vmem:[%s14 + $0x8] sm:$0xff]
    %v2659 = vld [vmem:[%s14 + $0x10] sm:$0xff]
    %v2660 = vld [vmem:[%s14 + $0x18] sm:$0xff]
    %v2661 = vld [vmem:[%s14 + $0x20] sm:$0xff]
    %v2662 = vld [vmem:[%s14 + $0x28] sm:$0xff]
    %v2663 = vld [vmem:[%s14 + $0x30] sm:$0xff]
    %v2664 = vld [vmem:[%s14 + $0x38] sm:$0xff]
    %v2665 = vld [vmem:[%s14 + $0x40] sm:$0xff]
    %v2666 = vld [vmem:[%s14 + $0x48] sm:$0xff]
    %v2667 = vld [vmem:[%s14 + $0x50] sm:$0xff]
    %v2668 = vld [vmem:[%s14 + $0x58] sm:$0xff]
    %v2669 = vld [vmem:[%s14 + $0x60] sm:$0xff]
    %v2670 = vld [vmem:[%s14 + $0x68] sm:$0xff]
    %v2671 = vld [vmem:[%s14 + $0x70] sm:$0xff]
    %v2672 = vld [vmem:[%s14 + $0x78] sm:$0xff]
    %v2673 = vld [vmem:[%s14 + $0x80] sm:$0xff]
    %v2674 = vld [vmem:[%s14 + $0x88] sm:$0xff]
    %v2675 = vld [vmem:[%s14 + $0x90] sm:$0xff]
    %v2676 = vld [vmem:[%s14 + $0x98] sm:$0xff]
    %v2677 = vld [vmem:[%s14 + $0xa0] sm:$0xff]
    %v2678 = vld [vmem:[%s14 + $0xa8] sm:$0xff]
    %v2679 = vld [vmem:[%s14 + $0xb0] sm:$0xff]
    %v2680 = vld [vmem:[%s14 + $0xb8] sm:$0xff]
    %v2681 = vld [vmem:[%s14 + $0xc0] sm:$0xff]
    %v2682 = vld [vmem:[%s14 + $0xc8] sm:$0xff]
    %v2683 = vld [vmem:[%s14 + $0xd0] sm:$0xff]
    %v2684 = vld [vmem:[%s14 + $0xd8] sm:$0xff]
    %v2685 = vld [vmem:[%s14 + $0xe0] sm:$0xff]
    %v2686 = vld [vmem:[%s14 + $0xe8] sm:$0xff]
    %v2687 = vld [vmem:[%s14 + $0xf0] sm:$0xff]
    %v2688 = vld [vmem:[%s14 + $0xf8] sm:$0xff]
    %v2721 = vunpack.c.l.b16 %v2657
    %v2722 = vunpack.c.h.b16 %v2657
    %v2723 = vunpack.c.l.b16 %v2658
    %v2724 = vunpack.c.h.b16 %v2658
    %v2725 = vunpack.c.l.b16 %v2659
    %v2726 = vunpack.c.h.b16 %v2659
    %v2727 = vunpack.c.l.b16 %v2660
    %v2728 = vunpack.c.h.b16 %v2660
    %v2729 = vunpack.c.l.b16 %v2661
    %v2730 = vunpack.c.h.b16 %v2661
    %v2731 = vunpack.c.l.b16 %v2662
    %v2732 = vunpack.c.h.b16 %v2662
    %v2733 = vunpack.c.l.b16 %v2663
    %v2734 = vunpack.c.h.b16 %v2663
    %v2735 = vunpack.c.l.b16 %v2664
    %v2736 = vunpack.c.h.b16 %v2664
    %v2737 = vunpack.c.l.b16 %v2665
    %v2738 = vunpack.c.h.b16 %v2665
    %v2739 = vunpack.c.l.b16 %v2666
    %v2740 = vunpack.c.h.b16 %v2666
    %v2741 = vunpack.c.l.b16 %v2667
    %v2742 = vunpack.c.h.b16 %v2667
    %v2743 = vunpack.c.l.b16 %v2668
    %v2744 = vunpack.c.h.b16 %v2668
    %v2745 = vunpack.c.l.b16 %v2669
    %v2746 = vunpack.c.h.b16 %v2669
    %v2747 = vunpack.c.l.b16 %v2670
    %v2748 = vunpack.c.h.b16 %v2670
    %v2749 = vunpack.c.l.b16 %v2671
    %v2750 = vunpack.c.h.b16 %v2671
    %v2751 = vunpack.c.l.b16 %v2672
    %v2752 = vunpack.c.h.b16 %v2672
    %v2753 = vunpack.c.l.b16 %v2673
    %v2754 = vunpack.c.h.b16 %v2673
    %v2755 = vunpack.c.l.b16 %v2674
    %v2756 = vunpack.c.h.b16 %v2674
    %v2757 = vunpack.c.l.b16 %v2675
    %v2758 = vunpack.c.h.b16 %v2675
    %v2759 = vunpack.c.l.b16 %v2676
    %v2760 = vunpack.c.h.b16 %v2676
    %v2761 = vunpack.c.l.b16 %v2677
    %v2762 = vunpack.c.h.b16 %v2677
    %v2763 = vunpack.c.l.b16 %v2678
    %v2764 = vunpack.c.h.b16 %v2678
    %v2765 = vunpack.c.l.b16 %v2679
    %v2766 = vunpack.c.h.b16 %v2679
    %v2767 = vunpack.c.l.b16 %v2680
    %v2768 = vunpack.c.h.b16 %v2680
    %v2769 = vunpack.c.l.b16 %v2681
    %v2770 = vunpack.c.h.b16 %v2681
    %v2771 = vunpack.c.l.b16 %v2682
    %v2772 = vunpack.c.h.b16 %v2682
    %v2773 = vunpack.c.l.b16 %v2683
    %v2774 = vunpack.c.h.b16 %v2683
    %v2775 = vunpack.c.l.b16 %v2684
    %v2776 = vunpack.c.h.b16 %v2684
    %v2777 = vunpack.c.l.b16 %v2685
    %v2778 = vunpack.c.h.b16 %v2685
    %v2779 = vunpack.c.l.b16 %v2686
    %v2780 = vunpack.c.h.b16 %v2686
    %v2781 = vunpack.c.l.b16 %v2687
    %v2782 = vunpack.c.h.b16 %v2687
    %v2783 = vunpack.c.l.b16 %v2688
    %v2784 = vunpack.c.h.b16 %v2688
    %v2785 = vpack.c.b16 %v2723, %v2721
    %v2786 = vpack.c.b16 %v2724, %v2722
    %v2787 = vpack.c.b16 %v2727, %v2725
    %v2788 = vpack.c.b16 %v2728, %v2726
    %v2789 = vpack.c.b16 %v2731, %v2729
    %v2790 = vpack.c.b16 %v2732, %v2730
    %v2791 = vpack.c.b16 %v2735, %v2733
    %v2792 = vpack.c.b16 %v2736, %v2734
    %v2793 = vpack.c.b16 %v2739, %v2737
    %v2794 = vpack.c.b16 %v2740, %v2738
    %v2795 = vpack.c.b16 %v2743, %v2741
    %v2796 = vpack.c.b16 %v2744, %v2742
    %v2797 = vpack.c.b16 %v2747, %v2745
    %v2798 = vpack.c.b16 %v2748, %v2746
    %v2799 = vpack.c.b16 %v2751, %v2749
    %v2800 = vpack.c.b16 %v2752, %v2750
    %v2801 = vpack.c.b16 %v2755, %v2753
    %v2802 = vpack.c.b16 %v2756, %v2754
    %v2803 = vpack.c.b16 %v2759, %v2757
    %v2804 = vpack.c.b16 %v2760, %v2758
    %v2805 = vpack.c.b16 %v2763, %v2761
    %v2806 = vpack.c.b16 %v2764, %v2762
    %v2807 = vpack.c.b16 %v2767, %v2765
    %v2808 = vpack.c.b16 %v2768, %v2766
    %v2809 = vpack.c.b16 %v2771, %v2769
    %v2810 = vpack.c.b16 %v2772, %v2770
    %v2811 = vpack.c.b16 %v2775, %v2773
    %v2812 = vpack.c.b16 %v2776, %v2774
    %v2813 = vpack.c.b16 %v2779, %v2777
    %v2814 = vpack.c.b16 %v2780, %v2778
    %v2815 = vpack.c.b16 %v2783, %v2781
    %v2816 = vpack.c.b16 %v2784, %v2782
    %2849 = vmatprep.subr.bf16.mxu0 %v2786
    %2850 = vmatpush1.bf16.msra.mxu0 %v2785
    %2851 = vmatprep.subr.bf16.mxu0 %v2788
    %2852 = vmatpush1.bf16.msra.mxu0 %v2787
    %2853 = vmatprep.subr.bf16.mxu0 %v2790
    %2854 = vmatpush1.bf16.msra.mxu0 %v2789
    %2855 = vmatprep.subr.bf16.mxu0 %v2792
    %2856 = vmatpush1.bf16.msra.mxu0 %v2791
    %2857 = vmatprep.subr.bf16.mxu0 %v2794
    %2858 = vmatpush1.bf16.msra.mxu0 %v2793
    %2859 = vmatprep.subr.bf16.mxu0 %v2796
    %2860 = vmatpush1.bf16.msra.mxu0 %v2795
    %2861 = vmatprep.subr.bf16.mxu0 %v2798
    %2862 = vmatpush1.bf16.msra.mxu0 %v2797
    %2863 = vmatprep.subr.bf16.mxu0 %v2800
    %2864 = vmatpush1.bf16.msra.mxu0 %v2799
    %2865 = vmatprep.subr.bf16.mxu0 %v2802
    %2866 = vmatpush1.bf16.msra.mxu0 %v2801
    %2867 = vmatprep.subr.bf16.mxu0 %v2804
    %2868 = vmatpush1.bf16.msra.mxu0 %v2803
    %2869 = vmatprep.subr.bf16.mxu0 %v2806
    %2870 = vmatpush1.bf16.msra.mxu0 %v2805
    %2871 = vmatprep.subr.bf16.mxu0 %v2808
    %2872 = vmatpush1.bf16.msra.mxu0 %v2807
    %2873 = vmatprep.subr.bf16.mxu0 %v2810
    %2874 = vmatpush1.bf16.msra.mxu0 %v2809
    %2875 = vmatprep.subr.bf16.mxu0 %v2812
    %2876 = vmatpush1.bf16.msra.mxu0 %v2811
    %2877 = vmatprep.subr.bf16.mxu0 %v2814
    %2878 = vmatpush1.bf16.msra.mxu0 %v2813
    %2879 = vmatprep.subr.bf16.mxu0 %v2816
    %2880 = vmatpush1.bf16.msra.mxu0 %v2815
    %2881 = vmatprep.mubr.bf16.mxu0 %v2656
    %2882 = vmatmul.mubr.bf16.gmra.mrb[0].mxu0 %v2655
    %v2883 = vpop.f32.mrb[0].mxu0
    %v2884 = vadd.f32 %v990, %v2883
    %v2885 = vpop.f32.mrb[0].mxu0
    %v2886 = vadd.f32 %v994, %v2885
    %v2887 = vpop.f32.mrb[0].mxu0
    %v2888 = vpop.f32.mrb[0].mxu0
    %2889 = vdwg.mxu0
    %v2890 = vxor.u32 %v2884, 2147483648
    %v2891 = vxor.u32 %v2886, 2147483648
    %v2892 = vmul.f32 %v2890, 1.442695
    %v2893 = vpow.pop %v2892
    %v2894 = vmul.f32 %v2891, 1.442695
    %v2895 = vpow.pop %v2894
    %v2896 = vadd.f32 %v2893, 1.0
    %v2897 = vadd.f32 %v2895, 1.0
    %v2898 = vrcp.pop %v2896
    %v2899 = vmul.f32 1.0, %v2898
    %v2900 = vrcp.pop %v2897
    %v2901 = vmul.f32 1.0, %v2900
    %v2902 = vtanh.pop %v2886
    %v2903 = vmul.f32 %v2899, %v2097
    %2905 = vrot.lane.b32.xlu0 %v2902, 64
    %v2906 = vpop.permute.xlu0 %2905
    %v2908 = vmul.f32 %v2899, %v2906
    %2910 = vrot.lane.b32.xlu0 %v2908, 64
    %v2911 = vpop.permute.xlu0 %2910
    %v2913 = vadd.f32 %v2903, %v2911
    %v2914 = vtanh.pop %v2913
    %2916 = vrot.lane.b32.xlu0 %v2914, 64
    %v2917 = vpop.permute.xlu0 %2916
    %v2919 = vmul.f32 %v2901, %v2917
    %vm2920 = vcmp.gt.f32.partialorder %v2228, 0.0
    %v2921 = vsel %vm2920, 1, 0
    %2922 = vset.pattern.permute.xlu0 0
    %2923 = vperm.xlu0 %2922, %v2921
    %v2924 = vpop.permute.xlu0 %2923
    %vm2925 = vcmp.eq.s32.totalorder %v2924, 1
    %v2926 = vsel %vm2925, %v2919, %v2096
    %v2927 = vsel %vm2925, %v2913, %v2097
    %v2928 = vpack.c.bf16 %v2919, %v2919
    %v2930 = vsel %vm504, %v2928, 0
    %2932 = vmatprep.subr.bf16.mxu0 0
    %2933 = vmatpush1.bf16.msra.mxu0 %v1259
    %2934 = vmatprep.subr.bf16.mxu0 0
    %2935 = vmatpush1.bf16.msra.mxu0 %v1260
    %2936 = vmatprep.subr.bf16.mxu0 0
    %2937 = vmatpush1.bf16.msra.mxu0 %v1261
    %2938 = vmatprep.subr.bf16.mxu0 0
    %2939 = vmatpush1.bf16.msra.mxu0 %v1262
    %2940 = vmatprep.subr.bf16.mxu0 0
    %2941 = vmatpush1.bf16.msra.mxu0 0
    %2942 = vmatprep.subr.bf16.mxu0 0
    %2943 = vmatpush1.bf16.msra.mxu0 0
    %2944 = vmatprep.subr.bf16.mxu0 0
    %2945 = vmatpush1.bf16.msra.mxu0 0
    %2946 = vmatprep.subr.bf16.mxu0 0
    %2947 = vmatpush1.bf16.msra.mxu0 0
    %2948 = vmatprep.subr.bf16.mxu0 0
    %2949 = vmatpush1.bf16.msra.mxu0 0
    %2950 = vmatprep.subr.bf16.mxu0 0
    %2951 = vmatpush1.bf16.msra.mxu0 0
    %2952 = vmatprep.subr.bf16.mxu0 0
    %2953 = vmatpush1.bf16.msra.mxu0 0
    %2954 = vmatprep.subr.bf16.mxu0 0
    %2955 = vmatpush1.bf16.msra.mxu0 0
    %2956 = vmatprep.subr.bf16.mxu0 0
    %2957 = vmatpush1.bf16.msra.mxu0 0
    %2958 = vmatprep.subr.bf16.mxu0 0
    %2959 = vmatpush1.bf16.msra.mxu0 0
    %2960 = vmatprep.subr.bf16.mxu0 0
    %2961 = vmatpush1.bf16.msra.mxu0 0
    %2962 = vmatprep.subr.bf16.mxu0 0
    %2963 = vmatpush1.bf16.msra.mxu0 0
    %2964 = vmatprep.mubr.bf16.mxu0 0
    %2965 = vmatmul.mubr.bf16.gmra.mrb[0].mxu0 %v2930
    %v2966 = vpop.f32.mrb[0].mxu0
    %v2967 = vadd.f32 %v1241, %v2966
    %v2968 = vpop.f32.mrb[0].mxu0
    %v2969 = vpop.f32.mrb[0].mxu0
    %v2970 = vpop.f32.mrb[0].mxu0
    %2971 = vdwg.mxu0
    %2973 = vset.pattern.permute.xlu0 0
    %2974 = vperm.xlu0 %2973, %v2228
    %v2975 = vpop.permute.xlu0 %2974
    %v2977 = vmul.f32 %v2967, %v2975
    %v2980 = vunpack.c.l.s4 1966171168
    %v2981 = vunpack.c.0.s8 %v2980
    %v2982 = vlaneseq
    %v2983 = vshrl.u32 %v2982, 7
    %v2984 = vsub.s32 %v2981, %v2983
    %v2985 = vrot.slane %v2977, %v2984
    %v2986 = vcombine.high %v2985, %v2985
    %v2988 = vunpack.c.l.s4 1966171168
    %v2989 = vunpack.c.0.s8 %v2988
    %v2990 = vlaneseq
    %v2991 = vshrl.u32 %v2990, 7
    %v2992 = vsub.s32 %v2989, %v2991
    %v2993 = vrot.slane %v2985, %v2992
    %v2995 = vunpack.c.l.s4 1966171168
    %v2996 = vunpack.c.0.s8 %v2995
    %v2997 = vlaneseq
    %v2998 = vshrl.u32 %v2997, 7
    %v2999 = vsub.s32 %v2996, %v2998
    %v3000 = vrot.slane %v2986, %v2999
    %3003 = vst.msk [vmem:[%s18 + $0x2] sm:$0x1] %vm1341, %v2993
    %3004 = vst.msk [vmem:[%s18 + $0xa] sm:$0x1] %vm1341, %v3000
    %v3005 = vlaneseq
    %v3006 = vshrl.u32 %v3005, 7
    %v3007 = vsub.s32 0, %v3006
    %v3008 = vrot.slane %v2975, %v3007
    %v3009 = vlaneseq
    %v3010 = vshrl.u32 %v3009, 7
    %v3011 = vsub.s32 1, %v3010
    %v3012 = vrot.slane %v2975, %v3011
    %v3015 = vmul.f32 %v2448, %v3008
    %v3016 = vmul.f32 %v2449, %v3008
    %v3017 = vmul.f32 %v2450, %v3012
    %v3018 = vmul.f32 %v2451, %v3012
    %3023 = vset.pattern.permute.xlu0 0
    %3024 = vperm.xlu0 %3023, %v3015
    %v3025 = vpop.permute.xlu0 %3024
    %3026 = vset.pattern.permute.xlu0 0
    %3027 = vperm.xlu0 %3026, %v3016
    %v3028 = vpop.permute.xlu0 %3027
    %3029 = vset.pattern.permute.xlu0 0
    %3030 = vperm.xlu0 %3029, %v3017
    %v3031 = vpop.permute.xlu0 %3030
    %3032 = vset.pattern.permute.xlu0 0
    %3033 = vperm.xlu0 %3032, %v3018
    %v3034 = vpop.permute.xlu0 %3033
    %v3035 = vlaneseq
    %v3036 = vshrl.u32 %v3035, 7
    %v3037 = vsub.s32 %v642, %v3036
    %v3038 = vrot.slane %v3025, %v3037
    %v3039 = vlaneseq
    %v3040 = vshrl.u32 %v3039, 7
    %v3041 = vsub.s32 %v647, %v3040
    %v3042 = vrot.slane %v3028, %v3041
    %v3043 = vsel %vm652, %v3042, %v3038
    %v3044 = vlaneseq
    %v3045 = vshrl.u32 %v3044, 7
    %v3046 = vsub.s32 %v642, %v3045
    %v3047 = vrot.slane %v3031, %v3046
    %v3048 = vlaneseq
    %v3049 = vshrl.u32 %v3048, 7
    %v3050 = vsub.s32 %v647, %v3049
    %v3051 = vrot.slane %v3034, %v3050
    %v3052 = vsel %vm652, %v3051, %v3047
    %3055 = vst.msk [vmem:[%s19 + $0x2] sm:$0x1] %vm1394, %v3043
    %3056 = vst.msk [vmem:[%s19 + $0xa] sm:$0x1] %vm1394, %v3052
    %s3057 = scalar_lea.vmem %s2, 6
    %v3058 = vld [vmem:[%s3057] sm:$0x3]
    %v3059 = vpack.c.bf16 %v2926, %v2926
    %v3061 = vsel %vm504, %v3059, 0
    %3063 = vmatprep.subr.bf16.mxu0 %v489
    %3064 = vmatpush1.bf16.msra.mxu0 %v488
    %3065 = vmatprep.subr.bf16.mxu0 %v491
    %3066 = vmatpush1.bf16.msra.mxu0 %v490
    %3067 = vmatprep.subr.bf16.mxu0 %v493
    %3068 = vmatpush1.bf16.msra.mxu0 %v492
    %3069 = vmatprep.subr.bf16.mxu0 %v495
    %3070 = vmatpush1.bf16.msra.mxu0 %v494
    %3071 = vmatprep.subr.bf16.mxu0 0
    %3072 = vmatpush1.bf16.msra.mxu0 0
    %3073 = vmatprep.subr.bf16.mxu0 0
    %3074 = vmatpush1.bf16.msra.mxu0 0
    %3075 = vmatprep.subr.bf16.mxu0 0
    %3076 = vmatpush1.bf16.msra.mxu0 0
    %3077 = vmatprep.subr.bf16.mxu0 0
    %3078 = vmatpush1.bf16.msra.mxu0 0
    %3079 = vmatprep.subr.bf16.mxu0 0
    %3080 = vmatpush1.bf16.msra.mxu0 0
    %3081 = vmatprep.subr.bf16.mxu0 0
    %3082 = vmatpush1.bf16.msra.mxu0 0
    %3083 = vmatprep.subr.bf16.mxu0 0
    %3084 = vmatpush1.bf16.msra.mxu0 0
    %3085 = vmatprep.subr.bf16.mxu0 0
    %3086 = vmatpush1.bf16.msra.mxu0 0
    %3087 = vmatprep.subr.bf16.mxu0 0
    %3088 = vmatpush1.bf16.msra.mxu0 0
    %3089 = vmatprep.subr.bf16.mxu0 0
    %3090 = vmatpush1.bf16.msra.mxu0 0
    %3091 = vmatprep.subr.bf16.mxu0 0
    %3092 = vmatpush1.bf16.msra.mxu0 0
    %3093 = vmatprep.subr.bf16.mxu0 0
    %3094 = vmatpush1.bf16.msra.mxu0 0
    %3095 = vmatprep.mubr.bf16.mxu0 0
    %3096 = vmatmul.mubr.bf16.gmra.mrb[0].mxu0 %v3061
    %v3097 = vpop.f32.mrb[0].mxu0
    %v3098 = vadd.f32 %v457, %v3097
    %v3099 = vpop.f32.mrb[0].mxu0
    %v3100 = vadd.f32 %v461, %v3099
    %v3101 = vpop.f32.mrb[0].mxu0
    %v3102 = vpop.f32.mrb[0].mxu0
    %3103 = vdwg.mxu0
    %v3104 = vxor.u32 %v3098, 2147483648
    %v3105 = vxor.u32 %v3100, 2147483648
    %v3106 = vmul.f32 %v3104, 1.442695
    %v3107 = vpow.pop %v3106
    %v3108 = vmul.f32 %v3105, 1.442695
    %v3109 = vpow.pop %v3108
    %v3110 = vadd.f32 %v3107, 1.0
    %v3111 = vadd.f32 %v3109, 1.0
    %v3112 = vrcp.pop %v3110
    %v3113 = vmul.f32 1.0, %v3112
    %v3114 = vrcp.pop %v3111
    %v3115 = vmul.f32 1.0, %v3114
    %v3118 = vunpack.c.l.s4 1966171168
    %v3119 = vunpack.c.0.s8 %v3118
    %v3120 = vlaneseq
    %v3121 = vshrl.u32 %v3120, 7
    %v3122 = vsub.s32 %v3119, %v3121
    %v3123 = vrot.slane %v3098, %v3122
    %v3124 = vcombine.high %v3123, %v3123
    %v3126 = vunpack.c.l.s4 1966171168
    %v3127 = vunpack.c.0.s8 %v3126
    %v3128 = vlaneseq
    %v3129 = vshrl.u32 %v3128, 7
    %v3130 = vsub.s32 %v3127, %v3129
    %v3131 = vrot.slane %v3123, %v3130
    %v3133 = vunpack.c.l.s4 1966171168
    %v3134 = vunpack.c.0.s8 %v3133
    %v3135 = vlaneseq
    %v3136 = vshrl.u32 %v3135, 7
    %v3137 = vsub.s32 %v3134, %v3136
    %v3138 = vrot.slane %v3124, %v3137
    %v3139 = vlaneseq
    %v3140 = vshrl.u32 %v3139, 7
    %v3141 = vsub.s32 0, %v3140
    %v3142 = vrot.slane %v3131, %v3141
    %v3143 = vlaneseq
    %v3144 = vshrl.u32 %v3143, 7
    %v3145 = vsub.s32 0, %v3144
    %v3146 = vrot.slane %v3138, %v3145
    %v3149 = vadd.f32 %v278, %v3142
    %v3150 = vadd.f32 %v281, %v3142
    %v3151 = vadd.f32 %v286, %v3146
    %v3152 = vadd.f32 %v289, %v3146
    %v3153 = vmax.f32 %v3149, 0.0
    %v3154 = vmax.f32 %v3150, 0.0
    %v3155 = vmax.f32 %v3151, 0.0
    %v3156 = vmax.f32 %v3152, 0.0
    %v3157 = vmul.f32 %v3153, %v606
    %v3158 = vmul.f32 %v3154, %v606
    %v3159 = vmul.f32 %v3155, %v606
    %v3160 = vmul.f32 %v3156, %v606
    %v3161 = vsel %vm504, %v3157, 0.0
    %3162 = vadd.xlane.f32.xlu0 %v3161
    %v3163 = vpop.xlane.xlu0 %3162
    %v3164 = vsel %vm504, %v3158, 0.0
    %3165 = vadd.xlane.f32.xlu0 %v3164
    %v3166 = vpop.xlane.xlu0 %3165
    %v3167 = vsel %vm504, %v3159, 0.0
    %3168 = vadd.xlane.f32.xlu0 %v3167
    %v3169 = vpop.xlane.xlu0 %3168
    %v3170 = vsel %vm504, %v3160, 0.0
    %3171 = vadd.xlane.f32.xlu0 %v3170
    %v3172 = vpop.xlane.xlu0 %3171
    %v3173 = vadd.f32 %v3163, %v631
    %v3174 = vadd.f32 %v3166, %v631
    %v3175 = vadd.f32 %v3169, %v631
    %v3176 = vadd.f32 %v3172, %v631
    %v3181 = vlaneseq
    %v3182 = vshrl.u32 %v3181, 7
    %v3183 = vsub.s32 %v642, %v3182
    %v3184 = vrot.slane %v3173, %v3183
    %v3185 = vlaneseq
    %v3186 = vshrl.u32 %v3185, 7
    %v3187 = vsub.s32 %v647, %v3186
    %v3188 = vrot.slane %v3174, %v3187
    %v3189 = vsel %vm652, %v3188, %v3184
    %v3190 = vlaneseq
    %v3191 = vshrl.u32 %v3190, 7
    %v3192 = vsub.s32 %v642, %v3191
    %v3193 = vrot.slane %v3175, %v3192
    %v3194 = vlaneseq
    %v3195 = vshrl.u32 %v3194, 7
    %v3196 = vsub.s32 %v647, %v3195
    %v3197 = vrot.slane %v3176, %v3196
    %v3198 = vsel %vm652, %v3197, %v3193
    %v3199 = vsel %vm338, %v3198, %v3189
    %v3201 = vsel %vm665, %v3199, -inf
    %3202 = vmax.xlane.f32.xlu0 %v3201
    %v3203 = vpop.xlane.xlu0 %3202
    %v3205 = vlaneseq
    %v3206 = vshrl.u32 %v3205, 7
    %v3207 = vsub.s32 0, %v3206
    %v3208 = vrot.slane %v3203, %v3207
    %v3209 = vlaneseq
    %v3210 = vshrl.u32 %v3209, 7
    %v3211 = vsub.s32 1, %v3210
    %v3212 = vrot.slane %v3203, %v3211
    %v3215 = vsub.f32 %v3173, %v3208
    %v3216 = vsub.f32 %v3174, %v3208
    %v3217 = vsub.f32 %v3175, %v3212
    %v3218 = vsub.f32 %v3176, %v3212
    %v3219 = vmul.f32 %v3215, 1.442695
    %v3220 = vpow.pop %v3219
    %v3221 = vmul.f32 %v3216, 1.442695
    %v3222 = vpow.pop %v3221
    %v3223 = vmul.f32 %v3217, 1.442695
    %v3224 = vpow.pop %v3223
    %v3225 = vmul.f32 %v3218, 1.442695
    %v3226 = vpow.pop %v3225
    %3231 = vset.pattern.permute.xlu0 0
    %3232 = vperm.xlu0 %3231, %v3220
    %v3233 = vpop.permute.xlu0 %3232
    %3234 = vset.pattern.permute.xlu0 0
    %3235 = vperm.xlu0 %3234, %v3222
    %v3236 = vpop.permute.xlu0 %3235
    %3237 = vset.pattern.permute.xlu0 0
    %3238 = vperm.xlu0 %3237, %v3224
    %v3239 = vpop.permute.xlu0 %3238
    %3240 = vset.pattern.permute.xlu0 0
    %3241 = vperm.xlu0 %3240, %v3226
    %v3242 = vpop.permute.xlu0 %3241
    %v3243 = vlaneseq
    %v3244 = vshrl.u32 %v3243, 7
    %v3245 = vsub.s32 %v642, %v3244
    %v3246 = vrot.slane %v3233, %v3245
    %v3247 = vlaneseq
    %v3248 = vshrl.u32 %v3247, 7
    %v3249 = vsub.s32 %v647, %v3248
    %v3250 = vrot.slane %v3236, %v3249
    %v3251 = vsel %vm652, %v3250, %v3246
    %v3252 = vlaneseq
    %v3253 = vshrl.u32 %v3252, 7
    %v3254 = vsub.s32 %v642, %v3253
    %v3255 = vrot.slane %v3239, %v3254
    %v3256 = vlaneseq
    %v3257 = vshrl.u32 %v3256, 7
    %v3258 = vsub.s32 %v647, %v3257
    %v3259 = vrot.slane %v3242, %v3258
    %v3260 = vsel %vm652, %v3259, %v3255
    %v3261 = vsel %vm338, %v3260, %v3251
    %v3263 = vsel %vm665, %v3261, 0.0
    %3264 = vadd.xlane.f32.xlu0 %v3263
    %v3265 = vpop.xlane.xlu0 %3264
    %v3266 = vrcp.pop %v3265
    %v3268 = vlaneseq
    %v3269 = vshrl.u32 %v3268, 7
    %v3270 = vsub.s32 0, %v3269
    %v3271 = vrot.slane %v3266, %v3270
    %v3272 = vlaneseq
    %v3273 = vshrl.u32 %v3272, 7
    %v3274 = vsub.s32 1, %v3273
    %v3275 = vrot.slane %v3266, %v3274
    %v3278 = vmul.f32 %v3220, %v3271
    %v3279 = vmul.f32 %v3222, %v3271
    %v3280 = vmul.f32 %v3224, %v3275
    %v3281 = vmul.f32 %v3226, %v3275
    %3284 = vset.pattern.permute.xlu0 0
    %3285 = vperm.xlu0 %3284, %v3278
    %v3286 = vpop.permute.xlu0 %3285
    %3287 = vset.pattern.permute.xlu0 0
    %3288 = vperm.xlu0 %3287, %v3279
    %v3289 = vpop.permute.xlu0 %3288
    %v3290 = vlaneseq
    %v3291 = vshrl.u32 %v3290, 7
    %v3292 = vsub.s32 %v642, %v3291
    %v3293 = vrot.slane %v3286, %v3292
    %v3294 = vlaneseq
    %v3295 = vshrl.u32 %v3294, 7
    %v3296 = vsub.s32 %v647, %v3295
    %v3297 = vrot.slane %v3289, %v3296
    %v3298 = vsel %vm652, %v3297, %v3293
    %v3299 = vsel %vm764, %v3298, 0
    %3301 = vmatprep.subr.mxu0 0.0
    %3302 = vmatpush1.msra.mxu0 %v156
    %3303 = vmatprep.subr.mxu0 0.0
    %3304 = vmatpush1.msra.mxu0 %v159
    %3305 = vmatprep.subr.mxu0 0.0
    %3306 = vmatpush1.msra.mxu0 0.0
    %3307 = vmatprep.subr.mxu0 0.0
    %3308 = vmatpush1.msra.mxu0 0.0
    %3309 = vmatprep.subr.mxu0 0.0
    %3310 = vmatpush1.msra.mxu0 0.0
    %3311 = vmatprep.subr.mxu0 0.0
    %3312 = vmatpush1.msra.mxu0 0.0
    %3313 = vmatprep.subr.mxu0 0.0
    %3314 = vmatpush1.msra.mxu0 0.0
    %3315 = vmatprep.subr.mxu0 0.0
    %3316 = vmatpush1.msra.mxu0 0.0
    %3317 = vmatprep.subr.mxu0 0.0
    %3318 = vmatpush1.msra.mxu0 0.0
    %3319 = vmatprep.subr.mxu0 0.0
    %3320 = vmatpush1.msra.mxu0 0.0
    %3321 = vmatprep.subr.mxu0 0.0
    %3322 = vmatpush1.msra.mxu0 0.0
    %3323 = vmatprep.subr.mxu0 0.0
    %3324 = vmatpush1.msra.mxu0 0.0
    %3325 = vmatprep.subr.mxu0 0.0
    %3326 = vmatpush1.msra.mxu0 0.0
    %3327 = vmatprep.subr.mxu0 0.0
    %3328 = vmatpush1.msra.mxu0 0.0
    %3329 = vmatprep.subr.mxu0 0.0
    %3330 = vmatpush1.msra.mxu0 0.0
    %3331 = vmatprep.subr.mxu0 0.0
    %3332 = vmatpush1.msra.mxu0 0.0
    %3333 = vmatprep.subr.mxu0 0.0
    %3334 = vmatpush1.msra.mxu0 0.0
    %3335 = vmatprep.subr.mxu0 0.0
    %3336 = vmatpush1.msra.mxu0 0.0
    %3337 = vmatprep.subr.mxu0 0.0
    %3338 = vmatpush1.msra.mxu0 0.0
    %3339 = vmatprep.subr.mxu0 0.0
    %3340 = vmatpush1.msra.mxu0 0.0
    %3341 = vmatprep.subr.mxu0 0.0
    %3342 = vmatpush1.msra.mxu0 0.0
    %3343 = vmatprep.subr.mxu0 0.0
    %3344 = vmatpush1.msra.mxu0 0.0
    %3345 = vmatprep.subr.mxu0 0.0
    %3346 = vmatpush1.msra.mxu0 0.0
    %3347 = vmatprep.subr.mxu0 0.0
    %3348 = vmatpush1.msra.mxu0 0.0
    %3349 = vmatprep.subr.mxu0 0.0
    %3350 = vmatpush1.msra.mxu0 0.0
    %3351 = vmatprep.subr.mxu0 0.0
    %3352 = vmatpush1.msra.mxu0 0.0
    %3353 = vmatprep.subr.mxu0 0.0
    %3354 = vmatpush1.msra.mxu0 0.0
    %3355 = vmatprep.subr.mxu0 0.0
    %3356 = vmatpush1.msra.mxu0 0.0
    %3357 = vmatprep.subr.mxu0 0.0
    %3358 = vmatpush1.msra.mxu0 0.0
    %3359 = vmatprep.subr.mxu0 0.0
    %3360 = vmatpush1.msra.mxu0 0.0
    %3361 = vmatprep.subr.mxu0 0.0
    %3362 = vmatpush1.msra.mxu0 0.0
    %3363 = vmatprep.subr.mxu0 0.0
    %3364 = vmatpush1.msra.mxu0 0.0
    %3365 = vmatprep.mubr.f32.mxu0 0.0
    %3366 = vmatmul.mubr.f32.gmra.mrb[0].mxu0 %v3299
    %v3367 = vpop.f32.mrb[0].mxu0
    %v3368 = vadd.f32 0.0, %v3367
    %v3369 = vpop.f32.mrb[0].mxu0
    %3370 = vdwg.mxu0
    %3373 = vset.pattern.permute.xlu0 0
    %3374 = vperm.xlu0 %3373, %v3280
    %v3375 = vpop.permute.xlu0 %3374
    %3376 = vset.pattern.permute.xlu0 0
    %3377 = vperm.xlu0 %3376, %v3281
    %v3378 = vpop.permute.xlu0 %3377
    %v3379 = vlaneseq
    %v3380 = vshrl.u32 %v3379, 7
    %v3381 = vsub.s32 %v642, %v3380
    %v3382 = vrot.slane %v3375, %v3381
    %v3383 = vlaneseq
    %v3384 = vshrl.u32 %v3383, 7
    %v3385 = vsub.s32 %v647, %v3384
    %v3386 = vrot.slane %v3378, %v3385
    %v3387 = vsel %vm652, %v3386, %v3382
    %v3388 = vsel %vm764, %v3387, 0
    %3390 = vmatprep.subr.mxu0 0.0
    %3391 = vmatpush1.msra.mxu0 %v164
    %3392 = vmatprep.subr.mxu0 0.0
    %3393 = vmatpush1.msra.mxu0 %v167
    %3394 = vmatprep.subr.mxu0 0.0
    %3395 = vmatpush1.msra.mxu0 0.0
    %3396 = vmatprep.subr.mxu0 0.0
    %3397 = vmatpush1.msra.mxu0 0.0
    %3398 = vmatprep.subr.mxu0 0.0
    %3399 = vmatpush1.msra.mxu0 0.0
    %3400 = vmatprep.subr.mxu0 0.0
    %3401 = vmatpush1.msra.mxu0 0.0
    %3402 = vmatprep.subr.mxu0 0.0
    %3403 = vmatpush1.msra.mxu0 0.0
    %3404 = vmatprep.subr.mxu0 0.0
    %3405 = vmatpush1.msra.mxu0 0.0
    %3406 = vmatprep.subr.mxu0 0.0
    %3407 = vmatpush1.msra.mxu0 0.0
    %3408 = vmatprep.subr.mxu0 0.0
    %3409 = vmatpush1.msra.mxu0 0.0
    %3410 = vmatprep.subr.mxu0 0.0
    %3411 = vmatpush1.msra.mxu0 0.0
    %3412 = vmatprep.subr.mxu0 0.0
    %3413 = vmatpush1.msra.mxu0 0.0
    %3414 = vmatprep.subr.mxu0 0.0
    %3415 = vmatpush1.msra.mxu0 0.0
    %3416 = vmatprep.subr.mxu0 0.0
    %3417 = vmatpush1.msra.mxu0 0.0
    %3418 = vmatprep.subr.mxu0 0.0
    %3419 = vmatpush1.msra.mxu0 0.0
    %3420 = vmatprep.subr.mxu0 0.0
    %3421 = vmatpush1.msra.mxu0 0.0
    %3422 = vmatprep.subr.mxu0 0.0
    %3423 = vmatpush1.msra.mxu0 0.0
    %3424 = vmatprep.subr.mxu0 0.0
    %3425 = vmatpush1.msra.mxu0 0.0
    %3426 = vmatprep.subr.mxu0 0.0
    %3427 = vmatpush1.msra.mxu0 0.0
    %3428 = vmatprep.subr.mxu0 0.0
    %3429 = vmatpush1.msra.mxu0 0.0
    %3430 = vmatprep.subr.mxu0 0.0
    %3431 = vmatpush1.msra.mxu0 0.0
    %3432 = vmatprep.subr.mxu0 0.0
    %3433 = vmatpush1.msra.mxu0 0.0
    %3434 = vmatprep.subr.mxu0 0.0
    %3435 = vmatpush1.msra.mxu0 0.0
    %3436 = vmatprep.subr.mxu0 0.0
    %3437 = vmatpush1.msra.mxu0 0.0
    %3438 = vmatprep.subr.mxu0 0.0
    %3439 = vmatpush1.msra.mxu0 0.0
    %3440 = vmatprep.subr.mxu0 0.0
    %3441 = vmatpush1.msra.mxu0 0.0
    %3442 = vmatprep.subr.mxu0 0.0
    %3443 = vmatpush1.msra.mxu0 0.0
    %3444 = vmatprep.subr.mxu0 0.0
    %3445 = vmatpush1.msra.mxu0 0.0
    %3446 = vmatprep.subr.mxu0 0.0
    %3447 = vmatpush1.msra.mxu0 0.0
    %3448 = vmatprep.subr.mxu0 0.0
    %3449 = vmatpush1.msra.mxu0 0.0
    %3450 = vmatprep.subr.mxu0 0.0
    %3451 = vmatpush1.msra.mxu0 0.0
    %3452 = vmatprep.subr.mxu0 0.0
    %3453 = vmatpush1.msra.mxu0 0.0
    %3454 = vmatprep.mubr.f32.mxu0 0.0
    %3455 = vmatmul.mubr.f32.gmra.mrb[0].mxu0 %v3388
    %v3456 = vpop.f32.mrb[0].mxu0
    %v3457 = vadd.f32 0.0, %v3456
    %v3458 = vpop.f32.mrb[0].mxu0
    %3459 = vdwg.mxu0
    %v3462 = vrot.slane %v3457, 7
    %v3463 = vsel %vm338, %v3462, %v3368
    %3464 = vrot.lane.b32.xlu0 %v3463, 64
    %v3465 = vpop.permute.xlu0 %3464
    %v3467 = vmul.f32 %v3113, %v3465
    %v3468 = vmul.f32 %v3115, %v3465
    %s3469 = sld [smem:[#allocation3 + $0x3]]
    %s3470 = scalar_lea.vmem %s3, %s3469
    %v3471 = vld [vmem:[%s3470] sm:$0x1]
    %s3472 = sld [smem:[#allocation3 + $0x83]]
    %s3473 = scalar_lea.vmem %s3, %s3472
    %v3474 = vld [vmem:[%s3473] sm:$0x1]
    %v3476 = vrot.slane %v3474, 7
    %v3478 = vsel %vm944, %v3471, %v3476
    %3480 = vrot.lane.b32.xlu0 %v2926, 64
    %v3481 = vpop.permute.xlu0 %3480
    %v3483 = vsel %vm504, %v3478, %v3467
    %v3484 = vsel %vm504, %v3468, %v3481
    %v3485 = vpack.c.bf16 %v3483, %v3483
    %v3486 = vpack.c.bf16 %v3484, %v3484
    %v3487 = vld [vmem:[%s14] sm:$0xff]
    %v3488 = vld [vmem:[%s14 + $0x8] sm:$0xff]
    %v3489 = vld [vmem:[%s14 + $0x10] sm:$0xff]
    %v3490 = vld [vmem:[%s14 + $0x18] sm:$0xff]
    %v3491 = vld [vmem:[%s14 + $0x20] sm:$0xff]
    %v3492 = vld [vmem:[%s14 + $0x28] sm:$0xff]
    %v3493 = vld [vmem:[%s14 + $0x30] sm:$0xff]
    %v3494 = vld [vmem:[%s14 + $0x38] sm:$0xff]
    %v3495 = vld [vmem:[%s14 + $0x40] sm:$0xff]
    %v3496 = vld [vmem:[%s14 + $0x48] sm:$0xff]
    %v3497 = vld [vmem:[%s14 + $0x50] sm:$0xff]
    %v3498 = vld [vmem:[%s14 + $0x58] sm:$0xff]
    %v3499 = vld [vmem:[%s14 + $0x60] sm:$0xff]
    %v3500 = vld [vmem:[%s14 + $0x68] sm:$0xff]
    %v3501 = vld [vmem:[%s14 + $0x70] sm:$0xff]
    %v3502 = vld [vmem:[%s14 + $0x78] sm:$0xff]
    %v3503 = vld [vmem:[%s14 + $0x80] sm:$0xff]
    %v3504 = vld [vmem:[%s14 + $0x88] sm:$0xff]
    %v3505 = vld [vmem:[%s14 + $0x90] sm:$0xff]
    %v3506 = vld [vmem:[%s14 + $0x98] sm:$0xff]
    %v3507 = vld [vmem:[%s14 + $0xa0] sm:$0xff]
    %v3508 = vld [vmem:[%s14 + $0xa8] sm:$0xff]
    %v3509 = vld [vmem:[%s14 + $0xb0] sm:$0xff]
    %v3510 = vld [vmem:[%s14 + $0xb8] sm:$0xff]
    %v3511 = vld [vmem:[%s14 + $0xc0] sm:$0xff]
    %v3512 = vld [vmem:[%s14 + $0xc8] sm:$0xff]
    %v3513 = vld [vmem:[%s14 + $0xd0] sm:$0xff]
    %v3514 = vld [vmem:[%s14 + $0xd8] sm:$0xff]
    %v3515 = vld [vmem:[%s14 + $0xe0] sm:$0xff]
    %v3516 = vld [vmem:[%s14 + $0xe8] sm:$0xff]
    %v3517 = vld [vmem:[%s14 + $0xf0] sm:$0xff]
    %v3518 = vld [vmem:[%s14 + $0xf8] sm:$0xff]
    %v3551 = vunpack.c.l.b16 %v3487
    %v3552 = vunpack.c.h.b16 %v3487
    %v3553 = vunpack.c.l.b16 %v3488
    %v3554 = vunpack.c.h.b16 %v3488
    %v3555 = vunpack.c.l.b16 %v3489
    %v3556 = vunpack.c.h.b16 %v3489
    %v3557 = vunpack.c.l.b16 %v3490
    %v3558 = vunpack.c.h.b16 %v3490
    %v3559 = vunpack.c.l.b16 %v3491
    %v3560 = vunpack.c.h.b16 %v3491
    %v3561 = vunpack.c.l.b16 %v3492
    %v3562 = vunpack.c.h.b16 %v3492
    %v3563 = vunpack.c.l.b16 %v3493
    %v3564 = vunpack.c.h.b16 %v3493
    %v3565 = vunpack.c.l.b16 %v3494
    %v3566 = vunpack.c.h.b16 %v3494
    %v3567 = vunpack.c.l.b16 %v3495
    %v3568 = vunpack.c.h.b16 %v3495
    %v3569 = vunpack.c.l.b16 %v3496
    %v3570 = vunpack.c.h.b16 %v3496
    %v3571 = vunpack.c.l.b16 %v3497
    %v3572 = vunpack.c.h.b16 %v3497
    %v3573 = vunpack.c.l.b16 %v3498
    %v3574 = vunpack.c.h.b16 %v3498
    %v3575 = vunpack.c.l.b16 %v3499
    %v3576 = vunpack.c.h.b16 %v3499
    %v3577 = vunpack.c.l.b16 %v3500
    %v3578 = vunpack.c.h.b16 %v3500
    %v3579 = vunpack.c.l.b16 %v3501
    %v3580 = vunpack.c.h.b16 %v3501
    %v3581 = vunpack.c.l.b16 %v3502
    %v3582 = vunpack.c.h.b16 %v3502
    %v3583 = vunpack.c.l.b16 %v3503
    %v3584 = vunpack.c.h.b16 %v3503
    %v3585 = vunpack.c.l.b16 %v3504
    %v3586 = vunpack.c.h.b16 %v3504
    %v3587 = vunpack.c.l.b16 %v3505
    %v3588 = vunpack.c.h.b16 %v3505
    %v3589 = vunpack.c.l.b16 %v3506
    %v3590 = vunpack.c.h.b16 %v3506
    %v3591 = vunpack.c.l.b16 %v3507
    %v3592 = vunpack.c.h.b16 %v3507
    %v3593 = vunpack.c.l.b16 %v3508
    %v3594 = vunpack.c.h.b16 %v3508
    %v3595 = vunpack.c.l.b16 %v3509
    %v3596 = vunpack.c.h.b16 %v3509
    %v3597 = vunpack.c.l.b16 %v3510
    %v3598 = vunpack.c.h.b16 %v3510
    %v3599 = vunpack.c.l.b16 %v3511
    %v3600 = vunpack.c.h.b16 %v3511
    %v3601 = vunpack.c.l.b16 %v3512
    %v3602 = vunpack.c.h.b16 %v3512
    %v3603 = vunpack.c.l.b16 %v3513
    %v3604 = vunpack.c.h.b16 %v3513
    %v3605 = vunpack.c.l.b16 %v3514
    %v3606 = vunpack.c.h.b16 %v3514
    %v3607 = vunpack.c.l.b16 %v3515
    %v3608 = vunpack.c.h.b16 %v3515
    %v3609 = vunpack.c.l.b16 %v3516
    %v3610 = vunpack.c.h.b16 %v3516
    %v3611 = vunpack.c.l.b16 %v3517
    %v3612 = vunpack.c.h.b16 %v3517
    %v3613 = vunpack.c.l.b16 %v3518
    %v3614 = vunpack.c.h.b16 %v3518
    %v3615 = vpack.c.b16 %v3553, %v3551
    %v3616 = vpack.c.b16 %v3554, %v3552
    %v3617 = vpack.c.b16 %v3557, %v3555
    %v3618 = vpack.c.b16 %v3558, %v3556
    %v3619 = vpack.c.b16 %v3561, %v3559
    %v3620 = vpack.c.b16 %v3562, %v3560
    %v3621 = vpack.c.b16 %v3565, %v3563
    %v3622 = vpack.c.b16 %v3566, %v3564
    %v3623 = vpack.c.b16 %v3569, %v3567
    %v3624 = vpack.c.b16 %v3570, %v3568
    %v3625 = vpack.c.b16 %v3573, %v3571
    %v3626 = vpack.c.b16 %v3574, %v3572
    %v3627 = vpack.c.b16 %v3577, %v3575
    %v3628 = vpack.c.b16 %v3578, %v3576
    %v3629 = vpack.c.b16 %v3581, %v3579
    %v3630 = vpack.c.b16 %v3582, %v3580
    %v3631 = vpack.c.b16 %v3585, %v3583
    %v3632 = vpack.c.b16 %v3586, %v3584
    %v3633 = vpack.c.b16 %v3589, %v3587
    %v3634 = vpack.c.b16 %v3590, %v3588
    %v3635 = vpack.c.b16 %v3593, %v3591
    %v3636 = vpack.c.b16 %v3594, %v3592
    %v3637 = vpack.c.b16 %v3597, %v3595
    %v3638 = vpack.c.b16 %v3598, %v3596
    %v3639 = vpack.c.b16 %v3601, %v3599
    %v3640 = vpack.c.b16 %v3602, %v3600
    %v3641 = vpack.c.b16 %v3605, %v3603
    %v3642 = vpack.c.b16 %v3606, %v3604
    %v3643 = vpack.c.b16 %v3609, %v3607
    %v3644 = vpack.c.b16 %v3610, %v3608
    %v3645 = vpack.c.b16 %v3613, %v3611
    %v3646 = vpack.c.b16 %v3614, %v3612
    %3679 = vmatprep.subr.bf16.mxu0 %v3616
    %3680 = vmatpush1.bf16.msra.mxu0 %v3615
    %3681 = vmatprep.subr.bf16.mxu0 %v3618
    %3682 = vmatpush1.bf16.msra.mxu0 %v3617
    %3683 = vmatprep.subr.bf16.mxu0 %v3620
    %3684 = vmatpush1.bf16.msra.mxu0 %v3619
    %3685 = vmatprep.subr.bf16.mxu0 %v3622
    %3686 = vmatpush1.bf16.msra.mxu0 %v3621
    %3687 = vmatprep.subr.bf16.mxu0 %v3624
    %3688 = vmatpush1.bf16.msra.mxu0 %v3623
    %3689 = vmatprep.subr.bf16.mxu0 %v3626
    %3690 = vmatpush1.bf16.msra.mxu0 %v3625
    %3691 = vmatprep.subr.bf16.mxu0 %v3628
    %3692 = vmatpush1.bf16.msra.mxu0 %v3627
    %3693 = vmatprep.subr.bf16.mxu0 %v3630
    %3694 = vmatpush1.bf16.msra.mxu0 %v3629
    %3695 = vmatprep.subr.bf16.mxu0 %v3632
    %3696 = vmatpush1.bf16.msra.mxu0 %v3631
    %3697 = vmatprep.subr.bf16.mxu0 %v3634
    %3698 = vmatpush1.bf16.msra.mxu0 %v3633
    %3699 = vmatprep.subr.bf16.mxu0 %v3636
    %3700 = vmatpush1.bf16.msra.mxu0 %v3635
    %3701 = vmatprep.subr.bf16.mxu0 %v3638
    %3702 = vmatpush1.bf16.msra.mxu0 %v3637
    %3703 = vmatprep.subr.bf16.mxu0 %v3640
    %3704 = vmatpush1.bf16.msra.mxu0 %v3639
    %3705 = vmatprep.subr.bf16.mxu0 %v3642
    %3706 = vmatpush1.bf16.msra.mxu0 %v3641
    %3707 = vmatprep.subr.bf16.mxu0 %v3644
    %3708 = vmatpush1.bf16.msra.mxu0 %v3643
    %3709 = vmatprep.subr.bf16.mxu0 %v3646
    %3710 = vmatpush1.bf16.msra.mxu0 %v3645
    %3711 = vmatprep.mubr.bf16.mxu0 %v3486
    %3712 = vmatmul.mubr.bf16.gmra.mrb[0].mxu0 %v3485
    %v3713 = vpop.f32.mrb[0].mxu0
    %v3714 = vadd.f32 %v990, %v3713
    %v3715 = vpop.f32.mrb[0].mxu0
    %v3716 = vadd.f32 %v994, %v3715
    %v3717 = vpop.f32.mrb[0].mxu0
    %v3718 = vpop.f32.mrb[0].mxu0
    %3719 = vdwg.mxu0
    %v3720 = vxor.u32 %v3714, 2147483648
    %v3721 = vxor.u32 %v3716, 2147483648
    %v3722 = vmul.f32 %v3720, 1.442695
    %v3723 = vpow.pop %v3722
    %v3724 = vmul.f32 %v3721, 1.442695
    %v3725 = vpow.pop %v3724
    %v3726 = vadd.f32 %v3723, 1.0
    %v3727 = vadd.f32 %v3725, 1.0
    %v3728 = vrcp.pop %v3726
    %v3729 = vmul.f32 1.0, %v3728
    %v3730 = vrcp.pop %v3727
    %v3731 = vmul.f32 1.0, %v3730
    %v3732 = vtanh.pop %v3716
    %v3733 = vmul.f32 %v3729, %v2927
    %3735 = vrot.lane.b32.xlu0 %v3732, 64
    %v3736 = vpop.permute.xlu0 %3735
    %v3738 = vmul.f32 %v3729, %v3736
    %3740 = vrot.lane.b32.xlu0 %v3738, 64
    %v3741 = vpop.permute.xlu0 %3740
    %v3743 = vadd.f32 %v3733, %v3741
    %v3744 = vtanh.pop %v3743
    %3746 = vrot.lane.b32.xlu0 %v3744, 64
    %v3747 = vpop.permute.xlu0 %3746
    %v3749 = vmul.f32 %v3731, %v3747
    %vm3750 = vcmp.gt.f32.partialorder %v3058, 0.0
    %v3751 = vsel %vm3750, 1, 0
    %3752 = vset.pattern.permute.xlu0 0
    %3753 = vperm.xlu0 %3752, %v3751
    %v3754 = vpop.permute.xlu0 %3753
    %vm3755 = vcmp.eq.s32.totalorder %v3754, 1
    %v3756 = vsel %vm3755, %v3749, %v2926
    %v3757 = vsel %vm3755, %v3743, %v2927
    %v3758 = vpack.c.bf16 %v3749, %v3749
    %v3760 = vsel %vm504, %v3758, 0
    %3762 = vmatprep.subr.bf16.mxu0 0
    %3763 = vmatpush1.bf16.msra.mxu0 %v1259
    %3764 = vmatprep.subr.bf16.mxu0 0
    %3765 = vmatpush1.bf16.msra.mxu0 %v1260
    %3766 = vmatprep.subr.bf16.mxu0 0
    %3767 = vmatpush1.bf16.msra.mxu0 %v1261
    %3768 = vmatprep.subr.bf16.mxu0 0
    %3769 = vmatpush1.bf16.msra.mxu0 %v1262
    %3770 = vmatprep.subr.bf16.mxu0 0
    %3771 = vmatpush1.bf16.msra.mxu0 0
    %3772 = vmatprep.subr.bf16.mxu0 0
    %3773 = vmatpush1.bf16.msra.mxu0 0
    %3774 = vmatprep.subr.bf16.mxu0 0
    %3775 = vmatpush1.bf16.msra.mxu0 0
    %3776 = vmatprep.subr.bf16.mxu0 0
    %3777 = vmatpush1.bf16.msra.mxu0 0
    %3778 = vmatprep.subr.bf16.mxu0 0
    %3779 = vmatpush1.bf16.msra.mxu0 0
    %3780 = vmatprep.subr.bf16.mxu0 0
    %3781 = vmatpush1.bf16.msra.mxu0 0
    %3782 = vmatprep.subr.bf16.mxu0 0
    %3783 = vmatpush1.bf16.msra.mxu0 0
    %3784 = vmatprep.subr.bf16.mxu0 0
    %3785 = vmatpush1.bf16.msra.mxu0 0
    %3786 = vmatprep.subr.bf16.mxu0 0
    %3787 = vmatpush1.bf16.msra.mxu0 0
    %3788 = vmatprep.subr.bf16.mxu0 0
    %3789 = vmatpush1.bf16.msra.mxu0 0
    %3790 = vmatprep.subr.bf16.mxu0 0
    %3791 = vmatpush1.bf16.msra.mxu0 0
    %3792 = vmatprep.subr.bf16.mxu0 0
    %3793 = vmatpush1.bf16.msra.mxu0 0
    %3794 = vmatprep.mubr.bf16.mxu0 0
    %3795 = vmatmul.mubr.bf16.gmra.mrb[0].mxu0 %v3760
    %v3796 = vpop.f32.mrb[0].mxu0
    %v3797 = vadd.f32 %v1241, %v3796
    %v3798 = vpop.f32.mrb[0].mxu0
    %v3799 = vpop.f32.mrb[0].mxu0
    %v3800 = vpop.f32.mrb[0].mxu0
    %3801 = vdwg.mxu0
    %3803 = vset.pattern.permute.xlu0 0
    %3804 = vperm.xlu0 %3803, %v3058
    %v3805 = vpop.permute.xlu0 %3804
    %v3807 = vmul.f32 %v3797, %v3805
    %v3810 = vunpack.c.l.s4 1966171168
    %v3811 = vunpack.c.0.s8 %v3810
    %v3812 = vlaneseq
    %v3813 = vshrl.u32 %v3812, 7
    %v3814 = vsub.s32 %v3811, %v3813
    %v3815 = vrot.slane %v3807, %v3814
    %v3816 = vcombine.high %v3815, %v3815
    %v3818 = vunpack.c.l.s4 1966171168
    %v3819 = vunpack.c.0.s8 %v3818
    %v3820 = vlaneseq
    %v3821 = vshrl.u32 %v3820, 7
    %v3822 = vsub.s32 %v3819, %v3821
    %v3823 = vrot.slane %v3815, %v3822
    %v3825 = vunpack.c.l.s4 1966171168
    %v3826 = vunpack.c.0.s8 %v3825
    %v3827 = vlaneseq
    %v3828 = vshrl.u32 %v3827, 7
    %v3829 = vsub.s32 %v3826, %v3828
    %v3830 = vrot.slane %v3816, %v3829
    %3833 = vst.msk [vmem:[%s18 + $0x3] sm:$0x1] %vm1341, %v3823
    %3834 = vst.msk [vmem:[%s18 + $0xb] sm:$0x1] %vm1341, %v3830
    %v3835 = vlaneseq
    %v3836 = vshrl.u32 %v3835, 7
    %v3837 = vsub.s32 0, %v3836
    %v3838 = vrot.slane %v3805, %v3837
    %v3839 = vlaneseq
    %v3840 = vshrl.u32 %v3839, 7
    %v3841 = vsub.s32 1, %v3840
    %v3842 = vrot.slane %v3805, %v3841
    %v3845 = vmul.f32 %v3278, %v3838
    %v3846 = vmul.f32 %v3279, %v3838
    %v3847 = vmul.f32 %v3280, %v3842
    %v3848 = vmul.f32 %v3281, %v3842
    %3853 = vset.pattern.permute.xlu0 0
    %3854 = vperm.xlu0 %3853, %v3845
    %v3855 = vpop.permute.xlu0 %3854
    %3856 = vset.pattern.permute.xlu0 0
    %3857 = vperm.xlu0 %3856, %v3846
    %v3858 = vpop.permute.xlu0 %3857
    %3859 = vset.pattern.permute.xlu0 0
    %3860 = vperm.xlu0 %3859, %v3847
    %v3861 = vpop.permute.xlu0 %3860
    %3862 = vset.pattern.permute.xlu0 0
    %3863 = vperm.xlu0 %3862, %v3848
    %v3864 = vpop.permute.xlu0 %3863
    %v3865 = vlaneseq
    %v3866 = vshrl.u32 %v3865, 7
    %v3867 = vsub.s32 %v642, %v3866
    %v3868 = vrot.slane %v3855, %v3867
    %v3869 = vlaneseq
    %v3870 = vshrl.u32 %v3869, 7
    %v3871 = vsub.s32 %v647, %v3870
    %v3872 = vrot.slane %v3858, %v3871
    %v3873 = vsel %vm652, %v3872, %v3868
    %v3874 = vlaneseq
    %v3875 = vshrl.u32 %v3874, 7
    %v3876 = vsub.s32 %v642, %v3875
    %v3877 = vrot.slane %v3861, %v3876
    %v3878 = vlaneseq
    %v3879 = vshrl.u32 %v3878, 7
    %v3880 = vsub.s32 %v647, %v3879
    %v3881 = vrot.slane %v3864, %v3880
    %v3882 = vsel %vm652, %v3881, %v3877
    %3885 = vst.msk [vmem:[%s19 + $0x3] sm:$0x1] %vm1394, %v3873
    %3886 = vst.msk [vmem:[%s19 + $0xb] sm:$0x1] %vm1394, %v3882
    %s3887 = scalar_lea.vmem %s2, 8
    %v3888 = vld [vmem:[%s3887] sm:$0x3]
    %v3889 = vpack.c.bf16 %v3756, %v3756
    %v3891 = vsel %vm504, %v3889, 0
    %3893 = vmatprep.subr.bf16.mxu0 %v489
    %3894 = vmatpush1.bf16.msra.mxu0 %v488
    %3895 = vmatprep.subr.bf16.mxu0 %v491
    %3896 = vmatpush1.bf16.msra.mxu0 %v490
    %3897 = vmatprep.subr.bf16.mxu0 %v493
    %3898 = vmatpush1.bf16.msra.mxu0 %v492
    %3899 = vmatprep.subr.bf16.mxu0 %v495
    %3900 = vmatpush1.bf16.msra.mxu0 %v494
    %3901 = vmatprep.subr.bf16.mxu0 0
    %3902 = vmatpush1.bf16.msra.mxu0 0
    %3903 = vmatprep.subr.bf16.mxu0 0
    %3904 = vmatpush1.bf16.msra.mxu0 0
    %3905 = vmatprep.subr.bf16.mxu0 0
    %3906 = vmatpush1.bf16.msra.mxu0 0
    %3907 = vmatprep.subr.bf16.mxu0 0
    %3908 = vmatpush1.bf16.msra.mxu0 0
    %3909 = vmatprep.subr.bf16.mxu0 0
    %3910 = vmatpush1.bf16.msra.mxu0 0
    %3911 = vmatprep.subr.bf16.mxu0 0
    %3912 = vmatpush1.bf16.msra.mxu0 0
    %3913 = vmatprep.subr.bf16.mxu0 0
    %3914 = vmatpush1.bf16.msra.mxu0 0
    %3915 = vmatprep.subr.bf16.mxu0 0
    %3916 = vmatpush1.bf16.msra.mxu0 0
    %3917 = vmatprep.subr.bf16.mxu0 0
    %3918 = vmatpush1.bf16.msra.mxu0 0
    %3919 = vmatprep.subr.bf16.mxu0 0
    %3920 = vmatpush1.bf16.msra.mxu0 0
    %3921 = vmatprep.subr.bf16.mxu0 0
    %3922 = vmatpush1.bf16.msra.mxu0 0
    %3923 = vmatprep.subr.bf16.mxu0 0
    %3924 = vmatpush1.bf16.msra.mxu0 0
    %3925 = vmatprep.mubr.bf16.mxu0 0
    %3926 = vmatmul.mubr.bf16.gmra.mrb[0].mxu0 %v3891
    %v3927 = vpop.f32.mrb[0].mxu0
    %v3928 = vadd.f32 %v457, %v3927
    %v3929 = vpop.f32.mrb[0].mxu0
    %v3930 = vadd.f32 %v461, %v3929
    %v3931 = vpop.f32.mrb[0].mxu0
    %v3932 = vpop.f32.mrb[0].mxu0
    %3933 = vdwg.mxu0
    %v3934 = vxor.u32 %v3928, 2147483648
    %v3935 = vxor.u32 %v3930, 2147483648
    %v3936 = vmul.f32 %v3934, 1.442695
    %v3937 = vpow.pop %v3936
    %v3938 = vmul.f32 %v3935, 1.442695
    %v3939 = vpow.pop %v3938
    %v3940 = vadd.f32 %v3937, 1.0
    %v3941 = vadd.f32 %v3939, 1.0
    %v3942 = vrcp.pop %v3940
    %v3943 = vmul.f32 1.0, %v3942
    %v3944 = vrcp.pop %v3941
    %v3945 = vmul.f32 1.0, %v3944
    %v3948 = vunpack.c.l.s4 1966171168
    %v3949 = vunpack.c.0.s8 %v3948
    %v3950 = vlaneseq
    %v3951 = vshrl.u32 %v3950, 7
    %v3952 = vsub.s32 %v3949, %v3951
    %v3953 = vrot.slane %v3928, %v3952
    %v3954 = vcombine.high %v3953, %v3953
    %v3956 = vunpack.c.l.s4 1966171168
    %v3957 = vunpack.c.0.s8 %v3956
    %v3958 = vlaneseq
    %v3959 = vshrl.u32 %v3958, 7
    %v3960 = vsub.s32 %v3957, %v3959
    %v3961 = vrot.slane %v3953, %v3960
    %v3963 = vunpack.c.l.s4 1966171168
    %v3964 = vunpack.c.0.s8 %v3963
    %v3965 = vlaneseq
    %v3966 = vshrl.u32 %v3965, 7
    %v3967 = vsub.s32 %v3964, %v3966
    %v3968 = vrot.slane %v3954, %v3967
    %v3969 = vlaneseq
    %v3970 = vshrl.u32 %v3969, 7
    %v3971 = vsub.s32 0, %v3970
    %v3972 = vrot.slane %v3961, %v3971
    %v3973 = vlaneseq
    %v3974 = vshrl.u32 %v3973, 7
    %v3975 = vsub.s32 0, %v3974
    %v3976 = vrot.slane %v3968, %v3975
    %v3979 = vadd.f32 %v278, %v3972
    %v3980 = vadd.f32 %v281, %v3972
    %v3981 = vadd.f32 %v286, %v3976
    %v3982 = vadd.f32 %v289, %v3976
    %v3983 = vmax.f32 %v3979, 0.0
    %v3984 = vmax.f32 %v3980, 0.0
    %v3985 = vmax.f32 %v3981, 0.0
    %v3986 = vmax.f32 %v3982, 0.0
    %v3987 = vmul.f32 %v3983, %v606
    %v3988 = vmul.f32 %v3984, %v606
    %v3989 = vmul.f32 %v3985, %v606
    %v3990 = vmul.f32 %v3986, %v606
    %v3991 = vsel %vm504, %v3987, 0.0
    %3992 = vadd.xlane.f32.xlu0 %v3991
    %v3993 = vpop.xlane.xlu0 %3992
    %v3994 = vsel %vm504, %v3988, 0.0
    %3995 = vadd.xlane.f32.xlu0 %v3994
    %v3996 = vpop.xlane.xlu0 %3995
    %v3997 = vsel %vm504, %v3989, 0.0
    %3998 = vadd.xlane.f32.xlu0 %v3997
    %v3999 = vpop.xlane.xlu0 %3998
    %v4000 = vsel %vm504, %v3990, 0.0
    %4001 = vadd.xlane.f32.xlu0 %v4000
    %v4002 = vpop.xlane.xlu0 %4001
    %v4003 = vadd.f32 %v3993, %v631
    %v4004 = vadd.f32 %v3996, %v631
    %v4005 = vadd.f32 %v3999, %v631
    %v4006 = vadd.f32 %v4002, %v631
    %v4011 = vlaneseq
    %v4012 = vshrl.u32 %v4011, 7
    %v4013 = vsub.s32 %v642, %v4012
    %v4014 = vrot.slane %v4003, %v4013
    %v4015 = vlaneseq
    %v4016 = vshrl.u32 %v4015, 7
    %v4017 = vsub.s32 %v647, %v4016
    %v4018 = vrot.slane %v4004, %v4017
    %v4019 = vsel %vm652, %v4018, %v4014
    %v4020 = vlaneseq
    %v4021 = vshrl.u32 %v4020, 7
    %v4022 = vsub.s32 %v642, %v4021
    %v4023 = vrot.slane %v4005, %v4022
    %v4024 = vlaneseq
    %v4025 = vshrl.u32 %v4024, 7
    %v4026 = vsub.s32 %v647, %v4025
    %v4027 = vrot.slane %v4006, %v4026
    %v4028 = vsel %vm652, %v4027, %v4023
    %v4029 = vsel %vm338, %v4028, %v4019
    %v4031 = vsel %vm665, %v4029, -inf
    %4032 = vmax.xlane.f32.xlu0 %v4031
    %v4033 = vpop.xlane.xlu0 %4032
    %v4035 = vlaneseq
    %v4036 = vshrl.u32 %v4035, 7
    %v4037 = vsub.s32 0, %v4036
    %v4038 = vrot.slane %v4033, %v4037
    %v4039 = vlaneseq
    %v4040 = vshrl.u32 %v4039, 7
    %v4041 = vsub.s32 1, %v4040
    %v4042 = vrot.slane %v4033, %v4041
    %v4045 = vsub.f32 %v4003, %v4038
    %v4046 = vsub.f32 %v4004, %v4038
    %v4047 = vsub.f32 %v4005, %v4042
    %v4048 = vsub.f32 %v4006, %v4042
    %v4049 = vmul.f32 %v4045, 1.442695
    %v4050 = vpow.pop %v4049
    %v4051 = vmul.f32 %v4046, 1.442695
    %v4052 = vpow.pop %v4051
    %v4053 = vmul.f32 %v4047, 1.442695
    %v4054 = vpow.pop %v4053
    %v4055 = vmul.f32 %v4048, 1.442695
    %v4056 = vpow.pop %v4055
    %4061 = vset.pattern.permute.xlu0 0
    %4062 = vperm.xlu0 %4061, %v4050
    %v4063 = vpop.permute.xlu0 %4062
    %4064 = vset.pattern.permute.xlu0 0
    %4065 = vperm.xlu0 %4064, %v4052
    %v4066 = vpop.permute.xlu0 %4065
    %4067 = vset.pattern.permute.xlu0 0
    %4068 = vperm.xlu0 %4067, %v4054
    %v4069 = vpop.permute.xlu0 %4068
    %4070 = vset.pattern.permute.xlu0 0
    %4071 = vperm.xlu0 %4070, %v4056
    %v4072 = vpop.permute.xlu0 %4071
    %v4073 = vlaneseq
    %v4074 = vshrl.u32 %v4073, 7
    %v4075 = vsub.s32 %v642, %v4074
    %v4076 = vrot.slane %v4063, %v4075
    %v4077 = vlaneseq
    %v4078 = vshrl.u32 %v4077, 7
    %v4079 = vsub.s32 %v647, %v4078
    %v4080 = vrot.slane %v4066, %v4079
    %v4081 = vsel %vm652, %v4080, %v4076
    %v4082 = vlaneseq
    %v4083 = vshrl.u32 %v4082, 7
    %v4084 = vsub.s32 %v642, %v4083
    %v4085 = vrot.slane %v4069, %v4084
    %v4086 = vlaneseq
    %v4087 = vshrl.u32 %v4086, 7
    %v4088 = vsub.s32 %v647, %v4087
    %v4089 = vrot.slane %v4072, %v4088
    %v4090 = vsel %vm652, %v4089, %v4085
    %v4091 = vsel %vm338, %v4090, %v4081
    %v4093 = vsel %vm665, %v4091, 0.0
    %4094 = vadd.xlane.f32.xlu0 %v4093
    %v4095 = vpop.xlane.xlu0 %4094
    %v4096 = vrcp.pop %v4095
    %v4098 = vlaneseq
    %v4099 = vshrl.u32 %v4098, 7
    %v4100 = vsub.s32 0, %v4099
    %v4101 = vrot.slane %v4096, %v4100
    %v4102 = vlaneseq
    %v4103 = vshrl.u32 %v4102, 7
    %v4104 = vsub.s32 1, %v4103
    %v4105 = vrot.slane %v4096, %v4104
    %v4108 = vmul.f32 %v4050, %v4101
    %v4109 = vmul.f32 %v4052, %v4101
    %v4110 = vmul.f32 %v4054, %v4105
    %v4111 = vmul.f32 %v4056, %v4105
    %4114 = vset.pattern.permute.xlu0 0
    %4115 = vperm.xlu0 %4114, %v4108
    %v4116 = vpop.permute.xlu0 %4115
    %4117 = vset.pattern.permute.xlu0 0
    %4118 = vperm.xlu0 %4117, %v4109
    %v4119 = vpop.permute.xlu0 %4118
    %v4120 = vlaneseq
    %v4121 = vshrl.u32 %v4120, 7
    %v4122 = vsub.s32 %v642, %v4121
    %v4123 = vrot.slane %v4116, %v4122
    %v4124 = vlaneseq
    %v4125 = vshrl.u32 %v4124, 7
    %v4126 = vsub.s32 %v647, %v4125
    %v4127 = vrot.slane %v4119, %v4126
    %v4128 = vsel %vm652, %v4127, %v4123
    %v4129 = vsel %vm764, %v4128, 0
    %4131 = vmatprep.subr.mxu0 0.0
    %4132 = vmatpush1.msra.mxu0 %v156
    %4133 = vmatprep.subr.mxu0 0.0
    %4134 = vmatpush1.msra.mxu0 %v159
    %4135 = vmatprep.subr.mxu0 0.0
    %4136 = vmatpush1.msra.mxu0 0.0
    %4137 = vmatprep.subr.mxu0 0.0
    %4138 = vmatpush1.msra.mxu0 0.0
    %4139 = vmatprep.subr.mxu0 0.0
    %4140 = vmatpush1.msra.mxu0 0.0
    %4141 = vmatprep.subr.mxu0 0.0
    %4142 = vmatpush1.msra.mxu0 0.0
    %4143 = vmatprep.subr.mxu0 0.0
    %4144 = vmatpush1.msra.mxu0 0.0
    %4145 = vmatprep.subr.mxu0 0.0
    %4146 = vmatpush1.msra.mxu0 0.0
    %4147 = vmatprep.subr.mxu0 0.0
    %4148 = vmatpush1.msra.mxu0 0.0
    %4149 = vmatprep.subr.mxu0 0.0
    %4150 = vmatpush1.msra.mxu0 0.0
    %4151 = vmatprep.subr.mxu0 0.0
    %4152 = vmatpush1.msra.mxu0 0.0
    %4153 = vmatprep.subr.mxu0 0.0
    %4154 = vmatpush1.msra.mxu0 0.0
    %4155 = vmatprep.subr.mxu0 0.0
    %4156 = vmatpush1.msra.mxu0 0.0
    %4157 = vmatprep.subr.mxu0 0.0
    %4158 = vmatpush1.msra.mxu0 0.0
    %4159 = vmatprep.subr.mxu0 0.0
    %4160 = vmatpush1.msra.mxu0 0.0
    %4161 = vmatprep.subr.mxu0 0.0
    %4162 = vmatpush1.msra.mxu0 0.0
    %4163 = vmatprep.subr.mxu0 0.0
    %4164 = vmatpush1.msra.mxu0 0.0
    %4165 = vmatprep.subr.mxu0 0.0
    %4166 = vmatpush1.msra.mxu0 0.0
    %4167 = vmatprep.subr.mxu0 0.0
    %4168 = vmatpush1.msra.mxu0 0.0
    %4169 = vmatprep.subr.mxu0 0.0
    %4170 = vmatpush1.msra.mxu0 0.0
    %4171 = vmatprep.subr.mxu0 0.0
    %4172 = vmatpush1.msra.mxu0 0.0
    %4173 = vmatprep.subr.mxu0 0.0
    %4174 = vmatpush1.msra.mxu0 0.0
    %4175 = vmatprep.subr.mxu0 0.0
    %4176 = vmatpush1.msra.mxu0 0.0
    %4177 = vmatprep.subr.mxu0 0.0
    %4178 = vmatpush1.msra.mxu0 0.0
    %4179 = vmatprep.subr.mxu0 0.0
    %4180 = vmatpush1.msra.mxu0 0.0
    %4181 = vmatprep.subr.mxu0 0.0
    %4182 = vmatpush1.msra.mxu0 0.0
    %4183 = vmatprep.subr.mxu0 0.0
    %4184 = vmatpush1.msra.mxu0 0.0
    %4185 = vmatprep.subr.mxu0 0.0
    %4186 = vmatpush1.msra.mxu0 0.0
    %4187 = vmatprep.subr.mxu0 0.0
    %4188 = vmatpush1.msra.mxu0 0.0
    %4189 = vmatprep.subr.mxu0 0.0
    %4190 = vmatpush1.msra.mxu0 0.0
    %4191 = vmatprep.subr.mxu0 0.0
    %4192 = vmatpush1.msra.mxu0 0.0
    %4193 = vmatprep.subr.mxu0 0.0
    %4194 = vmatpush1.msra.mxu0 0.0
    %4195 = vmatprep.mubr.f32.mxu0 0.0
    %4196 = vmatmul.mubr.f32.gmra.mrb[0].mxu0 %v4129
    %v4197 = vpop.f32.mrb[0].mxu0
    %v4198 = vadd.f32 0.0, %v4197
    %v4199 = vpop.f32.mrb[0].mxu0
    %4200 = vdwg.mxu0
    %4203 = vset.pattern.permute.xlu0 0
    %4204 = vperm.xlu0 %4203, %v4110
    %v4205 = vpop.permute.xlu0 %4204
    %4206 = vset.pattern.permute.xlu0 0
    %4207 = vperm.xlu0 %4206, %v4111
    %v4208 = vpop.permute.xlu0 %4207
    %v4209 = vlaneseq
    %v4210 = vshrl.u32 %v4209, 7
    %v4211 = vsub.s32 %v642, %v4210
    %v4212 = vrot.slane %v4205, %v4211
    %v4213 = vlaneseq
    %v4214 = vshrl.u32 %v4213, 7
    %v4215 = vsub.s32 %v647, %v4214
    %v4216 = vrot.slane %v4208, %v4215
    %v4217 = vsel %vm652, %v4216, %v4212
    %v4218 = vsel %vm764, %v4217, 0
    %4220 = vmatprep.subr.mxu0 0.0
    %4221 = vmatpush1.msra.mxu0 %v164
    %4222 = vmatprep.subr.mxu0 0.0
    %4223 = vmatpush1.msra.mxu0 %v167
    %4224 = vmatprep.subr.mxu0 0.0
    %4225 = vmatpush1.msra.mxu0 0.0
    %4226 = vmatprep.subr.mxu0 0.0
    %4227 = vmatpush1.msra.mxu0 0.0
    %4228 = vmatprep.subr.mxu0 0.0
    %4229 = vmatpush1.msra.mxu0 0.0
    %4230 = vmatprep.subr.mxu0 0.0
    %4231 = vmatpush1.msra.mxu0 0.0
    %4232 = vmatprep.subr.mxu0 0.0
    %4233 = vmatpush1.msra.mxu0 0.0
    %4234 = vmatprep.subr.mxu0 0.0
    %4235 = vmatpush1.msra.mxu0 0.0
    %4236 = vmatprep.subr.mxu0 0.0
    %4237 = vmatpush1.msra.mxu0 0.0
    %4238 = vmatprep.subr.mxu0 0.0
    %4239 = vmatpush1.msra.mxu0 0.0
    %4240 = vmatprep.subr.mxu0 0.0
    %4241 = vmatpush1.msra.mxu0 0.0
    %4242 = vmatprep.subr.mxu0 0.0
    %4243 = vmatpush1.msra.mxu0 0.0
    %4244 = vmatprep.subr.mxu0 0.0
    %4245 = vmatpush1.msra.mxu0 0.0
    %4246 = vmatprep.subr.mxu0 0.0
    %4247 = vmatpush1.msra.mxu0 0.0
    %4248 = vmatprep.subr.mxu0 0.0
    %4249 = vmatpush1.msra.mxu0 0.0
    %4250 = vmatprep.subr.mxu0 0.0
    %4251 = vmatpush1.msra.mxu0 0.0
    %4252 = vmatprep.subr.mxu0 0.0
    %4253 = vmatpush1.msra.mxu0 0.0
    %4254 = vmatprep.subr.mxu0 0.0
    %4255 = vmatpush1.msra.mxu0 0.0
    %4256 = vmatprep.subr.mxu0 0.0
    %4257 = vmatpush1.msra.mxu0 0.0
    %4258 = vmatprep.subr.mxu0 0.0
    %4259 = vmatpush1.msra.mxu0 0.0
    %4260 = vmatprep.subr.mxu0 0.0
    %4261 = vmatpush1.msra.mxu0 0.0
    %4262 = vmatprep.subr.mxu0 0.0
    %4263 = vmatpush1.msra.mxu0 0.0
    %4264 = vmatprep.subr.mxu0 0.0
    %4265 = vmatpush1.msra.mxu0 0.0
    %4266 = vmatprep.subr.mxu0 0.0
    %4267 = vmatpush1.msra.mxu0 0.0
    %4268 = vmatprep.subr.mxu0 0.0
    %4269 = vmatpush1.msra.mxu0 0.0
    %4270 = vmatprep.subr.mxu0 0.0
    %4271 = vmatpush1.msra.mxu0 0.0
    %4272 = vmatprep.subr.mxu0 0.0
    %4273 = vmatpush1.msra.mxu0 0.0
    %4274 = vmatprep.subr.mxu0 0.0
    %4275 = vmatpush1.msra.mxu0 0.0
    %4276 = vmatprep.subr.mxu0 0.0
    %4277 = vmatpush1.msra.mxu0 0.0
    %4278 = vmatprep.subr.mxu0 0.0
    %4279 = vmatpush1.msra.mxu0 0.0
    %4280 = vmatprep.subr.mxu0 0.0
    %4281 = vmatpush1.msra.mxu0 0.0
    %4282 = vmatprep.subr.mxu0 0.0
    %4283 = vmatpush1.msra.mxu0 0.0
    %4284 = vmatprep.mubr.f32.mxu0 0.0
    %4285 = vmatmul.mubr.f32.gmra.mrb[0].mxu0 %v4218
    %v4286 = vpop.f32.mrb[0].mxu0
    %v4287 = vadd.f32 0.0, %v4286
    %v4288 = vpop.f32.mrb[0].mxu0
    %4289 = vdwg.mxu0
    %v4292 = vrot.slane %v4287, 7
    %v4293 = vsel %vm338, %v4292, %v4198
    %4294 = vrot.lane.b32.xlu0 %v4293, 64
    %v4295 = vpop.permute.xlu0 %4294
    %v4297 = vmul.f32 %v3943, %v4295
    %v4298 = vmul.f32 %v3945, %v4295
    %s4299 = sld [smem:[#allocation3 + $0x4]]
    %s4300 = scalar_lea.vmem %s3, %s4299
    %v4301 = vld [vmem:[%s4300] sm:$0x1]
    %s4302 = sld [smem:[#allocation3 + $0x84]]
    %s4303 = scalar_lea.vmem %s3, %s4302
    %v4304 = vld [vmem:[%s4303] sm:$0x1]
    %v4306 = vrot.slane %v4304, 7
    %v4308 = vsel %vm944, %v4301, %v4306
    %4310 = vrot.lane.b32.xlu0 %v3756, 64
    %v4311 = vpop.permute.xlu0 %4310
    %v4313 = vsel %vm504, %v4308, %v4297
    %v4314 = vsel %vm504, %v4298, %v4311
    %v4315 = vpack.c.bf16 %v4313, %v4313
    %v4316 = vpack.c.bf16 %v4314, %v4314
    %v4317 = vld [vmem:[%s14] sm:$0xff]
    %v4318 = vld [vmem:[%s14 + $0x8] sm:$0xff]
    %v4319 = vld [vmem:[%s14 + $0x10] sm:$0xff]
    %v4320 = vld [vmem:[%s14 + $0x18] sm:$0xff]
    %v4321 = vld [vmem:[%s14 + $0x20] sm:$0xff]
    %v4322 = vld [vmem:[%s14 + $0x28] sm:$0xff]
    %v4323 = vld [vmem:[%s14 + $0x30] sm:$0xff]
    %v4324 = vld [vmem:[%s14 + $0x38] sm:$0xff]
    %v4325 = vld [vmem:[%s14 + $0x40] sm:$0xff]
    %v4326 = vld [vmem:[%s14 + $0x48] sm:$0xff]
    %v4327 = vld [vmem:[%s14 + $0x50] sm:$0xff]
    %v4328 = vld [vmem:[%s14 + $0x58] sm:$0xff]
    %v4329 = vld [vmem:[%s14 + $0x60] sm:$0xff]
    %v4330 = vld [vmem:[%s14 + $0x68] sm:$0xff]
    %v4331 = vld [vmem:[%s14 + $0x70] sm:$0xff]
    %v4332 = vld [vmem:[%s14 + $0x78] sm:$0xff]
    %v4333 = vld [vmem:[%s14 + $0x80] sm:$0xff]
    %v4334 = vld [vmem:[%s14 + $0x88] sm:$0xff]
    %v4335 = vld [vmem:[%s14 + $0x90] sm:$0xff]
    %v4336 = vld [vmem:[%s14 + $0x98] sm:$0xff]
    %v4337 = vld [vmem:[%s14 + $0xa0] sm:$0xff]
    %v4338 = vld [vmem:[%s14 + $0xa8] sm:$0xff]
    %v4339 = vld [vmem:[%s14 + $0xb0] sm:$0xff]
    %v4340 = vld [vmem:[%s14 + $0xb8] sm:$0xff]
    %v4341 = vld [vmem:[%s14 + $0xc0] sm:$0xff]
    %v4342 = vld [vmem:[%s14 + $0xc8] sm:$0xff]
    %v4343 = vld [vmem:[%s14 + $0xd0] sm:$0xff]
    %v4344 = vld [vmem:[%s14 + $0xd8] sm:$0xff]
    %v4345 = vld [vmem:[%s14 + $0xe0] sm:$0xff]
    %v4346 = vld [vmem:[%s14 + $0xe8] sm:$0xff]
    %v4347 = vld [vmem:[%s14 + $0xf0] sm:$0xff]
    %v4348 = vld [vmem:[%s14 + $0xf8] sm:$0xff]
    %v4381 = vunpack.c.l.b16 %v4317
    %v4382 = vunpack.c.h.b16 %v4317
    %v4383 = vunpack.c.l.b16 %v4318
    %v4384 = vunpack.c.h.b16 %v4318
    %v4385 = vunpack.c.l.b16 %v4319
    %v4386 = vunpack.c.h.b16 %v4319
    %v4387 = vunpack.c.l.b16 %v4320
    %v4388 = vunpack.c.h.b16 %v4320
    %v4389 = vunpack.c.l.b16 %v4321
    %v4390 = vunpack.c.h.b16 %v4321
    %v4391 = vunpack.c.l.b16 %v4322
    %v4392 = vunpack.c.h.b16 %v4322
    %v4393 = vunpack.c.l.b16 %v4323
    %v4394 = vunpack.c.h.b16 %v4323
    %v4395 = vunpack.c.l.b16 %v4324
    %v4396 = vunpack.c.h.b16 %v4324
    %v4397 = vunpack.c.l.b16 %v4325
    %v4398 = vunpack.c.h.b16 %v4325
    %v4399 = vunpack.c.l.b16 %v4326
    %v4400 = vunpack.c.h.b16 %v4326
    %v4401 = vunpack.c.l.b16 %v4327
    %v4402 = vunpack.c.h.b16 %v4327
    %v4403 = vunpack.c.l.b16 %v4328
    %v4404 = vunpack.c.h.b16 %v4328
    %v4405 = vunpack.c.l.b16 %v4329
    %v4406 = vunpack.c.h.b16 %v4329
    %v4407 = vunpack.c.l.b16 %v4330
    %v4408 = vunpack.c.h.b16 %v4330
    %v4409 = vunpack.c.l.b16 %v4331
    %v4410 = vunpack.c.h.b16 %v4331
    %v4411 = vunpack.c.l.b16 %v4332
    %v4412 = vunpack.c.h.b16 %v4332
    %v4413 = vunpack.c.l.b16 %v4333
    %v4414 = vunpack.c.h.b16 %v4333
    %v4415 = vunpack.c.l.b16 %v4334
    %v4416 = vunpack.c.h.b16 %v4334
    %v4417 = vunpack.c.l.b16 %v4335
    %v4418 = vunpack.c.h.b16 %v4335
    %v4419 = vunpack.c.l.b16 %v4336
    %v4420 = vunpack.c.h.b16 %v4336
    %v4421 = vunpack.c.l.b16 %v4337
    %v4422 = vunpack.c.h.b16 %v4337
    %v4423 = vunpack.c.l.b16 %v4338
    %v4424 = vunpack.c.h.b16 %v4338
    %v4425 = vunpack.c.l.b16 %v4339
    %v4426 = vunpack.c.h.b16 %v4339
    %v4427 = vunpack.c.l.b16 %v4340
    %v4428 = vunpack.c.h.b16 %v4340
    %v4429 = vunpack.c.l.b16 %v4341
    %v4430 = vunpack.c.h.b16 %v4341
    %v4431 = vunpack.c.l.b16 %v4342
    %v4432 = vunpack.c.h.b16 %v4342
    %v4433 = vunpack.c.l.b16 %v4343
    %v4434 = vunpack.c.h.b16 %v4343
    %v4435 = vunpack.c.l.b16 %v4344
    %v4436 = vunpack.c.h.b16 %v4344
    %v4437 = vunpack.c.l.b16 %v4345
    %v4438 = vunpack.c.h.b16 %v4345
    %v4439 = vunpack.c.l.b16 %v4346
    %v4440 = vunpack.c.h.b16 %v4346
    %v4441 = vunpack.c.l.b16 %v4347
    %v4442 = vunpack.c.h.b16 %v4347
    %v4443 = vunpack.c.l.b16 %v4348
    %v4444 = vunpack.c.h.b16 %v4348
    %v4445 = vpack.c.b16 %v4383, %v4381
    %v4446 = vpack.c.b16 %v4384, %v4382
    %v4447 = vpack.c.b16 %v4387, %v4385
    %v4448 = vpack.c.b16 %v4388, %v4386
    %v4449 = vpack.c.b16 %v4391, %v4389
    %v4450 = vpack.c.b16 %v4392, %v4390
    %v4451 = vpack.c.b16 %v4395, %v4393
    %v4452 = vpack.c.b16 %v4396, %v4394
    %v4453 = vpack.c.b16 %v4399, %v4397
    %v4454 = vpack.c.b16 %v4400, %v4398
    %v4455 = vpack.c.b16 %v4403, %v4401
    %v4456 = vpack.c.b16 %v4404, %v4402
    %v4457 = vpack.c.b16 %v4407, %v4405
    %v4458 = vpack.c.b16 %v4408, %v4406
    %v4459 = vpack.c.b16 %v4411, %v4409
    %v4460 = vpack.c.b16 %v4412, %v4410
    %v4461 = vpack.c.b16 %v4415, %v4413
    %v4462 = vpack.c.b16 %v4416, %v4414
    %v4463 = vpack.c.b16 %v4419, %v4417
    %v4464 = vpack.c.b16 %v4420, %v4418
    %v4465 = vpack.c.b16 %v4423, %v4421
    %v4466 = vpack.c.b16 %v4424, %v4422
    %v4467 = vpack.c.b16 %v4427, %v4425
    %v4468 = vpack.c.b16 %v4428, %v4426
    %v4469 = vpack.c.b16 %v4431, %v4429
    %v4470 = vpack.c.b16 %v4432, %v4430
    %v4471 = vpack.c.b16 %v4435, %v4433
    %v4472 = vpack.c.b16 %v4436, %v4434
    %v4473 = vpack.c.b16 %v4439, %v4437
    %v4474 = vpack.c.b16 %v4440, %v4438
    %v4475 = vpack.c.b16 %v4443, %v4441
    %v4476 = vpack.c.b16 %v4444, %v4442
    %4509 = vmatprep.subr.bf16.mxu0 %v4446
    %4510 = vmatpush1.bf16.msra.mxu0 %v4445
    %4511 = vmatprep.subr.bf16.mxu0 %v4448
    %4512 = vmatpush1.bf16.msra.mxu0 %v4447
    %4513 = vmatprep.subr.bf16.mxu0 %v4450
    %4514 = vmatpush1.bf16.msra.mxu0 %v4449
    %4515 = vmatprep.subr.bf16.mxu0 %v4452
    %4516 = vmatpush1.bf16.msra.mxu0 %v4451
    %4517 = vmatprep.subr.bf16.mxu0 %v4454
    %4518 = vmatpush1.bf16.msra.mxu0 %v4453
    %4519 = vmatprep.subr.bf16.mxu0 %v4456
    %4520 = vmatpush1.bf16.msra.mxu0 %v4455
    %4521 = vmatprep.subr.bf16.mxu0 %v4458
    %4522 = vmatpush1.bf16.msra.mxu0 %v4457
    %4523 = vmatprep.subr.bf16.mxu0 %v4460
    %4524 = vmatpush1.bf16.msra.mxu0 %v4459
    %4525 = vmatprep.subr.bf16.mxu0 %v4462
    %4526 = vmatpush1.bf16.msra.mxu0 %v4461
    %4527 = vmatprep.subr.bf16.mxu0 %v4464
    %4528 = vmatpush1.bf16.msra.mxu0 %v4463
    %4529 = vmatprep.subr.bf16.mxu0 %v4466
    %4530 = vmatpush1.bf16.msra.mxu0 %v4465
    %4531 = vmatprep.subr.bf16.mxu0 %v4468
    %4532 = vmatpush1.bf16.msra.mxu0 %v4467
    %4533 = vmatprep.subr.bf16.mxu0 %v4470
    %4534 = vmatpush1.bf16.msra.mxu0 %v4469
    %4535 = vmatprep.subr.bf16.mxu0 %v4472
    %4536 = vmatpush1.bf16.msra.mxu0 %v4471
    %4537 = vmatprep.subr.bf16.mxu0 %v4474
    %4538 = vmatpush1.bf16.msra.mxu0 %v4473
    %4539 = vmatprep.subr.bf16.mxu0 %v4476
    %4540 = vmatpush1.bf16.msra.mxu0 %v4475
    %4541 = vmatprep.mubr.bf16.mxu0 %v4316
    %4542 = vmatmul.mubr.bf16.gmra.mrb[0].mxu0 %v4315
    %v4543 = vpop.f32.mrb[0].mxu0
    %v4544 = vadd.f32 %v990, %v4543
    %v4545 = vpop.f32.mrb[0].mxu0
    %v4546 = vadd.f32 %v994, %v4545
    %v4547 = vpop.f32.mrb[0].mxu0
    %v4548 = vpop.f32.mrb[0].mxu0
    %4549 = vdwg.mxu0
    %v4550 = vxor.u32 %v4544, 2147483648
    %v4551 = vxor.u32 %v4546, 2147483648
    %v4552 = vmul.f32 %v4550, 1.442695
    %v4553 = vpow.pop %v4552
    %v4554 = vmul.f32 %v4551, 1.442695
    %v4555 = vpow.pop %v4554
    %v4556 = vadd.f32 %v4553, 1.0
    %v4557 = vadd.f32 %v4555, 1.0
    %v4558 = vrcp.pop %v4556
    %v4559 = vmul.f32 1.0, %v4558
    %v4560 = vrcp.pop %v4557
    %v4561 = vmul.f32 1.0, %v4560
    %v4562 = vtanh.pop %v4546
    %v4563 = vmul.f32 %v4559, %v3757
    %4565 = vrot.lane.b32.xlu0 %v4562, 64
    %v4566 = vpop.permute.xlu0 %4565
    %v4568 = vmul.f32 %v4559, %v4566
    %4570 = vrot.lane.b32.xlu0 %v4568, 64
    %v4571 = vpop.permute.xlu0 %4570
    %v4573 = vadd.f32 %v4563, %v4571
    %v4574 = vtanh.pop %v4573
    %4576 = vrot.lane.b32.xlu0 %v4574, 64
    %v4577 = vpop.permute.xlu0 %4576
    %v4579 = vmul.f32 %v4561, %v4577
    %v4580 = vpack.c.bf16 %v4579, %v4579
    %v4582 = vsel %vm504, %v4580, 0
    %4584 = vmatprep.subr.bf16.mxu0 0
    %4585 = vmatpush1.bf16.msra.mxu0 %v1259
    %4586 = vmatprep.subr.bf16.mxu0 0
    %4587 = vmatpush1.bf16.msra.mxu0 %v1260
    %4588 = vmatprep.subr.bf16.mxu0 0
    %4589 = vmatpush1.bf16.msra.mxu0 %v1261
    %4590 = vmatprep.subr.bf16.mxu0 0
    %4591 = vmatpush1.bf16.msra.mxu0 %v1262
    %4592 = vmatprep.subr.bf16.mxu0 0
    %4593 = vmatpush1.bf16.msra.mxu0 0
    %4594 = vmatprep.subr.bf16.mxu0 0
    %4595 = vmatpush1.bf16.msra.mxu0 0
    %4596 = vmatprep.subr.bf16.mxu0 0
    %4597 = vmatpush1.bf16.msra.mxu0 0
    %4598 = vmatprep.subr.bf16.mxu0 0
    %4599 = vmatpush1.bf16.msra.mxu0 0
    %4600 = vmatprep.subr.bf16.mxu0 0
    %4601 = vmatpush1.bf16.msra.mxu0 0
    %4602 = vmatprep.subr.bf16.mxu0 0
    %4603 = vmatpush1.bf16.msra.mxu0 0
    %4604 = vmatprep.subr.bf16.mxu0 0
    %4605 = vmatpush1.bf16.msra.mxu0 0
    %4606 = vmatprep.subr.bf16.mxu0 0
    %4607 = vmatpush1.bf16.msra.mxu0 0
    %4608 = vmatprep.subr.bf16.mxu0 0
    %4609 = vmatpush1.bf16.msra.mxu0 0
    %4610 = vmatprep.subr.bf16.mxu0 0
    %4611 = vmatpush1.bf16.msra.mxu0 0
    %4612 = vmatprep.subr.bf16.mxu0 0
    %4613 = vmatpush1.bf16.msra.mxu0 0
    %4614 = vmatprep.subr.bf16.mxu0 0
    %4615 = vmatpush1.bf16.msra.mxu0 0
    %4616 = vmatprep.mubr.bf16.mxu0 0
    %4617 = vmatmul.mubr.bf16.gmra.mrb[0].mxu0 %v4582
    %v4618 = vpop.f32.mrb[0].mxu0
    %v4619 = vadd.f32 %v1241, %v4618
    %v4620 = vpop.f32.mrb[0].mxu0
    %v4621 = vpop.f32.mrb[0].mxu0
    %v4622 = vpop.f32.mrb[0].mxu0
    %4623 = vdwg.mxu0
    %4625 = vset.pattern.permute.xlu0 0
    %4626 = vperm.xlu0 %4625, %v3888
    %v4627 = vpop.permute.xlu0 %4626
    %v4629 = vmul.f32 %v4619, %v4627
    %v4632 = vunpack.c.l.s4 1966171168
    %v4633 = vunpack.c.0.s8 %v4632
    %v4634 = vlaneseq
    %v4635 = vshrl.u32 %v4634, 7
    %v4636 = vsub.s32 %v4633, %v4635
    %v4637 = vrot.slane %v4629, %v4636
    %v4638 = vcombine.high %v4637, %v4637
    %v4640 = vunpack.c.l.s4 1966171168
    %v4641 = vunpack.c.0.s8 %v4640
    %v4642 = vlaneseq
    %v4643 = vshrl.u32 %v4642, 7
    %v4644 = vsub.s32 %v4641, %v4643
    %v4645 = vrot.slane %v4637, %v4644
    %v4647 = vunpack.c.l.s4 1966171168
    %v4648 = vunpack.c.0.s8 %v4647
    %v4649 = vlaneseq
    %v4650 = vshrl.u32 %v4649, 7
    %v4651 = vsub.s32 %v4648, %v4650
    %v4652 = vrot.slane %v4638, %v4651
    %4655 = vst.msk [vmem:[%s18 + $0x4] sm:$0x1] %vm1341, %v4645
    %4656 = vst.msk [vmem:[%s18 + $0xc] sm:$0x1] %vm1341, %v4652
    %v4657 = vlaneseq
    %v4658 = vshrl.u32 %v4657, 7
    %v4659 = vsub.s32 0, %v4658
    %v4660 = vrot.slane %v4627, %v4659
    %v4661 = vlaneseq
    %v4662 = vshrl.u32 %v4661, 7
    %v4663 = vsub.s32 1, %v4662
    %v4664 = vrot.slane %v4627, %v4663
    %v4667 = vmul.f32 %v4108, %v4660
    %v4668 = vmul.f32 %v4109, %v4660
    %v4669 = vmul.f32 %v4110, %v4664
    %v4670 = vmul.f32 %v4111, %v4664
    %4675 = vset.pattern.permute.xlu0 0
    %4676 = vperm.xlu0 %4675, %v4667
    %v4677 = vpop.permute.xlu0 %4676
    %4678 = vset.pattern.permute.xlu0 0
    %4679 = vperm.xlu0 %4678, %v4668
    %v4680 = vpop.permute.xlu0 %4679
    %4681 = vset.pattern.permute.xlu0 0
    %4682 = vperm.xlu0 %4681, %v4669
    %v4683 = vpop.permute.xlu0 %4682
    %4684 = vset.pattern.permute.xlu0 0
    %4685 = vperm.xlu0 %4684, %v4670
    %v4686 = vpop.permute.xlu0 %4685
    %v4687 = vlaneseq
    %v4688 = vshrl.u32 %v4687, 7
    %v4689 = vsub.s32 %v642, %v4688
    %v4690 = vrot.slane %v4677, %v4689
    %v4691 = vlaneseq
    %v4692 = vshrl.u32 %v4691, 7
    %v4693 = vsub.s32 %v647, %v4692
    %v4694 = vrot.slane %v4680, %v4693
    %v4695 = vsel %vm652, %v4694, %v4690
    %v4696 = vlaneseq
    %v4697 = vshrl.u32 %v4696, 7
    %v4698 = vsub.s32 %v642, %v4697
    %v4699 = vrot.slane %v4683, %v4698
    %v4700 = vlaneseq
    %v4701 = vshrl.u32 %v4700, 7
    %v4702 = vsub.s32 %v647, %v4701
    %v4703 = vrot.slane %v4686, %v4702
    %v4704 = vsel %vm652, %v4703, %v4699
    %4707 = vst.msk [vmem:[%s19 + $0x4] sm:$0x1] %vm1394, %v4695
    %4708 = vst.msk [vmem:[%s19 + $0xc] sm:$0x1] %vm1394, %v4704
    // Predicated region
    $region78: #{run.1} parent=1 // pred_check
      _
    $region79: #{run.1} parent=1 // pred_check_branch
      %4710 = sbr.rel (0) target = $region81
    $region80: #{run.1} parent=1 // pred_region
      _
    $region81: #{run.1} parent=1 // pred_fallthru
      _
    // Predicated region
    $region82: #{run.1} parent=1 // pred_check
      _
    $region83: #{run.1} parent=1 // pred_check_branch
      %4712 = sbr.rel (0) target = $region85
    $region84: #{run.1} parent=1 // pred_region
      _
    $region85: #{run.1} parent=1 // pred_fallthru
      _
    // Predicated region
    $region86: #{run.1} parent=1 // pred_check
      _
    $region87: #{run.1} parent=1 // pred_check_branch
      %4714 = sbr.rel (0) target = $region89
    $region88: #{run.1} parent=1 // pred_region
      _
    $region89: #{run.1} parent=1 // pred_fallthru
      _
    // Predicated region
    $region90: #{run.1} parent=1 // pred_check
      _
    $region91: #{run.1} parent=1 // pred_check_branch
      %4716 = sbr.rel (0) target = $region93
    $region92: #{run.1} parent=1 // pred_region
      _
    $region93: #{run.1} parent=1 // pred_fallthru
      _
    %4717 = vsyncpa [#allocation4], 1

</llo_original>
